<compile_context>
chip_gen: v5e
topology: v5e:2x2
jax: 0.10.0
libtpu: 0.0.40
codegen_flags: <defaults>
</compile_context>

<pallas_src>
import math

import jax
import jax.numpy as jnp
from jax.experimental import pallas as pl
from jax.experimental.pallas import tpu as pltpu


# ----------------------------------------------------------------------------
# Pallas kernel: one block of nb samples per grid step, layout (nb, C, HW).
# ----------------------------------------------------------------------------
def adaptive_attention_kernel(x_ref, w1x1_ref, bnaff_ref, wfh_ref, wfw_ref,
                              eca_ref, wc1_ref, bc1_ref, wc2_ref, biasc_ref,
                              wsp_ref, wch_ref, pcat_ref, ppool_ref,
                              eh_ref, ew_ref, out_ref):
    f32, bf16 = jnp.float32, jnp.bfloat16
    nb = x_ref.shape[0]          # samples per grid step (static)
    H = eh_ref.shape[0]          # feature-map height (static)

    # bf16 MXU operands, f32 accumulation; elementwise math stays f32.
    def dotf(a, b):
        return jnp.dot(a.astype(bf16), b.astype(bf16),
                       preferred_element_type=f32)

    # Hoist all (already-bf16) weight loads out of the per-sample loop.
    w1x1 = w1x1_ref[...]
    bn_scale, bn_shift = bnaff_ref[:, 0:1], bnaff_ref[:, 1:2]      # f32
    wfh, wfw = wfh_ref[...], wfw_ref[...]
    eca = eca_ref[...]
    wc1, wc2 = wc1_ref[...], wc2_ref[...]
    bc1 = bc1_ref[...]                                             # f32
    b_c2, b_sp, b_ch = biasc_ref[:, 0:1], biasc_ref[:, 1:2], biasc_ref[:, 2:3]
    wsp, wch = wsp_ref[...], wch_ref[...]
    pcat, ppool = pcat_ref[...], ppool_ref[...]
    eh, ew = eh_ref[...], ew_ref[...]

    for s in range(nb):          # static unroll; nb kept small by the wrapper
        x2d = x_ref[s].astype(f32)                               # (C, HW)

        # ---- pooled statistics via MXU (no XLU cross-lane reductions) ----
        cat = dotf(x2d, pcat)                                    # (C, H+W)
        pooled = dotf(x2d, ppool)                                # (C, 1)

        # ---- CA block: 1x1 conv -> eval-BN -> ReLU -> F_h/F_w -> sigmoid --
        y = dotf(w1x1, cat)                                      # (Cr, H+W)
        y = jnp.maximum(y * bn_scale + bn_shift, 0.0)
        s_h = jax.nn.sigmoid(dotf(wfh, y[:, :H]))                # (C, H)
        s_w = jax.nn.sigmoid(dotf(wfw, y[:, H:]))                # (C, W)

        # ---- ECA gate ----
        y_eca = jax.nn.sigmoid(dotf(eca, pooled))                # (C, 1)

        # ---- fused CA + ECA:  x * (s_h ⊗ s_w + y_eca) ----
        gate = dotf(s_h, eh) * dotf(s_w, ew) + y_eca             # (C, HW)
        out = x2d * gate

        # ---- bottleneck: conv1 -> relu -> conv2 ----
        h1 = jnp.maximum(dotf(wc1, out) + bc1, 0.0)              # (C//2, HW)
        o2 = dotf(wc2, h1) + b_c2                                # (C, HW)

        # ---- fused spatial + channel gates (p3 == spa * p2 exactly) ----
        p2 = dotf(o2, ppool)                                     # (C, 1)
        spa = jax.nn.sigmoid(dotf(wsp, p2) + b_sp)               # (C, 1)
        cha = jax.nn.sigmoid(dotf(wch, spa * p2) + b_ch)         # (C, 1)

        out_ref[s] = (o2 * (spa * cha)).astype(out_ref.dtype)


# ----------------------------------------------------------------------------
# Per-sample constant pooling / broadcast matrices (no nb^2 block-diagonals).
# ----------------------------------------------------------------------------
def _build_structural(H, W):
    HW = H * W
    f32 = jnp.float32
    p = jnp.arange(HW)
    h_idx, w_idx = p // W, p % W
    ph = (jnp.arange(H)[None, :] == h_idx[:, None]).astype(f32) / W  # (HW, H): mean over W
    pw = (jnp.arange(W)[None, :] == w_idx[:, None]).astype(f32) / H  # (HW, W): mean over H
    p_cat = jnp.concatenate([ph, pw], axis=1)                        # (HW, H+W)
    p_pool = jnp.full((HW, 1), 1.0 / HW, f32)                        # (HW, 1): mean over HW
    e_h = (W * ph).T                                                 # (H, HW): 0/1 row-broadcast
    e_w = (H * pw).T                                                 # (W, HW): 0/1 col-broadcast
    return p_cat, p_pool, e_h, e_w


def _vmem_capacity_bytes():
    try:
        return int(pltpu.get_tpu_info().vmem_capacity_bytes)
    except Exception:
        return 64 << 20          # conservative default (v7x per-TC VMEM)


def _block_working_set_bytes(nb, C, HW, in_bytes, out_bytes):
    io = nb * C * HW * 2 * (in_bytes + out_bytes)   # double-buffered x / out blocks
    temps = nb * 8 * C * HW * 4                     # live f32/bf16 temporaries (unrolled loop)
    return io + temps


# ----------------------------------------------------------------------------
# Wrapper: natural (N, C, HW) layout + pallas_call.
# ----------------------------------------------------------------------------
def adaptive_attention(x, params, nb=None, io_dtype=jnp.float32,
                       out_dtype=jnp.float32):
    """x: (N, C, H, W) float32 -> (N, C, H, W) `out_dtype`.

    io_dtype / out_dtype = bfloat16 halve HBM traffic and block VMEM (a win on
    v6e / v7x); in-kernel elementwise math stays float32 regardless.
    """
    N, C, H, W = x.shape
    HW = H * W
    bf16 = jnp.bfloat16

    (w1x1, bn_scale, bn_shift, w_fh, w_fw, eca_mat,
     w_c1, b_c1, w_c2, b_c2, w_sp, b_sp, w_ch, b_ch) = params

    # packed small per-channel vectors (fewer tiny operands); kept f32.
    bn_aff = jnp.concatenate([bn_scale, bn_shift], axis=1)           # (Cr, 2)
    bias_c = jnp.concatenate([b_c2, b_sp, b_ch], axis=1)             # (C, 3)

    p_cat, p_pool, e_h, e_w = _build_structural(H, W)

    # matmul operands stored once in bf16 (MXU-native on v5e/v6e/v7x);
    # biases / BN affine stay f32 (added after the f32 accumulate).
    weights = (w1x1.astype(bf16), bn_aff, w_fh.astype(bf16),
               w_fw.astype(bf16), eca_mat.astype(bf16), w_c1.astype(bf16),
               b_c1, w_c2.astype(bf16), bias_c, w_sp.astype(bf16),
               w_ch.astype(bf16), p_cat.astype(bf16), p_pool.astype(bf16),
               e_h.astype(bf16), e_w.astype(bf16))
    weight_bytes = sum(int(w.size) * w.dtype.itemsize for w in weights)

    in_bytes = jnp.dtype(io_dtype).itemsize
    out_bytes = jnp.dtype(out_dtype).itemsize

    # nb per-chip: largest block fitting the VMEM budget while keeping
    # grid_len >= 2 so both TensorCores get work on the parallel batch axis.
    vmem_cap = _vmem_capacity_bytes()
    budget = int(0.6 * vmem_cap) - 2 * weight_bytes
    if nb is None:
        nb = 1
        for cand in range(1, N + 1):
            if N % cand:
                continue
            if N >= 2 and N // cand < 2:
                continue
            if _block_working_set_bytes(cand, C, HW, in_bytes, out_bytes) <= budget:
                nb = cand
    assert N % nb == 0
    grid_len = N // nb

    vmem_limit = int(min(
        0.9 * vmem_cap,
        max(32 << 20,
            _block_working_set_bytes(nb, C, HW, in_bytes, out_bytes)
            + 2 * weight_bytes + (8 << 20))))

    # Natural layout (N, C, HW): block dims equal the full C / HW extents, so
    # the (8, 128) divisibility rule never binds; HW stays on the lane axis.
    x3 = x.reshape(N, C, HW).astype(io_dtype)

    def run(single_buffer_consts):
        def const_spec(a):
            nd = a.ndim
            idx = lambda g, _nd=nd: (0,) * _nd
            if single_buffer_consts:
                # constant index_map => double buffering buys nothing;
                # single-buffer to halve the constants' VMEM footprint.
                return pl.BlockSpec(a.shape, idx, pipeline_mode=pl.Buffered(1))
            return pl.BlockSpec(a.shape, idx)

        in_specs = [pl.BlockSpec((nb, C, HW), lambda g: (g, 0, 0))]
        in_specs += [const_spec(w) for w in weights]
        out_specs = pl.BlockSpec((nb, C, HW), lambda g: (g, 0, 0))

        return pl.pallas_call(
            adaptive_attention_kernel,
            out_shape=jax.ShapeDtypeStruct((N, C, HW), out_dtype),
            grid=(grid_len,),
            in_specs=in_specs,
            out_specs=out_specs,
            compiler_params=pltpu.CompilerParams(
                dimension_semantics=("parallel",),
                vmem_limit_bytes=vmem_limit),
        )(x3, *weights)

    try:
        out3 = run(True)
    except Exception:
        # Fallback for JAX builds without BlockSpec.pipeline_mode / Buffered(1)
        # support; correctness is identical, constants are just double-buffered.
        out3 = run(False)

    return out3.reshape(N, C, H, W)


# ----------------------------------------------------------------------------
# Parameter construction (deterministic, synthetic) + pure-JAX reference.
# ----------------------------------------------------------------------------
def eca_band_matrix(w1d, C):
    """(C, C) Toeplitz matrix equal to zero-padded Conv1d(1,1,k) over channels."""
    k = int(w1d.shape[0])
    pad = (k - 1) // 2
    M = jnp.zeros((C, C), jnp.float32)
    for j in range(k):
        off = j - pad
        n = C - abs(off)
        M = M + jnp.diag(jnp.full((n,), w1d[j], jnp.float32), k=off)
    return M


def make_params(key, C, ratio=8):
    Cr, C2 = C // ratio, C // 2
    ks = jax.random.split(key, 16)
    n = lambda k, s, sc=0.2: (sc * jax.random.normal(k, s)).astype(jnp.float32)

    w1x1 = n(ks[0], (Cr, C))
    gamma = 1.0 + 0.1 * jax.random.normal(ks[1], (Cr, 1))
    beta = 0.1 * jax.random.normal(ks[2], (Cr, 1))
    r_mean = 0.1 * jax.random.normal(ks[3], (Cr, 1))
    r_var = 0.5 + jax.random.uniform(ks[4], (Cr, 1))
    bn_scale = (gamma / jnp.sqrt(r_var + 1e-5)).astype(jnp.float32)
    bn_shift = (beta - r_mean * bn_scale).astype(jnp.float32)
    w_fh, w_fw = n(ks[5], (C, Cr)), n(ks[6], (C, Cr))

    ksz = int(abs((math.log(C, 2) + 1) / 2))
    ksz = ksz if ksz % 2 else ksz + 1
    eca_mat = eca_band_matrix(n(ks[7], (ksz,), 0.3), C)

    w_c1, b_c1 = n(ks[8], (C2, C)), n(ks[9], (C2, 1), 0.1)
    w_c2, b_c2 = n(ks[10], (C, C2)), n(ks[11], (C, 1), 0.1)
    w_sp, b_sp = n(ks[12], (C, C)), n(ks[13], (C, 1), 0.1)
    w_ch, b_ch = n(ks[14], (C, C)), n(ks[15], (C, 1), 0.1)

    return (w1x1, bn_scale, bn_shift, w_fh, w_fw, eca_mat,
            w_c1, b_c1, w_c2, b_c2, w_sp, b_sp, w_ch, b_ch)


def reference(x, params):
    """Unfused per-sample f32 math matching the original PyTorch forward."""
    (w1x1, bn_scale, bn_shift, w_fh, w_fw, eca_mat,
     w_c1, b_c1, w_c2, b_c2, w_sp, b_sp, w_ch, b_ch) = params

    def one(x3):
        C, H, W = x3.shape
        x_h = jnp.mean(x3, axis=2)                       # (C, H)
        x_w = jnp.mean(x3, axis=1)                       # (C, W)
        y = w1x1 @ jnp.concatenate([x_h, x_w], axis=1)
        y = jnp.maximum(y * bn_scale + bn_shift, 0.0)
        s_h = jax.nn.sigmoid(w_fh @ y[:, :H])
        s_w = jax.nn.sigmoid(w_fw @ y[:, H:])
        ca = x3 * s_h[:, :, None] * s_w[:, None, :]
        pooled = jnp.mean(x3.reshape(C, H * W), axis=1, keepdims=True)
        eca = x3 * jax.nn.sigmoid(eca_mat @ pooled)[:, :, None]
        out = (ca + eca).reshape(C, H * W)
        h1 = jnp.maximum(w_c1 @ out + b_c1, 0.0)
        o2 = w_c2 @ h1 + b_c2
        spa = jax.nn.sigmoid(w_sp @ jnp.mean(o2, axis=1, keepdims=True) + b_sp)
        o3 = o2 * spa
        cha = jax.nn.sigmoid(w_ch @ jnp.mean(o3, axis=1, keepdims=True) + b_ch)
        return (o3 * cha).reshape(C, H, W)

    return jax.vmap(one)(x)


if __name__ == "__main__":
    N, C, H, W = 2, 16, 16, 16
    key = jax.random.PRNGKey(0)
    kx, kp = jax.random.split(key)
    x = jax.random.normal(kx, (N, C, H, W), jnp.float32)
    params = make_params(kp, C, ratio=8)

    out = jax.block_until_ready(adaptive_attention(x, params))
    ref = jax.block_until_ready(reference(x, params))

    assert out.shape == (N, C, H, W)
    # bf16 MXU operands with f32 accumulation give ~1e-3 absolute error at
    # these activation scales; a genuine bug would be orders of magnitude bigger.
    assert bool(jnp.allclose(out, ref, atol=2e-2, rtol=2e-2)), (
        "mismatch vs pure-JAX reference")

    print("KERNEL_OK")
</pallas_src>

<mosaic_0001>
module attributes {stable_mosaic.version = 11 : i64} {
  func.func @adaptive_attention_kernel(%arg0: i32, %arg1: memref<1x16x256xf32, #tpu.memory_space<vmem>>, %arg2: memref<2x16xbf16, #tpu.memory_space<vmem>>, %arg3: memref<2x2xf32, #tpu.memory_space<vmem>>, %arg4: memref<16x2xbf16, #tpu.memory_space<vmem>>, %arg5: memref<16x2xbf16, #tpu.memory_space<vmem>>, %arg6: memref<16x16xbf16, #tpu.memory_space<vmem>>, %arg7: memref<8x16xbf16, #tpu.memory_space<vmem>>, %arg8: memref<8x1xf32, #tpu.memory_space<vmem>>, %arg9: memref<16x8xbf16, #tpu.memory_space<vmem>>, %arg10: memref<16x3xf32, #tpu.memory_space<vmem>>, %arg11: memref<16x16xbf16, #tpu.memory_space<vmem>>, %arg12: memref<16x16xbf16, #tpu.memory_space<vmem>>, %arg13: memref<256x32xbf16, #tpu.memory_space<vmem>>, %arg14: memref<256x1xbf16, #tpu.memory_space<vmem>>, %arg15: memref<16x256xbf16, #tpu.memory_space<vmem>>, %arg16: memref<16x256xbf16, #tpu.memory_space<vmem>>, %arg17: memref<1x16x256xf32, #tpu.memory_space<vmem>>) attributes {dimension_semantics = [#tpu.dimension_semantics<parallel>], iteration_bounds = array<i64: 2>, scalar_prefetch = 0 : i64, scratch_operands = 0 : i64, tpu.core_type = #tpu.core_type<tc>, window_params = [{transform_indices = @transform_0, window_bounds = array<i64: 1, 16, 256>}, {pipeline_mode = #tpu.pipeline_mode<synchronous>, transform_indices = @transform_1, window_bounds = array<i64: 2, 16>}, {pipeline_mode = #tpu.pipeline_mode<synchronous>, transform_indices = @transform_2, window_bounds = array<i64: 2, 2>}, {pipeline_mode = #tpu.pipeline_mode<synchronous>, transform_indices = @transform_3, window_bounds = array<i64: 16, 2>}, {pipeline_mode = #tpu.pipeline_mode<synchronous>, transform_indices = @transform_4, window_bounds = array<i64: 16, 2>}, {pipeline_mode = #tpu.pipeline_mode<synchronous>, transform_indices = @transform_5, window_bounds = array<i64: 16, 16>}, {pipeline_mode = #tpu.pipeline_mode<synchronous>, transform_indices = @transform_6, window_bounds = array<i64: 8, 16>}, {pipeline_mode = #tpu.pipeline_mode<synchronous>, transform_indices = @transform_7, window_bounds = array<i64: 8, 1>}, {pipeline_mode = #tpu.pipeline_mode<synchronous>, transform_indices = @transform_8, window_bounds = array<i64: 16, 8>}, {pipeline_mode = #tpu.pipeline_mode<synchronous>, transform_indices = @transform_9, window_bounds = array<i64: 16, 3>}, {pipeline_mode = #tpu.pipeline_mode<synchronous>, transform_indices = @transform_10, window_bounds = array<i64: 16, 16>}, {pipeline_mode = #tpu.pipeline_mode<synchronous>, transform_indices = @transform_11, window_bounds = array<i64: 16, 16>}, {pipeline_mode = #tpu.pipeline_mode<synchronous>, transform_indices = @transform_12, window_bounds = array<i64: 256, 32>}, {pipeline_mode = #tpu.pipeline_mode<synchronous>, transform_indices = @transform_13, window_bounds = array<i64: 256, 1>}, {pipeline_mode = #tpu.pipeline_mode<synchronous>, transform_indices = @transform_14, window_bounds = array<i64: 16, 256>}, {pipeline_mode = #tpu.pipeline_mode<synchronous>, transform_indices = @transform_15, window_bounds = array<i64: 16, 256>}, {transform_indices = @transform_16, window_bounds = array<i64: 1, 16, 256>}]} {
    %c0 = arith.constant 0 : index
    %c0_0 = arith.constant 0 : index
    %0 = vector.load %arg2[%c0, %c0_0] : memref<2x16xbf16, #tpu.memory_space<vmem>>, vector<2x16xbf16>
    %c0_1 = arith.constant 0 : index
    %c0_2 = arith.constant 0 : index
    %1 = vector.load %arg3[%c0_1, %c0_2] : memref<2x2xf32, #tpu.memory_space<vmem>>, vector<2x1xf32>
    %c0_3 = arith.constant 0 : index
    %c1 = arith.constant 1 : index
    %2 = vector.load %arg3[%c0_3, %c1] : memref<2x2xf32, #tpu.memory_space<vmem>>, vector<2x1xf32>
    %c0_4 = arith.constant 0 : index
    %c0_5 = arith.constant 0 : index
    %3 = vector.load %arg4[%c0_4, %c0_5] : memref<16x2xbf16, #tpu.memory_space<vmem>>, vector<16x2xbf16>
    %c0_6 = arith.constant 0 : index
    %c0_7 = arith.constant 0 : index
    %4 = vector.load %arg5[%c0_6, %c0_7] : memref<16x2xbf16, #tpu.memory_space<vmem>>, vector<16x2xbf16>
    %c0_8 = arith.constant 0 : index
    %c0_9 = arith.constant 0 : index
    %5 = vector.load %arg6[%c0_8, %c0_9] : memref<16x16xbf16, #tpu.memory_space<vmem>>, vector<16x16xbf16>
    %c0_10 = arith.constant 0 : index
    %c0_11 = arith.constant 0 : index
    %6 = vector.load %arg7[%c0_10, %c0_11] : memref<8x16xbf16, #tpu.memory_space<vmem>>, vector<8x16xbf16>
    %c0_12 = arith.constant 0 : index
    %c0_13 = arith.constant 0 : index
    %7 = vector.load %arg9[%c0_12, %c0_13] : memref<16x8xbf16, #tpu.memory_space<vmem>>, vector<16x8xbf16>
    %c0_14 = arith.constant 0 : index
    %c0_15 = arith.constant 0 : index
    %8 = vector.load %arg8[%c0_14, %c0_15] : memref<8x1xf32, #tpu.memory_space<vmem>>, vector<8x1xf32>
    %c0_16 = arith.constant 0 : index
    %c0_17 = arith.constant 0 : index
    %9 = vector.load %arg10[%c0_16, %c0_17] : memref<16x3xf32, #tpu.memory_space<vmem>>, vector<16x1xf32>
    %c0_18 = arith.constant 0 : index
    %c1_19 = arith.constant 1 : index
    %10 = vector.load %arg10[%c0_18, %c1_19] : memref<16x3xf32, #tpu.memory_space<vmem>>, vector<16x1xf32>
    %c0_20 = arith.constant 0 : index
    %c2 = arith.constant 2 : index
    %11 = vector.load %arg10[%c0_20, %c2] : memref<16x3xf32, #tpu.memory_space<vmem>>, vector<16x1xf32>
    %c0_21 = arith.constant 0 : index
    %c0_22 = arith.constant 0 : index
    %12 = vector.load %arg11[%c0_21, %c0_22] : memref<16x16xbf16, #tpu.memory_space<vmem>>, vector<16x16xbf16>
    %c0_23 = arith.constant 0 : index
    %c0_24 = arith.constant 0 : index
    %13 = vector.load %arg12[%c0_23, %c0_24] : memref<16x16xbf16, #tpu.memory_space<vmem>>, vector<16x16xbf16>
    %c0_25 = arith.constant 0 : index
    %c0_26 = arith.constant 0 : index
    %14 = vector.load %arg13[%c0_25, %c0_26] : memref<256x32xbf16, #tpu.memory_space<vmem>>, vector<256x32xbf16>
    %c0_27 = arith.constant 0 : index
    %c0_28 = arith.constant 0 : index
    %15 = vector.load %arg14[%c0_27, %c0_28] : memref<256x1xbf16, #tpu.memory_space<vmem>>, vector<256x1xbf16>
    %c0_29 = arith.constant 0 : index
    %c0_30 = arith.constant 0 : index
    %16 = vector.load %arg15[%c0_29, %c0_30] : memref<16x256xbf16, #tpu.memory_space<vmem>>, vector<16x256xbf16>
    %c0_31 = arith.constant 0 : index
    %c0_32 = arith.constant 0 : index
    %17 = vector.load %arg16[%c0_31, %c0_32] : memref<16x256xbf16, #tpu.memory_space<vmem>>, vector<16x256xbf16>
    %c0_33 = arith.constant 0 : index
    %c0_34 = arith.constant 0 : index
    %c0_35 = arith.constant 0 : index
    %18 = vector.load %arg1[%c0_33, %c0_34, %c0_35] : memref<1x16x256xf32, #tpu.memory_space<vmem>>, vector<1x16x256xf32>
    %19 = vector.shape_cast %18 : vector<1x16x256xf32> to vector<16x256xf32>
    %20 = arith.truncf %19 : vector<16x256xf32> to vector<16x256xbf16>
    %cst = arith.constant dense<0.000000e+00> : vector<16x32xf32>
    %21 = tpu.matmul %20, %14, %cst {dimension_numbers = #tpu.dot_dimension_numbers<[1], [0], [0], [1], [0, 0, 1, 1], [], []>} : vector<16x256xbf16>, vector<256x32xbf16>, vector<16x32xf32> -> vector<16x32xf32>
    %22 = arith.truncf %19 : vector<16x256xf32> to vector<16x256xbf16>
    %cst_36 = arith.constant dense<0.000000e+00> : vector<16x1xf32>
    %23 = tpu.matmul %22, %15, %cst_36 {dimension_numbers = #tpu.dot_dimension_numbers<[1], [0], [0], [1], [0, 0, 1, 1], [], []>} : vector<16x256xbf16>, vector<256x1xbf16>, vector<16x1xf32> -> vector<16x1xf32>
    %24 = arith.truncf %21 : vector<16x32xf32> to vector<16x32xbf16>
    %cst_37 = arith.constant dense<0.000000e+00> : vector<2x32xf32>
    %25 = tpu.matmul %0, %24, %cst_37 {dimension_numbers = #tpu.dot_dimension_numbers<[1], [0], [0], [1], [0, 0, 1, 1], [], []>} : vector<2x16xbf16>, vector<16x32xbf16>, vector<2x32xf32> -> vector<2x32xf32>
    %26 = vector.broadcast %1 : vector<2x1xf32> to vector<2x32xf32>
    %27 = arith.mulf %25, %26 : vector<2x32xf32>
    %28 = vector.broadcast %2 : vector<2x1xf32> to vector<2x32xf32>
    %29 = arith.addf %27, %28 : vector<2x32xf32>
    %cst_38 = arith.constant 0.000000e+00 : f32
    %30 = vector.broadcast %cst_38 : f32 to vector<2x32xf32>
    %31 = arith.maximumf %29, %30 : vector<2x32xf32>
    %32 = vector.extract_strided_slice %31 {offsets = [0, 0], sizes = [2, 16], strides = [1, 1]} : vector<2x32xf32> to vector<2x16xf32>
    %33 = arith.truncf %32 : vector<2x16xf32> to vector<2x16xbf16>
    %cst_39 = arith.constant dense<0.000000e+00> : vector<16x16xf32>
    %34 = tpu.matmul %3, %33, %cst_39 {dimension_numbers = #tpu.dot_dimension_numbers<[1], [0], [0], [1], [0, 0, 1, 1], [], []>} : vector<16x2xbf16>, vector<2x16xbf16>, vector<16x16xf32> -> vector<16x16xf32>
    %35 = arith.negf %34 : vector<16x16xf32>
    %36 = math.exp %35 : vector<16x16xf32>
    %cst_40 = arith.constant 1.000000e+00 : f32
    %37 = vector.broadcast %cst_40 : f32 to vector<16x16xf32>
    %38 = arith.addf %37, %36 : vector<16x16xf32>
    %39 = arith.divf %37, %38 : vector<16x16xf32>
    %40 = vector.extract_strided_slice %31 {offsets = [0, 16], sizes = [2, 16], strides = [1, 1]} : vector<2x32xf32> to vector<2x16xf32>
    %41 = arith.truncf %40 : vector<2x16xf32> to vector<2x16xbf16>
    %cst_41 = arith.constant dense<0.000000e+00> : vector<16x16xf32>
    %42 = tpu.matmul %4, %41, %cst_41 {dimension_numbers = #tpu.dot_dimension_numbers<[1], [0], [0], [1], [0, 0, 1, 1], [], []>} : vector<16x2xbf16>, vector<2x16xbf16>, vector<16x16xf32> -> vector<16x16xf32>
    %43 = arith.negf %42 : vector<16x16xf32>
    %44 = math.exp %43 : vector<16x16xf32>
    %cst_42 = arith.constant 1.000000e+00 : f32
    %45 = vector.broadcast %cst_42 : f32 to vector<16x16xf32>
    %46 = arith.addf %45, %44 : vector<16x16xf32>
    %47 = arith.divf %45, %46 : vector<16x16xf32>
    %48 = arith.truncf %23 : vector<16x1xf32> to vector<16x1xbf16>
    %cst_43 = arith.constant dense<0.000000e+00> : vector<16x1xf32>
    %49 = tpu.matmul %5, %48, %cst_43 {dimension_numbers = #tpu.dot_dimension_numbers<[1], [0], [0], [1], [0, 0, 1, 1], [], []>} : vector<16x16xbf16>, vector<16x1xbf16>, vector<16x1xf32> -> vector<16x1xf32>
    %50 = arith.negf %49 : vector<16x1xf32>
    %51 = math.exp %50 : vector<16x1xf32>
    %cst_44 = arith.constant 1.000000e+00 : f32
    %52 = vector.broadcast %cst_44 : f32 to vector<16x1xf32>
    %53 = arith.addf %52, %51 : vector<16x1xf32>
    %54 = arith.divf %52, %53 : vector<16x1xf32>
    %55 = arith.truncf %39 : vector<16x16xf32> to vector<16x16xbf16>
    %cst_45 = arith.constant dense<0.000000e+00> : vector<16x256xf32>
    %56 = tpu.matmul %55, %16, %cst_45 {dimension_numbers = #tpu.dot_dimension_numbers<[1], [0], [0], [1], [0, 0, 1, 1], [], []>} : vector<16x16xbf16>, vector<16x256xbf16>, vector<16x256xf32> -> vector<16x256xf32>
    %57 = arith.truncf %47 : vector<16x16xf32> to vector<16x16xbf16>
    %cst_46 = arith.constant dense<0.000000e+00> : vector<16x256xf32>
    %58 = tpu.matmul %57, %17, %cst_46 {dimension_numbers = #tpu.dot_dimension_numbers<[1], [0], [0], [1], [0, 0, 1, 1], [], []>} : vector<16x16xbf16>, vector<16x256xbf16>, vector<16x256xf32> -> vector<16x256xf32>
    %59 = arith.mulf %56, %58 : vector<16x256xf32>
    %60 = vector.broadcast %54 : vector<16x1xf32> to vector<16x256xf32>
    %61 = arith.addf %59, %60 : vector<16x256xf32>
    %62 = arith.mulf %19, %61 : vector<16x256xf32>
    %63 = arith.truncf %62 : vector<16x256xf32> to vector<16x256xbf16>
    %cst_47 = arith.constant dense<0.000000e+00> : vector<8x256xf32>
    %64 = tpu.matmul %6, %63, %cst_47 {dimension_numbers = #tpu.dot_dimension_numbers<[1], [0], [0], [1], [0, 0, 1, 1], [], []>} : vector<8x16xbf16>, vector<16x256xbf16>, vector<8x256xf32> -> vector<8x256xf32>
    %65 = vector.broadcast %8 : vector<8x1xf32> to vector<8x256xf32>
    %66 = arith.addf %64, %65 : vector<8x256xf32>
    %cst_48 = arith.constant 0.000000e+00 : f32
    %67 = vector.broadcast %cst_48 : f32 to vector<8x256xf32>
    %68 = arith.maximumf %66, %67 : vector<8x256xf32>
    %69 = arith.truncf %68 : vector<8x256xf32> to vector<8x256xbf16>
    %cst_49 = arith.constant dense<0.000000e+00> : vector<16x256xf32>
    %70 = tpu.matmul %7, %69, %cst_49 {dimension_numbers = #tpu.dot_dimension_numbers<[1], [0], [0], [1], [0, 0, 1, 1], [], []>} : vector<16x8xbf16>, vector<8x256xbf16>, vector<16x256xf32> -> vector<16x256xf32>
    %71 = vector.broadcast %9 : vector<16x1xf32> to vector<16x256xf32>
    %72 = arith.addf %70, %71 : vector<16x256xf32>
    %73 = arith.truncf %72 : vector<16x256xf32> to vector<16x256xbf16>
    %cst_50 = arith.constant dense<0.000000e+00> : vector<16x1xf32>
    %74 = tpu.matmul %73, %15, %cst_50 {dimension_numbers = #tpu.dot_dimension_numbers<[1], [0], [0], [1], [0, 0, 1, 1], [], []>} : vector<16x256xbf16>, vector<256x1xbf16>, vector<16x1xf32> -> vector<16x1xf32>
    %75 = arith.truncf %74 : vector<16x1xf32> to vector<16x1xbf16>
    %cst_51 = arith.constant dense<0.000000e+00> : vector<16x1xf32>
    %76 = tpu.matmul %12, %75, %cst_51 {dimension_numbers = #tpu.dot_dimension_numbers<[1], [0], [0], [1], [0, 0, 1, 1], [], []>} : vector<16x16xbf16>, vector<16x1xbf16>, vector<16x1xf32> -> vector<16x1xf32>
    %77 = arith.addf %76, %10 : vector<16x1xf32>
    %78 = arith.negf %77 : vector<16x1xf32>
    %79 = math.exp %78 : vector<16x1xf32>
    %cst_52 = arith.constant 1.000000e+00 : f32
    %80 = vector.broadcast %cst_52 : f32 to vector<16x1xf32>
    %81 = arith.addf %80, %79 : vector<16x1xf32>
    %82 = arith.divf %80, %81 : vector<16x1xf32>
    %83 = arith.mulf %82, %74 : vector<16x1xf32>
    %84 = arith.truncf %83 : vector<16x1xf32> to vector<16x1xbf16>
    %cst_53 = arith.constant dense<0.000000e+00> : vector<16x1xf32>
    %85 = tpu.matmul %13, %84, %cst_53 {dimension_numbers = #tpu.dot_dimension_numbers<[1], [0], [0], [1], [0, 0, 1, 1], [], []>} : vector<16x16xbf16>, vector<16x1xbf16>, vector<16x1xf32> -> vector<16x1xf32>
    %86 = arith.addf %85, %11 : vector<16x1xf32>
    %87 = arith.negf %86 : vector<16x1xf32>
    %88 = math.exp %87 : vector<16x1xf32>
    %cst_54 = arith.constant 1.000000e+00 : f32
    %89 = vector.broadcast %cst_54 : f32 to vector<16x1xf32>
    %90 = arith.addf %89, %88 : vector<16x1xf32>
    %91 = arith.divf %89, %90 : vector<16x1xf32>
    %92 = arith.mulf %82, %91 : vector<16x1xf32>
    %93 = vector.broadcast %92 : vector<16x1xf32> to vector<16x256xf32>
    %94 = arith.mulf %72, %93 : vector<16x256xf32>
    %c0_55 = arith.constant 0 : index
    %c0_56 = arith.constant 0 : index
    %c0_57 = arith.constant 0 : index
    %95 = vector.load %arg17[%c0_55, %c0_56, %c0_57] : memref<1x16x256xf32, #tpu.memory_space<vmem>>, vector<1x16x256xf32>
    %96 = vector.shape_cast %95 : vector<1x16x256xf32> to vector<16x256xf32>
    %97 = vector.shape_cast %94 : vector<16x256xf32> to vector<1x16x256xf32>
    tpu.vector_store %arg17[%c0_55, %c0_56, %c0_57], %97 {strides = array<i32>} : memref<1x16x256xf32, #tpu.memory_space<vmem>>, vector<1x16x256xf32>,
    return
  }
  func.func @transform_0(%arg0: i32) -> (i32, i32, i32) {
    %c0_i32 = arith.constant 0 : i32
    %c0_i32_0 = arith.constant 0 : i32
    %c0_i32_1 = arith.constant 0 : i32
    return %arg0, %c0_i32, %c0_i32_0 : i32, i32, i32
  }
  func.func @transform_1(%arg0: i32) -> (i32, i32) {
    %c0_i32 = arith.constant 0 : i32
    %c0_i32_0 = arith.constant 0 : i32
    %c0_i32_1 = arith.constant 0 : i32
    return %c0_i32, %c0_i32_0 : i32, i32
  }
  func.func @transform_2(%arg0: i32) -> (i32, i32) {
    %c0_i32 = arith.constant 0 : i32
    %c0_i32_0 = arith.constant 0 : i32
    %c0_i32_1 = arith.constant 0 : i32
    return %c0_i32, %c0_i32_0 : i32, i32
  }
  func.func @transform_3(%arg0: i32) -> (i32, i32) {
    %c0_i32 = arith.constant 0 : i32
    %c0_i32_0 = arith.constant 0 : i32
    %c0_i32_1 = arith.constant 0 : i32
    return %c0_i32, %c0_i32_0 : i32, i32
  }
  func.func @transform_4(%arg0: i32) -> (i32, i32) {
    %c0_i32 = arith.constant 0 : i32
    %c0_i32_0 = arith.constant 0 : i32
    %c0_i32_1 = arith.constant 0 : i32
    return %c0_i32, %c0_i32_0 : i32, i32
  }
  func.func @transform_5(%arg0: i32) -> (i32, i32) {
    %c0_i32 = arith.constant 0 : i32
    %c0_i32_0 = arith.constant 0 : i32
    %c0_i32_1 = arith.constant 0 : i32
    return %c0_i32, %c0_i32_0 : i32, i32
  }
  func.func @transform_6(%arg0: i32) -> (i32, i32) {
    %c0_i32 = arith.constant 0 : i32
    %c0_i32_0 = arith.constant 0 : i32
    %c0_i32_1 = arith.constant 0 : i32
    return %c0_i32, %c0_i32_0 : i32, i32
  }
  func.func @transform_7(%arg0: i32) -> (i32, i32) {
    %c0_i32 = arith.constant 0 : i32
    %c0_i32_0 = arith.constant 0 : i32
    %c0_i32_1 = arith.constant 0 : i32
    return %c0_i32, %c0_i32_0 : i32, i32
  }
  func.func @transform_8(%arg0: i32) -> (i32, i32) {
    %c0_i32 = arith.constant 0 : i32
    %c0_i32_0 = arith.constant 0 : i32
    %c0_i32_1 = arith.constant 0 : i32
    return %c0_i32, %c0_i32_0 : i32, i32
  }
  func.func @transform_9(%arg0: i32) -> (i32, i32) {
    %c0_i32 = arith.constant 0 : i32
    %c0_i32_0 = arith.constant 0 : i32
    %c0_i32_1 = arith.constant 0 : i32
    return %c0_i32, %c0_i32_0 : i32, i32
  }
  func.func @transform_10(%arg0: i32) -> (i32, i32) {
    %c0_i32 = arith.constant 0 : i32
    %c0_i32_0 = arith.constant 0 : i32
    %c0_i32_1 = arith.constant 0 : i32
    return %c0_i32, %c0_i32_0 : i32, i32
  }
  func.func @transform_11(%arg0: i32) -> (i32, i32) {
    %c0_i32 = arith.constant 0 : i32
    %c0_i32_0 = arith.constant 0 : i32
    %c0_i32_1 = arith.constant 0 : i32
    return %c0_i32, %c0_i32_0 : i32, i32
  }
  func.func @transform_12(%arg0: i32) -> (i32, i32) {
    %c0_i32 = arith.constant 0 : i32
    %c0_i32_0 = arith.constant 0 : i32
    %c0_i32_1 = arith.constant 0 : i32
    return %c0_i32, %c0_i32_0 : i32, i32
  }
  func.func @transform_13(%arg0: i32) -> (i32, i32) {
    %c0_i32 = arith.constant 0 : i32
    %c0_i32_0 = arith.constant 0 : i32
    %c0_i32_1 = arith.constant 0 : i32
    return %c0_i32, %c0_i32_0 : i32, i32
  }
  func.func @transform_14(%arg0: i32) -> (i32, i32) {
    %c0_i32 = arith.constant 0 : i32
    %c0_i32_0 = arith.constant 0 : i32
    %c0_i32_1 = arith.constant 0 : i32
    return %c0_i32, %c0_i32_0 : i32, i32
  }
  func.func @transform_15(%arg0: i32) -> (i32, i32) {
    %c0_i32 = arith.constant 0 : i32
    %c0_i32_0 = arith.constant 0 : i32
    %c0_i32_1 = arith.constant 0 : i32
    return %c0_i32, %c0_i32_0 : i32, i32
  }
  func.func @transform_16(%arg0: i32) -> (i32, i32, i32) {
    %c0_i32 = arith.constant 0 : i32
    %c0_i32_0 = arith.constant 0 : i32
    %c0_i32_1 = arith.constant 0 : i32
    return %arg0, %c0_i32, %c0_i32_0 : i32, i32, i32
  }
}

module attributes {stable_mosaic.version = 11 : i64} {
  func.func @adaptive_attention_kernel(%arg0: i32, %arg1: memref<1x16x256xf32, #tpu.memory_space<vmem>>, %arg2: memref<2x16xbf16, #tpu.memory_space<vmem>>, %arg3: memref<2x2xf32, #tpu.memory_space<vmem>>, %arg4: memref<16x2xbf16, #tpu.memory_space<vmem>>, %arg5: memref<16x2xbf16, #tpu.memory_space<vmem>>, %arg6: memref<16x16xbf16, #tpu.memory_space<vmem>>, %arg7: memref<8x16xbf16, #tpu.memory_space<vmem>>, %arg8: memref<8x1xf32, #tpu.memory_space<vmem>>, %arg9: memref<16x8xbf16, #tpu.memory_space<vmem>>, %arg10: memref<16x3xf32, #tpu.memory_space<vmem>>, %arg11: memref<16x16xbf16, #tpu.memory_space<vmem>>, %arg12: memref<16x16xbf16, #tpu.memory_space<vmem>>, %arg13: memref<256x32xbf16, #tpu.memory_space<vmem>>, %arg14: memref<256x1xbf16, #tpu.memory_space<vmem>>, %arg15: memref<16x256xbf16, #tpu.memory_space<vmem>>, %arg16: memref<16x256xbf16, #tpu.memory_space<vmem>>, %arg17: memref<1x16x256xf32, #tpu.memory_space<vmem>>) attributes {dimension_semantics = [#tpu.dimension_semantics<parallel>], iteration_bounds = array<i64: 2>, scalar_prefetch = 0 : i64, scratch_operands = 0 : i64, tpu.core_type = #tpu.core_type<tc>, window_params = [{transform_indices = @transform_0, window_bounds = array<i64: 1, 16, 256>}, {pipeline_mode = #tpu.pipeline_mode<synchronous>, transform_indices = @transform_1, window_bounds = array<i64: 2, 16>}, {pipeline_mode = #tpu.pipeline_mode<synchronous>, transform_indices = @transform_2, window_bounds = array<i64: 2, 2>}, {pipeline_mode = #tpu.pipeline_mode<synchronous>, transform_indices = @transform_3, window_bounds = array<i64: 16, 2>}, {pipeline_mode = #tpu.pipeline_mode<synchronous>, transform_indices = @transform_4, window_bounds = array<i64: 16, 2>}, {pipeline_mode = #tpu.pipeline_mode<synchronous>, transform_indices = @transform_5, window_bounds = array<i64: 16, 16>}, {pipeline_mode = #tpu.pipeline_mode<synchronous>, transform_indices = @transform_6, window_bounds = array<i64: 8, 16>}, {pipeline_mode = #tpu.pipeline_mode<synchronous>, transform_indices = @transform_7, window_bounds = array<i64: 8, 1>}, {pipeline_mode = #tpu.pipeline_mode<synchronous>, transform_indices = @transform_8, window_bounds = array<i64: 16, 8>}, {pipeline_mode = #tpu.pipeline_mode<synchronous>, transform_indices = @transform_9, window_bounds = array<i64: 16, 3>}, {pipeline_mode = #tpu.pipeline_mode<synchronous>, transform_indices = @transform_10, window_bounds = array<i64: 16, 16>}, {pipeline_mode = #tpu.pipeline_mode<synchronous>, transform_indices = @transform_11, window_bounds = array<i64: 16, 16>}, {pipeline_mode = #tpu.pipeline_mode<synchronous>, transform_indices = @transform_12, window_bounds = array<i64: 256, 32>}, {pipeline_mode = #tpu.pipeline_mode<synchronous>, transform_indices = @transform_13, window_bounds = array<i64: 256, 1>}, {pipeline_mode = #tpu.pipeline_mode<synchronous>, transform_indices = @transform_14, window_bounds = array<i64: 16, 256>}, {pipeline_mode = #tpu.pipeline_mode<synchronous>, transform_indices = @transform_15, window_bounds = array<i64: 16, 256>}, {transform_indices = @transform_16, window_bounds = array<i64: 1, 16, 256>}]} {
    %c0 = arith.constant 0 : index
    %c0_0 = arith.constant 0 : index
    %0 = vector.load %arg2[%c0, %c0_0] : memref<2x16xbf16, #tpu.memory_space<vmem>>, vector<2x16xbf16>
    %c0_1 = arith.constant 0 : index
    %c0_2 = arith.constant 0 : index
    %1 = vector.load %arg3[%c0_1, %c0_2] : memref<2x2xf32, #tpu.memory_space<vmem>>, vector<2x1xf32>
    %c0_3 = arith.constant 0 : index
    %c1 = arith.constant 1 : index
    %2 = vector.load %arg3[%c0_3, %c1] : memref<2x2xf32, #tpu.memory_space<vmem>>, vector<2x1xf32>
    %c0_4 = arith.constant 0 : index
    %c0_5 = arith.constant 0 : index
    %3 = vector.load %arg4[%c0_4, %c0_5] : memref<16x2xbf16, #tpu.memory_space<vmem>>, vector<16x2xbf16>
    %c0_6 = arith.constant 0 : index
    %c0_7 = arith.constant 0 : index
    %4 = vector.load %arg5[%c0_6, %c0_7] : memref<16x2xbf16, #tpu.memory_space<vmem>>, vector<16x2xbf16>
    %c0_8 = arith.constant 0 : index
    %c0_9 = arith.constant 0 : index
    %5 = vector.load %arg6[%c0_8, %c0_9] : memref<16x16xbf16, #tpu.memory_space<vmem>>, vector<16x16xbf16>
    %c0_10 = arith.constant 0 : index
    %c0_11 = arith.constant 0 : index
    %6 = vector.load %arg7[%c0_10, %c0_11] : memref<8x16xbf16, #tpu.memory_space<vmem>>, vector<8x16xbf16>
    %c0_12 = arith.constant 0 : index
    %c0_13 = arith.constant 0 : index
    %7 = vector.load %arg9[%c0_12, %c0_13] : memref<16x8xbf16, #tpu.memory_space<vmem>>, vector<16x8xbf16>
    %c0_14 = arith.constant 0 : index
    %c0_15 = arith.constant 0 : index
    %8 = vector.load %arg8[%c0_14, %c0_15] : memref<8x1xf32, #tpu.memory_space<vmem>>, vector<8x1xf32>
    %c0_16 = arith.constant 0 : index
    %c0_17 = arith.constant 0 : index
    %9 = vector.load %arg10[%c0_16, %c0_17] : memref<16x3xf32, #tpu.memory_space<vmem>>, vector<16x1xf32>
    %c0_18 = arith.constant 0 : index
    %c1_19 = arith.constant 1 : index
    %10 = vector.load %arg10[%c0_18, %c1_19] : memref<16x3xf32, #tpu.memory_space<vmem>>, vector<16x1xf32>
    %c0_20 = arith.constant 0 : index
    %c2 = arith.constant 2 : index
    %11 = vector.load %arg10[%c0_20, %c2] : memref<16x3xf32, #tpu.memory_space<vmem>>, vector<16x1xf32>
    %c0_21 = arith.constant 0 : index
    %c0_22 = arith.constant 0 : index
    %12 = vector.load %arg11[%c0_21, %c0_22] : memref<16x16xbf16, #tpu.memory_space<vmem>>, vector<16x16xbf16>
    %c0_23 = arith.constant 0 : index
    %c0_24 = arith.constant 0 : index
    %13 = vector.load %arg12[%c0_23, %c0_24] : memref<16x16xbf16, #tpu.memory_space<vmem>>, vector<16x16xbf16>
    %c0_25 = arith.constant 0 : index
    %c0_26 = arith.constant 0 : index
    %14 = vector.load %arg13[%c0_25, %c0_26] : memref<256x32xbf16, #tpu.memory_space<vmem>>, vector<256x32xbf16>
    %c0_27 = arith.constant 0 : index
    %c0_28 = arith.constant 0 : index
    %15 = vector.load %arg14[%c0_27, %c0_28] : memref<256x1xbf16, #tpu.memory_space<vmem>>, vector<256x1xbf16>
    %c0_29 = arith.constant 0 : index
    %c0_30 = arith.constant 0 : index
    %16 = vector.load %arg15[%c0_29, %c0_30] : memref<16x256xbf16, #tpu.memory_space<vmem>>, vector<16x256xbf16>
    %c0_31 = arith.constant 0 : index
    %c0_32 = arith.constant 0 : index
    %17 = vector.load %arg16[%c0_31, %c0_32] : memref<16x256xbf16, #tpu.memory_space<vmem>>, vector<16x256xbf16>
    %c0_33 = arith.constant 0 : index
    %c0_34 = arith.constant 0 : index
    %c0_35 = arith.constant 0 : index
    %18 = vector.load %arg1[%c0_33, %c0_34, %c0_35] : memref<1x16x256xf32, #tpu.memory_space<vmem>>, vector<1x16x256xf32>
    %19 = vector.shape_cast %18 : vector<1x16x256xf32> to vector<16x256xf32>
    %20 = arith.truncf %19 : vector<16x256xf32> to vector<16x256xbf16>
    %cst = arith.constant dense<0.000000e+00> : vector<16x32xf32>
    %21 = tpu.matmul %20, %14, %cst {dimension_numbers = #tpu.dot_dimension_numbers<[1], [0], [0], [1], [0, 0, 1, 1], [], []>} : vector<16x256xbf16>, vector<256x32xbf16>, vector<16x32xf32> -> vector<16x32xf32>
    %22 = arith.truncf %19 : vector<16x256xf32> to vector<16x256xbf16>
    %cst_36 = arith.constant dense<0.000000e+00> : vector<16x1xf32>
    %23 = tpu.matmul %22, %15, %cst_36 {dimension_numbers = #tpu.dot_dimension_numbers<[1], [0], [0], [1], [0, 0, 1, 1], [], []>} : vector<16x256xbf16>, vector<256x1xbf16>, vector<16x1xf32> -> vector<16x1xf32>
    %24 = arith.truncf %21 : vector<16x32xf32> to vector<16x32xbf16>
    %cst_37 = arith.constant dense<0.000000e+00> : vector<2x32xf32>
    %25 = tpu.matmul %0, %24, %cst_37 {dimension_numbers = #tpu.dot_dimension_numbers<[1], [0], [0], [1], [0, 0, 1, 1], [], []>} : vector<2x16xbf16>, vector<16x32xbf16>, vector<2x32xf32> -> vector<2x32xf32>
    %26 = vector.broadcast %1 : vector<2x1xf32> to vector<2x32xf32>
    %27 = arith.mulf %25, %26 : vector<2x32xf32>
    %28 = vector.broadcast %2 : vector<2x1xf32> to vector<2x32xf32>
    %29 = arith.addf %27, %28 : vector<2x32xf32>
    %cst_38 = arith.constant 0.000000e+00 : f32
    %30 = vector.broadcast %cst_38 : f32 to vector<2x32xf32>
    %31 = arith.maximumf %29, %30 : vector<2x32xf32>
    %32 = vector.extract_strided_slice %31 {offsets = [0, 0], sizes = [2, 16], strides = [1, 1]} : vector<2x32xf32> to vector<2x16xf32>
    %33 = arith.truncf %32 : vector<2x16xf32> to vector<2x16xbf16>
    %cst_39 = arith.constant dense<0.000000e+00> : vector<16x16xf32>
    %34 = tpu.matmul %3, %33, %cst_39 {dimension_numbers = #tpu.dot_dimension_numbers<[1], [0], [0], [1], [0, 0, 1, 1], [], []>} : vector<16x2xbf16>, vector<2x16xbf16>, vector<16x16xf32> -> vector<16x16xf32>
    %35 = arith.negf %34 : vector<16x16xf32>
    %36 = math.exp %35 : vector<16x16xf32>
    %cst_40 = arith.constant 1.000000e+00 : f32
    %37 = vector.broadcast %cst_40 : f32 to vector<16x16xf32>
    %38 = arith.addf %37, %36 : vector<16x16xf32>
    %39 = arith.divf %37, %38 : vector<16x16xf32>
    %40 = vector.extract_strided_slice %31 {offsets = [0, 16], sizes = [2, 16], strides = [1, 1]} : vector<2x32xf32> to vector<2x16xf32>
    %41 = arith.truncf %40 : vector<2x16xf32> to vector<2x16xbf16>
    %cst_41 = arith.constant dense<0.000000e+00> : vector<16x16xf32>
    %42 = tpu.matmul %4, %41, %cst_41 {dimension_numbers = #tpu.dot_dimension_numbers<[1], [0], [0], [1], [0, 0, 1, 1], [], []>} : vector<16x2xbf16>, vector<2x16xbf16>, vector<16x16xf32> -> vector<16x16xf32>
    %43 = arith.negf %42 : vector<16x16xf32>
    %44 = math.exp %43 : vector<16x16xf32>
    %cst_42 = arith.constant 1.000000e+00 : f32
    %45 = vector.broadcast %cst_42 : f32 to vector<16x16xf32>
    %46 = arith.addf %45, %44 : vector<16x16xf32>
    %47 = arith.divf %45, %46 : vector<16x16xf32>
    %48 = arith.truncf %23 : vector<16x1xf32> to vector<16x1xbf16>
    %cst_43 = arith.constant dense<0.000000e+00> : vector<16x1xf32>
    %49 = tpu.matmul %5, %48, %cst_43 {dimension_numbers = #tpu.dot_dimension_numbers<[1], [0], [0], [1], [0, 0, 1, 1], [], []>} : vector<16x16xbf16>, vector<16x1xbf16>, vector<16x1xf32> -> vector<16x1xf32>
    %50 = arith.negf %49 : vector<16x1xf32>
    %51 = math.exp %50 : vector<16x1xf32>
    %cst_44 = arith.constant 1.000000e+00 : f32
    %52 = vector.broadcast %cst_44 : f32 to vector<16x1xf32>
    %53 = arith.addf %52, %51 : vector<16x1xf32>
    %54 = arith.divf %52, %53 : vector<16x1xf32>
    %55 = arith.truncf %39 : vector<16x16xf32> to vector<16x16xbf16>
    %cst_45 = arith.constant dense<0.000000e+00> : vector<16x256xf32>
    %56 = tpu.matmul %55, %16, %cst_45 {dimension_numbers = #tpu.dot_dimension_numbers<[1], [0], [0], [1], [0, 0, 1, 1], [], []>} : vector<16x16xbf16>, vector<16x256xbf16>, vector<16x256xf32> -> vector<16x256xf32>
    %57 = arith.truncf %47 : vector<16x16xf32> to vector<16x16xbf16>
    %cst_46 = arith.constant dense<0.000000e+00> : vector<16x256xf32>
    %58 = tpu.matmul %57, %17, %cst_46 {dimension_numbers = #tpu.dot_dimension_numbers<[1], [0], [0], [1], [0, 0, 1, 1], [], []>} : vector<16x16xbf16>, vector<16x256xbf16>, vector<16x256xf32> -> vector<16x256xf32>
    %59 = arith.mulf %56, %58 : vector<16x256xf32>
    %60 = vector.broadcast %54 : vector<16x1xf32> to vector<16x256xf32>
    %61 = arith.addf %59, %60 : vector<16x256xf32>
    %62 = arith.mulf %19, %61 : vector<16x256xf32>
    %63 = arith.truncf %62 : vector<16x256xf32> to vector<16x256xbf16>
    %cst_47 = arith.constant dense<0.000000e+00> : vector<8x256xf32>
    %64 = tpu.matmul %6, %63, %cst_47 {dimension_numbers = #tpu.dot_dimension_numbers<[1], [0], [0], [1], [0, 0, 1, 1], [], []>} : vector<8x16xbf16>, vector<16x256xbf16>, vector<8x256xf32> -> vector<8x256xf32>
    %65 = vector.broadcast %8 : vector<8x1xf32> to vector<8x256xf32>
    %66 = arith.addf %64, %65 : vector<8x256xf32>
    %cst_48 = arith.constant 0.000000e+00 : f32
    %67 = vector.broadcast %cst_48 : f32 to vector<8x256xf32>
    %68 = arith.maximumf %66, %67 : vector<8x256xf32>
    %69 = arith.truncf %68 : vector<8x256xf32> to vector<8x256xbf16>
    %cst_49 = arith.constant dense<0.000000e+00> : vector<16x256xf32>
    %70 = tpu.matmul %7, %69, %cst_49 {dimension_numbers = #tpu.dot_dimension_numbers<[1], [0], [0], [1], [0, 0, 1, 1], [], []>} : vector<16x8xbf16>, vector<8x256xbf16>, vector<16x256xf32> -> vector<16x256xf32>
    %71 = vector.broadcast %9 : vector<16x1xf32> to vector<16x256xf32>
    %72 = arith.addf %70, %71 : vector<16x256xf32>
    %73 = arith.truncf %72 : vector<16x256xf32> to vector<16x256xbf16>
    %cst_50 = arith.constant dense<0.000000e+00> : vector<16x1xf32>
    %74 = tpu.matmul %73, %15, %cst_50 {dimension_numbers = #tpu.dot_dimension_numbers<[1], [0], [0], [1], [0, 0, 1, 1], [], []>} : vector<16x256xbf16>, vector<256x1xbf16>, vector<16x1xf32> -> vector<16x1xf32>
    %75 = arith.truncf %74 : vector<16x1xf32> to vector<16x1xbf16>
    %cst_51 = arith.constant dense<0.000000e+00> : vector<16x1xf32>
    %76 = tpu.matmul %12, %75, %cst_51 {dimension_numbers = #tpu.dot_dimension_numbers<[1], [0], [0], [1], [0, 0, 1, 1], [], []>} : vector<16x16xbf16>, vector<16x1xbf16>, vector<16x1xf32> -> vector<16x1xf32>
    %77 = arith.addf %76, %10 : vector<16x1xf32>
    %78 = arith.negf %77 : vector<16x1xf32>
    %79 = math.exp %78 : vector<16x1xf32>
    %cst_52 = arith.constant 1.000000e+00 : f32
    %80 = vector.broadcast %cst_52 : f32 to vector<16x1xf32>
    %81 = arith.addf %80, %79 : vector<16x1xf32>
    %82 = arith.divf %80, %81 : vector<16x1xf32>
    %83 = arith.mulf %82, %74 : vector<16x1xf32>
    %84 = arith.truncf %83 : vector<16x1xf32> to vector<16x1xbf16>
    %cst_53 = arith.constant dense<0.000000e+00> : vector<16x1xf32>
    %85 = tpu.matmul %13, %84, %cst_53 {dimension_numbers = #tpu.dot_dimension_numbers<[1], [0], [0], [1], [0, 0, 1, 1], [], []>} : vector<16x16xbf16>, vector<16x1xbf16>, vector<16x1xf32> -> vector<16x1xf32>
    %86 = arith.addf %85, %11 : vector<16x1xf32>
    %87 = arith.negf %86 : vector<16x1xf32>
    %88 = math.exp %87 : vector<16x1xf32>
    %cst_54 = arith.constant 1.000000e+00 : f32
    %89 = vector.broadcast %cst_54 : f32 to vector<16x1xf32>
    %90 = arith.addf %89, %88 : vector<16x1xf32>
    %91 = arith.divf %89, %90 : vector<16x1xf32>
    %92 = arith.mulf %82, %91 : vector<16x1xf32>
    %93 = vector.broadcast %92 : vector<16x1xf32> to vector<16x256xf32>
    %94 = arith.mulf %72, %93 : vector<16x256xf32>
    %c0_55 = arith.constant 0 : index
    %c0_56 = arith.constant 0 : index
    %c0_57 = arith.constant 0 : index
    %95 = vector.load %arg17[%c0_55, %c0_56, %c0_57] : memref<1x16x256xf32, #tpu.memory_space<vmem>>, vector<1x16x256xf32>
    %96 = vector.shape_cast %95 : vector<1x16x256xf32> to vector<16x256xf32>
    %97 = vector.shape_cast %94 : vector<16x256xf32> to vector<1x16x256xf32>
    tpu.vector_store %arg17[%c0_55, %c0_56, %c0_57], %97 {strides = array<i32>} : memref<1x16x256xf32, #tpu.memory_space<vmem>>, vector<1x16x256xf32>,
    return
  }
  func.func @transform_0(%arg0: i32) -> (i32, i32, i32) {
    %c0_i32 = arith.constant 0 : i32
    %c0_i32_0 = arith.constant 0 : i32
    %c0_i32_1 = arith.constant 0 : i32
    return %arg0, %c0_i32, %c0_i32_0 : i32, i32, i32
  }
  func.func @transform_1(%arg0: i32) -> (i32, i32) {
    %c0_i32 = arith.constant 0 : i32
    %c0_i32_0 = arith.constant 0 : i32
    %c0_i32_1 = arith.constant 0 : i32
    return %c0_i32, %c0_i32_0 : i32, i32
  }
  func.func @transform_2(%arg0: i32) -> (i32, i32) {
    %c0_i32 = arith.constant 0 : i32
    %c0_i32_0 = arith.constant 0 : i32
    %c0_i32_1 = arith.constant 0 : i32
    return %c0_i32, %c0_i32_0 : i32, i32
  }
  func.func @transform_3(%arg0: i32) -> (i32, i32) {
    %c0_i32 = arith.constant 0 : i32
    %c0_i32_0 = arith.constant 0 : i32
    %c0_i32_1 = arith.constant 0 : i32
    return %c0_i32, %c0_i32_0 : i32, i32
  }
  func.func @transform_4(%arg0: i32) -> (i32, i32) {
    %c0_i32 = arith.constant 0 : i32
    %c0_i32_0 = arith.constant 0 : i32
    %c0_i32_1 = arith.constant 0 : i32
    return %c0_i32, %c0_i32_0 : i32, i32
  }
  func.func @transform_5(%arg0: i32) -> (i32, i32) {
    %c0_i32 = arith.constant 0 : i32
    %c0_i32_0 = arith.constant 0 : i32
    %c0_i32_1 = arith.constant 0 : i32
    return %c0_i32, %c0_i32_0 : i32, i32
  }
  func.func @transform_6(%arg0: i32) -> (i32, i32) {
    %c0_i32 = arith.constant 0 : i32
    %c0_i32_0 = arith.constant 0 : i32
    %c0_i32_1 = arith.constant 0 : i32
    return %c0_i32, %c0_i32_0 : i32, i32
  }
  func.func @transform_7(%arg0: i32) -> (i32, i32) {
    %c0_i32 = arith.constant 0 : i32
    %c0_i32_0 = arith.constant 0 : i32
    %c0_i32_1 = arith.constant 0 : i32
    return %c0_i32, %c0_i32_0 : i32, i32
  }
  func.func @transform_8(%arg0: i32) -> (i32, i32) {
    %c0_i32 = arith.constant 0 : i32
    %c0_i32_0 = arith.constant 0 : i32
    %c0_i32_1 = arith.constant 0 : i32
    return %c0_i32, %c0_i32_0 : i32, i32
  }
  func.func @transform_9(%arg0: i32) -> (i32, i32) {
    %c0_i32 = arith.constant 0 : i32
    %c0_i32_0 = arith.constant 0 : i32
    %c0_i32_1 = arith.constant 0 : i32
    return %c0_i32, %c0_i32_0 : i32, i32
  }
  func.func @transform_10(%arg0: i32) -> (i32, i32) {
    %c0_i32 = arith.constant 0 : i32
    %c0_i32_0 = arith.constant 0 : i32
    %c0_i32_1 = arith.constant 0 : i32
    return %c0_i32, %c0_i32_0 : i32, i32
  }
  func.func @transform_11(%arg0: i32) -> (i32, i32) {
    %c0_i32 = arith.constant 0 : i32
    %c0_i32_0 = arith.constant 0 : i32
    %c0_i32_1 = arith.constant 0 : i32
    return %c0_i32, %c0_i32_0 : i32, i32
  }
  func.func @transform_12(%arg0: i32) -> (i32, i32) {
    %c0_i32 = arith.constant 0 : i32
    %c0_i32_0 = arith.constant 0 : i32
    %c0_i32_1 = arith.constant 0 : i32
    return %c0_i32, %c0_i32_0 : i32, i32
  }
  func.func @transform_13(%arg0: i32) -> (i32, i32) {
    %c0_i32 = arith.constant 0 : i32
    %c0_i32_0 = arith.constant 0 : i32
    %c0_i32_1 = arith.constant 0 : i32
    return %c0_i32, %c0_i32_0 : i32, i32
  }
  func.func @transform_14(%arg0: i32) -> (i32, i32) {
    %c0_i32 = arith.constant 0 : i32
    %c0_i32_0 = arith.constant 0 : i32
    %c0_i32_1 = arith.constant 0 : i32
    return %c0_i32, %c0_i32_0 : i32, i32
  }
  func.func @transform_15(%arg0: i32) -> (i32, i32) {
    %c0_i32 = arith.constant 0 : i32
    %c0_i32_0 = arith.constant 0 : i32
    %c0_i32_1 = arith.constant 0 : i32
    return %c0_i32, %c0_i32_0 : i32, i32
  }
  func.func @transform_16(%arg0: i32) -> (i32, i32, i32) {
    %c0_i32 = arith.constant 0 : i32
    %c0_i32_0 = arith.constant 0 : i32
    %c0_i32_1 = arith.constant 0 : i32
    return %arg0, %c0_i32, %c0_i32_0 : i32, i32, i32
  }
}

</mosaic_0001>

<llo_original>
// kernel: tpu_custom_call.1
$region0: #{tpu_custom_call.1}
  #allocation0 [shape = 'u32[]', space=smem, size = 0x4, offset = 0x4, fixed_abs, tag = 'smem constant byte address 0x4 - core index']
  #allocation1 [shape = 'u32[72,128]{1,0:T(1,128)}', space=vmem, size = 0x9000, scoped, tag = 'internal scratch']
  %s0 = inlined_call_operand.vmem [shape: f32[2,16,256], index: 0, kind: input, shape index: {}]
  %s1 = inlined_call_operand.vmem [shape: bf16[2,16], index: 1, kind: input, shape index: {}]
  %s2 = inlined_call_operand.vmem [shape: f32[2,2], index: 2, kind: input, shape index: {}]
  %s3 = inlined_call_operand.vmem [shape: bf16[16,2], index: 3, kind: input, shape index: {}]
  %s4 = inlined_call_operand.vmem [shape: bf16[16,2], index: 4, kind: input, shape index: {}]
  %s5 = inlined_call_operand.vmem [shape: bf16[16,16], index: 5, kind: input, shape index: {}]
  %s6 = inlined_call_operand.vmem [shape: bf16[8,16], index: 6, kind: input, shape index: {}]
  %s7 = inlined_call_operand.vmem [shape: f32[8,1], index: 7, kind: input, shape index: {}]
  %s8 = inlined_call_operand.vmem [shape: bf16[16,8], index: 8, kind: input, shape index: {}]
  %s9 = inlined_call_operand.vmem [shape: f32[16,3], index: 9, kind: input, shape index: {}]
  %s10 = inlined_call_operand.vmem [shape: bf16[16,16], index: 10, kind: input, shape index: {}]
  %s11 = inlined_call_operand.vmem [shape: bf16[16,16], index: 11, kind: input, shape index: {}]
  %s12 = inlined_call_operand.vmem [shape: bf16[256,32], index: 12, kind: input, shape index: {}]
  %s13 = inlined_call_operand.vmem [shape: bf16[256,1], index: 13, kind: input, shape index: {}]
  %s14 = inlined_call_operand.vmem [shape: bf16[16,256], index: 14, kind: input, shape index: {}]
  %s15 = inlined_call_operand.vmem [shape: bf16[16,256], index: 15, kind: input, shape index: {}]
  %s16 = inlined_call_operand.hbm [shape: f32[2,16,256], index: 16, kind: output, shape index: {}]
  %s17 = sld [smem:[#allocation0]]
  $region97: #{tpu_custom_call.1} parent=0
    _
  %s19 = ssub.s32 1, %s17
  %s20 = scalar_select 0, %s19, %s17
  $region1: #{tpu_custom_call.1} parent=0
    #allocation2 [shape = 'u8[32768]{0}', space=vmem, size = 0x8000, scoped, tag = 'output window, operand 0']
    #allocation3 [shape = 's32[2]{0}', space=sflag, size = 0x8, scoped, tag = 'scoped memory for tpu_custom_call.1']
    %21 = vsyncpa [#allocation3], 0
    %s22 = scalar_lea.sflag [#allocation3], 1
    %23 = vsyncpa %s22, 0
    loop: start=0, step=1, limit=4
    $region2: #{tpu_custom_call.1} parent=1 // loop_pre_header
      _
    $region3: #{tpu_custom_call.1} parent=1 // loop_header
      %s25 = sphi 0, %s29
      %p26 = scmp.ge.s32.totalorder %s25, 4
      %s35 = sphi 0, %s37
      %s38 = sphi 0, %s35
      %s39 = sphi 0, %s38
      %s55 = sphi 0, %s39
      %s59 = sphi 0, %s59
      %s61 = sphi 0, %s59
      %s62 = sphi 0, %s61
      %s76 = sphi 0, %s62
      %s80 = sphi 0, %s80
      %s82 = sphi 0, %s80
      %s83 = sphi 0, %s82
      %s97 = sphi 0, %s83
      %s101 = sphi 0, %s101
      %s103 = sphi 0, %s101
      %s104 = sphi 0, %s103
      %s118 = sphi 0, %s104
      %s122 = sphi 0, %s122
      %s124 = sphi 0, %s122
      %s125 = sphi 0, %s124
      %s139 = sphi 0, %s125
      %s143 = sphi 0, %s143
      %s145 = sphi 0, %s143
      %s146 = sphi 0, %s145
      %s160 = sphi 0, %s146
      %s164 = sphi 0, %s164
      %s166 = sphi 0, %s164
      %s167 = sphi 0, %s166
      %s181 = sphi 0, %s167
      %s185 = sphi 0, %s185
      %s187 = sphi 0, %s185
      %s188 = sphi 0, %s187
      %s202 = sphi 0, %s188
      %s206 = sphi 0, %s206
      %s208 = sphi 0, %s206
      %s209 = sphi 0, %s208
      %s223 = sphi 0, %s209
      %s227 = sphi 0, %s227
      %s229 = sphi 0, %s227
      %s230 = sphi 0, %s229
      %s244 = sphi 0, %s230
      %s248 = sphi 0, %s248
      %s250 = sphi 0, %s248
      %s251 = sphi 0, %s250
      %s265 = sphi 0, %s251
      %s269 = sphi 0, %s269
      %s271 = sphi 0, %s269
      %s272 = sphi 0, %s271
      %s286 = sphi 0, %s272
      %s290 = sphi 0, %s290
      %s292 = sphi 0, %s290
      %s293 = sphi 0, %s292
      %s307 = sphi 0, %s293
      %s311 = sphi 0, %s311
      %s313 = sphi 0, %s311
      %s314 = sphi 0, %s313
      %s328 = sphi 0, %s314
      %s332 = sphi 0, %s332
      %s334 = sphi 0, %s332
      %s335 = sphi 0, %s334
      %s349 = sphi 0, %s335
      %s353 = sphi 0, %s353
      %s355 = sphi 0, %s353
      %s356 = sphi 0, %s355
      %s370 = sphi 0, %s356
      %s376 = sphi 0, %s378
      %s379 = sphi 0, %s376
      %s380 = sphi 0, %s379
      %s396 = sphi 0, %s380
    $region4: #{tpu_custom_call.1} parent=1 // loop_header_branch
      %28 = sbr.rel (%p26) target = $region8
    $region5: #{tpu_custom_call.1} parent=1 // loop_body
      %s30 = ssub.s32 %s25, 1
      %s31 = ssub.s32 %s25, 2
      %s32 = sadd.s32 %s25, 1
      %s33 = ssub.s32 %s25, %s32
      %p34 = scmp.eq.s32.totalorder %s33, 0
      %s36 = sadd.s32 %s35, 1
      %s37 = scalar_select %p34, %s35, %s36
      %p40 = pneg %p34
      %p41 = scmp.eq.s32.totalorder %s25, 1
      %p42 = por %p40, %p41
      %p43 = scmp.ne.s32.totalorder %s35, %s38
      %p44 = scmp.eq.s32.totalorder %s25, 0
      %p45 = por %p43, %p44
      %p46 = scmp.ne.s32.totalorder %s35, %s38
      %p47 = scmp.eq.s32.totalorder %s30, 1
      %p48 = por %p46, %p47
      %p49 = scmp.ne.s32.totalorder %s38, %s39
      %p50 = scmp.eq.s32.totalorder %s30, 0
      %p51 = por %p49, %p50
      %p52 = scmp.ne.s32.totalorder %s38, %s39
      %p53 = scmp.eq.s32.totalorder %s31, 1
      %p54 = por %p52, %p53
      %p56 = scmp.ne.s32.totalorder %s39, %s55
      %p57 = scmp.eq.s32.totalorder %s31, 0
      %p58 = por %p56, %p57
      %s60 = sadd.s32 %s59, 1
      %p63 = scmp.eq.s32.totalorder %s25, 1
      %p64 = scmp.ne.s32.totalorder %s59, %s61
      %p65 = scmp.eq.s32.totalorder %s25, 0
      %p66 = por %p64, %p65
      %p67 = scmp.ne.s32.totalorder %s59, %s61
      %p68 = scmp.eq.s32.totalorder %s30, 1
      %p69 = por %p67, %p68
      %p70 = scmp.ne.s32.totalorder %s61, %s62
      %p71 = scmp.eq.s32.totalorder %s30, 0
      %p72 = por %p70, %p71
      %p73 = scmp.ne.s32.totalorder %s61, %s62
      %p74 = scmp.eq.s32.totalorder %s31, 1
      %p75 = por %p73, %p74
      %p77 = scmp.ne.s32.totalorder %s62, %s76
      %p78 = scmp.eq.s32.totalorder %s31, 0
      %p79 = por %p77, %p78
      %s81 = sadd.s32 %s80, 1
      %p84 = scmp.eq.s32.totalorder %s25, 1
      %p85 = scmp.ne.s32.totalorder %s80, %s82
      %p86 = scmp.eq.s32.totalorder %s25, 0
      %p87 = por %p85, %p86
      %p88 = scmp.ne.s32.totalorder %s80, %s82
      %p89 = scmp.eq.s32.totalorder %s30, 1
      %p90 = por %p88, %p89
      %p91 = scmp.ne.s32.totalorder %s82, %s83
      %p92 = scmp.eq.s32.totalorder %s30, 0
      %p93 = por %p91, %p92
      %p94 = scmp.ne.s32.totalorder %s82, %s83
      %p95 = scmp.eq.s32.totalorder %s31, 1
      %p96 = por %p94, %p95
      %p98 = scmp.ne.s32.totalorder %s83, %s97
      %p99 = scmp.eq.s32.totalorder %s31, 0
      %p100 = por %p98, %p99
      %s102 = sadd.s32 %s101, 1
      %p105 = scmp.eq.s32.totalorder %s25, 1
      %p106 = scmp.ne.s32.totalorder %s101, %s103
      %p107 = scmp.eq.s32.totalorder %s25, 0
      %p108 = por %p106, %p107
      %p109 = scmp.ne.s32.totalorder %s101, %s103
      %p110 = scmp.eq.s32.totalorder %s30, 1
      %p111 = por %p109, %p110
      %p112 = scmp.ne.s32.totalorder %s103, %s104
      %p113 = scmp.eq.s32.totalorder %s30, 0
      %p114 = por %p112, %p113
      %p115 = scmp.ne.s32.totalorder %s103, %s104
      %p116 = scmp.eq.s32.totalorder %s31, 1
      %p117 = por %p115, %p116
      %p119 = scmp.ne.s32.totalorder %s104, %s118
      %p120 = scmp.eq.s32.totalorder %s31, 0
      %p121 = por %p119, %p120
      %s123 = sadd.s32 %s122, 1
      %p126 = scmp.eq.s32.totalorder %s25, 1
      %p127 = scmp.ne.s32.totalorder %s122, %s124
      %p128 = scmp.eq.s32.totalorder %s25, 0
      %p129 = por %p127, %p128
      %p130 = scmp.ne.s32.totalorder %s122, %s124
      %p131 = scmp.eq.s32.totalorder %s30, 1
      %p132 = por %p130, %p131
      %p133 = scmp.ne.s32.totalorder %s124, %s125
      %p134 = scmp.eq.s32.totalorder %s30, 0
      %p135 = por %p133, %p134
      %p136 = scmp.ne.s32.totalorder %s124, %s125
      %p137 = scmp.eq.s32.totalorder %s31, 1
      %p138 = por %p136, %p137
      %p140 = scmp.ne.s32.totalorder %s125, %s139
      %p141 = scmp.eq.s32.totalorder %s31, 0
      %p142 = por %p140, %p141
      %s144 = sadd.s32 %s143, 1
      %p147 = scmp.eq.s32.totalorder %s25, 1
      %p148 = scmp.ne.s32.totalorder %s143, %s145
      %p149 = scmp.eq.s32.totalorder %s25, 0
      %p150 = por %p148, %p149
      %p151 = scmp.ne.s32.totalorder %s143, %s145
      %p152 = scmp.eq.s32.totalorder %s30, 1
      %p153 = por %p151, %p152
      %p154 = scmp.ne.s32.totalorder %s145, %s146
      %p155 = scmp.eq.s32.totalorder %s30, 0
      %p156 = por %p154, %p155
      %p157 = scmp.ne.s32.totalorder %s145, %s146
      %p158 = scmp.eq.s32.totalorder %s31, 1
      %p159 = por %p157, %p158
      %p161 = scmp.ne.s32.totalorder %s146, %s160
      %p162 = scmp.eq.s32.totalorder %s31, 0
      %p163 = por %p161, %p162
      %s165 = sadd.s32 %s164, 1
      %p168 = scmp.eq.s32.totalorder %s25, 1
      %p169 = scmp.ne.s32.totalorder %s164, %s166
      %p170 = scmp.eq.s32.totalorder %s25, 0
      %p171 = por %p169, %p170
      %p172 = scmp.ne.s32.totalorder %s164, %s166
      %p173 = scmp.eq.s32.totalorder %s30, 1
      %p174 = por %p172, %p173
      %p175 = scmp.ne.s32.totalorder %s166, %s167
      %p176 = scmp.eq.s32.totalorder %s30, 0
      %p177 = por %p175, %p176
      %p178 = scmp.ne.s32.totalorder %s166, %s167
      %p179 = scmp.eq.s32.totalorder %s31, 1
      %p180 = por %p178, %p179
      %p182 = scmp.ne.s32.totalorder %s167, %s181
      %p183 = scmp.eq.s32.totalorder %s31, 0
      %p184 = por %p182, %p183
      %s186 = sadd.s32 %s185, 1
      %p189 = scmp.eq.s32.totalorder %s25, 1
      %p190 = scmp.ne.s32.totalorder %s185, %s187
      %p191 = scmp.eq.s32.totalorder %s25, 0
      %p192 = por %p190, %p191
      %p193 = scmp.ne.s32.totalorder %s185, %s187
      %p194 = scmp.eq.s32.totalorder %s30, 1
      %p195 = por %p193, %p194
      %p196 = scmp.ne.s32.totalorder %s187, %s188
      %p197 = scmp.eq.s32.totalorder %s30, 0
      %p198 = por %p196, %p197
      %p199 = scmp.ne.s32.totalorder %s187, %s188
      %p200 = scmp.eq.s32.totalorder %s31, 1
      %p201 = por %p199, %p200
      %p203 = scmp.ne.s32.totalorder %s188, %s202
      %p204 = scmp.eq.s32.totalorder %s31, 0
      %p205 = por %p203, %p204
      %s207 = sadd.s32 %s206, 1
      %p210 = scmp.eq.s32.totalorder %s25, 1
      %p211 = scmp.ne.s32.totalorder %s206, %s208
      %p212 = scmp.eq.s32.totalorder %s25, 0
      %p213 = por %p211, %p212
      %p214 = scmp.ne.s32.totalorder %s206, %s208
      %p215 = scmp.eq.s32.totalorder %s30, 1
      %p216 = por %p214, %p215
      %p217 = scmp.ne.s32.totalorder %s208, %s209
      %p218 = scmp.eq.s32.totalorder %s30, 0
      %p219 = por %p217, %p218
      %p220 = scmp.ne.s32.totalorder %s208, %s209
      %p221 = scmp.eq.s32.totalorder %s31, 1
      %p222 = por %p220, %p221
      %p224 = scmp.ne.s32.totalorder %s209, %s223
      %p225 = scmp.eq.s32.totalorder %s31, 0
      %p226 = por %p224, %p225
      %s228 = sadd.s32 %s227, 1
      %p231 = scmp.eq.s32.totalorder %s25, 1
      %p232 = scmp.ne.s32.totalorder %s227, %s229
      %p233 = scmp.eq.s32.totalorder %s25, 0
      %p234 = por %p232, %p233
      %p235 = scmp.ne.s32.totalorder %s227, %s229
      %p236 = scmp.eq.s32.totalorder %s30, 1
      %p237 = por %p235, %p236
      %p238 = scmp.ne.s32.totalorder %s229, %s230
      %p239 = scmp.eq.s32.totalorder %s30, 0
      %p240 = por %p238, %p239
      %p241 = scmp.ne.s32.totalorder %s229, %s230
      %p242 = scmp.eq.s32.totalorder %s31, 1
      %p243 = por %p241, %p242
      %p245 = scmp.ne.s32.totalorder %s230, %s244
      %p246 = scmp.eq.s32.totalorder %s31, 0
      %p247 = por %p245, %p246
      %s249 = sadd.s32 %s248, 1
      %p252 = scmp.eq.s32.totalorder %s25, 1
      %p253 = scmp.ne.s32.totalorder %s248, %s250
      %p254 = scmp.eq.s32.totalorder %s25, 0
      %p255 = por %p253, %p254
      %p256 = scmp.ne.s32.totalorder %s248, %s250
      %p257 = scmp.eq.s32.totalorder %s30, 1
      %p258 = por %p256, %p257
      %p259 = scmp.ne.s32.totalorder %s250, %s251
      %p260 = scmp.eq.s32.totalorder %s30, 0
      %p261 = por %p259, %p260
      %p262 = scmp.ne.s32.totalorder %s250, %s251
      %p263 = scmp.eq.s32.totalorder %s31, 1
      %p264 = por %p262, %p263
      %p266 = scmp.ne.s32.totalorder %s251, %s265
      %p267 = scmp.eq.s32.totalorder %s31, 0
      %p268 = por %p266, %p267
      %s270 = sadd.s32 %s269, 1
      %p273 = scmp.eq.s32.totalorder %s25, 1
      %p274 = scmp.ne.s32.totalorder %s269, %s271
      %p275 = scmp.eq.s32.totalorder %s25, 0
      %p276 = por %p274, %p275
      %p277 = scmp.ne.s32.totalorder %s269, %s271
      %p278 = scmp.eq.s32.totalorder %s30, 1
      %p279 = por %p277, %p278
      %p280 = scmp.ne.s32.totalorder %s271, %s272
      %p281 = scmp.eq.s32.totalorder %s30, 0
      %p282 = por %p280, %p281
      %p283 = scmp.ne.s32.totalorder %s271, %s272
      %p284 = scmp.eq.s32.totalorder %s31, 1
      %p285 = por %p283, %p284
      %p287 = scmp.ne.s32.totalorder %s272, %s286
      %p288 = scmp.eq.s32.totalorder %s31, 0
      %p289 = por %p287, %p288
      %s291 = sadd.s32 %s290, 1
      %p294 = scmp.eq.s32.totalorder %s25, 1
      %p295 = scmp.ne.s32.totalorder %s290, %s292
      %p296 = scmp.eq.s32.totalorder %s25, 0
      %p297 = por %p295, %p296
      %p298 = scmp.ne.s32.totalorder %s290, %s292
      %p299 = scmp.eq.s32.totalorder %s30, 1
      %p300 = por %p298, %p299
      %p301 = scmp.ne.s32.totalorder %s292, %s293
      %p302 = scmp.eq.s32.totalorder %s30, 0
      %p303 = por %p301, %p302
      %p304 = scmp.ne.s32.totalorder %s292, %s293
      %p305 = scmp.eq.s32.totalorder %s31, 1
      %p306 = por %p304, %p305
      %p308 = scmp.ne.s32.totalorder %s293, %s307
      %p309 = scmp.eq.s32.totalorder %s31, 0
      %p310 = por %p308, %p309
      %s312 = sadd.s32 %s311, 1
      %p315 = scmp.eq.s32.totalorder %s25, 1
      %p316 = scmp.ne.s32.totalorder %s311, %s313
      %p317 = scmp.eq.s32.totalorder %s25, 0
      %p318 = por %p316, %p317
      %p319 = scmp.ne.s32.totalorder %s311, %s313
      %p320 = scmp.eq.s32.totalorder %s30, 1
      %p321 = por %p319, %p320
      %p322 = scmp.ne.s32.totalorder %s313, %s314
      %p323 = scmp.eq.s32.totalorder %s30, 0
      %p324 = por %p322, %p323
      %p325 = scmp.ne.s32.totalorder %s313, %s314
      %p326 = scmp.eq.s32.totalorder %s31, 1
      %p327 = por %p325, %p326
      %p329 = scmp.ne.s32.totalorder %s314, %s328
      %p330 = scmp.eq.s32.totalorder %s31, 0
      %p331 = por %p329, %p330
      %s333 = sadd.s32 %s332, 1
      %p336 = scmp.eq.s32.totalorder %s25, 1
      %p337 = scmp.ne.s32.totalorder %s332, %s334
      %p338 = scmp.eq.s32.totalorder %s25, 0
      %p339 = por %p337, %p338
      %p340 = scmp.ne.s32.totalorder %s332, %s334
      %p341 = scmp.eq.s32.totalorder %s30, 1
      %p342 = por %p340, %p341
      %p343 = scmp.ne.s32.totalorder %s334, %s335
      %p344 = scmp.eq.s32.totalorder %s30, 0
      %p345 = por %p343, %p344
      %p346 = scmp.ne.s32.totalorder %s334, %s335
      %p347 = scmp.eq.s32.totalorder %s31, 1
      %p348 = por %p346, %p347
      %p350 = scmp.ne.s32.totalorder %s335, %s349
      %p351 = scmp.eq.s32.totalorder %s31, 0
      %p352 = por %p350, %p351
      %s354 = sadd.s32 %s353, 1
      %p357 = scmp.eq.s32.totalorder %s25, 1
      %p358 = scmp.ne.s32.totalorder %s353, %s355
      %p359 = scmp.eq.s32.totalorder %s25, 0
      %p360 = por %p358, %p359
      %p361 = scmp.ne.s32.totalorder %s353, %s355
      %p362 = scmp.eq.s32.totalorder %s30, 1
      %p363 = por %p361, %p362
      %p364 = scmp.ne.s32.totalorder %s355, %s356
      %p365 = scmp.eq.s32.totalorder %s30, 0
      %p366 = por %p364, %p365
      %p367 = scmp.ne.s32.totalorder %s355, %s356
      %p368 = scmp.eq.s32.totalorder %s31, 1
      %p369 = por %p367, %p368
      %p371 = scmp.ne.s32.totalorder %s356, %s370
      %p372 = scmp.eq.s32.totalorder %s31, 0
      %p373 = por %p371, %p372
      %s374 = ssub.s32 %s25, %s32
      %p375 = scmp.eq.s32.totalorder %s374, 0
      %s377 = sadd.s32 %s376, 1
      %s378 = scalar_select %p375, %s376, %s377
      %p381 = pneg %p375
      %p382 = scmp.eq.s32.totalorder %s25, 1
      %p383 = por %p381, %p382
      %p384 = scmp.ne.s32.totalorder %s376, %s379
      %p385 = scmp.eq.s32.totalorder %s25, 0
      %p386 = por %p384, %p385
      %p387 = scmp.ne.s32.totalorder %s376, %s379
      %p388 = scmp.eq.s32.totalorder %s30, 1
      %p389 = por %p387, %p388
      %p390 = scmp.ne.s32.totalorder %s379, %s380
      %p391 = scmp.eq.s32.totalorder %s30, 0
      %p392 = por %p390, %p391
      %p393 = scmp.ne.s32.totalorder %s379, %s380
      %p394 = scmp.eq.s32.totalorder %s31, 1
      %p395 = por %p393, %p394
      %p397 = scmp.ne.s32.totalorder %s380, %s396
      %p398 = scmp.eq.s32.totalorder %s31, 0
      %p399 = por %p397, %p398
      %p400 = scmp.le.s32.totalorder 1, %s25
      %p401 = scmp.lt.s32.totalorder %s25, 3
      %p402 = pnand %p400, %p401
      %p403 = pneg %p402
      // Predicated region
      $region9: #{tpu_custom_call.1} parent=5 // pred_check
        _
      $region10: #{tpu_custom_call.1} parent=5 // pred_check_branch
        %405 = sbr.rel (%p402) target = $region12
      $region11: #{tpu_custom_call.1} parent=5 // pred_region
        %s406 = ssub.s32 %s25, 1
        // Predicated region
        $region13: #{tpu_custom_call.1} parent=11 // pred_check
          %p407 = pneg %p72
        $region14: #{tpu_custom_call.1} parent=11 // pred_check_branch
          %409 = sbr.rel (%p407) target = $region16
        $region15: #{tpu_custom_call.1} parent=11 // pred_region
          _
        $region16: #{tpu_custom_call.1} parent=11 // pred_fallthru
          _
        // Predicated region
        $region17: #{tpu_custom_call.1} parent=11 // pred_check
          %p410 = pneg %p93
        $region18: #{tpu_custom_call.1} parent=11 // pred_check_branch
          %412 = sbr.rel (%p410) target = $region20
        $region19: #{tpu_custom_call.1} parent=11 // pred_region
          _
        $region20: #{tpu_custom_call.1} parent=11 // pred_fallthru
          _
        // Predicated region
        $region21: #{tpu_custom_call.1} parent=11 // pred_check
          %p413 = pneg %p114
        $region22: #{tpu_custom_call.1} parent=11 // pred_check_branch
          %415 = sbr.rel (%p413) target = $region24
        $region23: #{tpu_custom_call.1} parent=11 // pred_region
          _
        $region24: #{tpu_custom_call.1} parent=11 // pred_fallthru
          _
        // Predicated region
        $region25: #{tpu_custom_call.1} parent=11 // pred_check
          %p416 = pneg %p135
        $region26: #{tpu_custom_call.1} parent=11 // pred_check_branch
          %418 = sbr.rel (%p416) target = $region28
        $region27: #{tpu_custom_call.1} parent=11 // pred_region
          _
        $region28: #{tpu_custom_call.1} parent=11 // pred_fallthru
          _
        // Predicated region
        $region29: #{tpu_custom_call.1} parent=11 // pred_check
          %p419 = pneg %p156
        $region30: #{tpu_custom_call.1} parent=11 // pred_check_branch
          %421 = sbr.rel (%p419) target = $region32
        $region31: #{tpu_custom_call.1} parent=11 // pred_region
          _
        $region32: #{tpu_custom_call.1} parent=11 // pred_fallthru
          _
        // Predicated region
        $region33: #{tpu_custom_call.1} parent=11 // pred_check
          %p422 = pneg %p177
        $region34: #{tpu_custom_call.1} parent=11 // pred_check_branch
          %424 = sbr.rel (%p422) target = $region36
        $region35: #{tpu_custom_call.1} parent=11 // pred_region
          _
        $region36: #{tpu_custom_call.1} parent=11 // pred_fallthru
          _
        // Predicated region
        $region37: #{tpu_custom_call.1} parent=11 // pred_check
          %p425 = pneg %p198
        $region38: #{tpu_custom_call.1} parent=11 // pred_check_branch
          %427 = sbr.rel (%p425) target = $region40
        $region39: #{tpu_custom_call.1} parent=11 // pred_region
          _
        $region40: #{tpu_custom_call.1} parent=11 // pred_fallthru
          _
        // Predicated region
        $region41: #{tpu_custom_call.1} parent=11 // pred_check
          %p428 = pneg %p219
        $region42: #{tpu_custom_call.1} parent=11 // pred_check_branch
          %430 = sbr.rel (%p428) target = $region44
        $region43: #{tpu_custom_call.1} parent=11 // pred_region
          _
        $region44: #{tpu_custom_call.1} parent=11 // pred_fallthru
          _
        // Predicated region
        $region45: #{tpu_custom_call.1} parent=11 // pred_check
          %p431 = pneg %p240
        $region46: #{tpu_custom_call.1} parent=11 // pred_check_branch
          %433 = sbr.rel (%p431) target = $region48
        $region47: #{tpu_custom_call.1} parent=11 // pred_region
          _
        $region48: #{tpu_custom_call.1} parent=11 // pred_fallthru
          _
        // Predicated region
        $region49: #{tpu_custom_call.1} parent=11 // pred_check
          %p434 = pneg %p261
        $region50: #{tpu_custom_call.1} parent=11 // pred_check_branch
          %436 = sbr.rel (%p434) target = $region52
        $region51: #{tpu_custom_call.1} parent=11 // pred_region
          _
        $region52: #{tpu_custom_call.1} parent=11 // pred_fallthru
          _
        // Predicated region
        $region53: #{tpu_custom_call.1} parent=11 // pred_check
          %p437 = pneg %p282
        $region54: #{tpu_custom_call.1} parent=11 // pred_check_branch
          %439 = sbr.rel (%p437) target = $region56
        $region55: #{tpu_custom_call.1} parent=11 // pred_region
          _
        $region56: #{tpu_custom_call.1} parent=11 // pred_fallthru
          _
        // Predicated region
        $region57: #{tpu_custom_call.1} parent=11 // pred_check
          %p440 = pneg %p303
        $region58: #{tpu_custom_call.1} parent=11 // pred_check_branch
          %442 = sbr.rel (%p440) target = $region60
        $region59: #{tpu_custom_call.1} parent=11 // pred_region
          _
        $region60: #{tpu_custom_call.1} parent=11 // pred_fallthru
          _
        // Predicated region
        $region61: #{tpu_custom_call.1} parent=11 // pred_check
          %p443 = pneg %p324
        $region62: #{tpu_custom_call.1} parent=11 // pred_check_branch
          %445 = sbr.rel (%p443) target = $region64
        $region63: #{tpu_custom_call.1} parent=11 // pred_region
          _
        $region64: #{tpu_custom_call.1} parent=11 // pred_fallthru
          _
        // Predicated region
        $region65: #{tpu_custom_call.1} parent=11 // pred_check
          %p446 = pneg %p345
        $region66: #{tpu_custom_call.1} parent=11 // pred_check_branch
          %448 = sbr.rel (%p446) target = $region68
        $region67: #{tpu_custom_call.1} parent=11 // pred_region
          _
        $region68: #{tpu_custom_call.1} parent=11 // pred_fallthru
          _
        // Predicated region
        $region69: #{tpu_custom_call.1} parent=11 // pred_check
          %p449 = pneg %p366
        $region70: #{tpu_custom_call.1} parent=11 // pred_check_branch
          %451 = sbr.rel (%p449) target = $region72
        $region71: #{tpu_custom_call.1} parent=11 // pred_region
          _
        $region72: #{tpu_custom_call.1} parent=11 // pred_fallthru
          _
      $region12: #{tpu_custom_call.1} parent=5 // pred_fallthru
        _
      %p452 = scmp.lt.s32.totalorder %s25, 2
      // Predicated region
      $region73: #{tpu_custom_call.1} parent=5 // pred_check
        %p453 = pneg %p452
      $region74: #{tpu_custom_call.1} parent=5 // pred_check_branch
        %455 = sbr.rel (%p453) target = $region76
      $region75: #{tpu_custom_call.1} parent=5 // pred_region
        // Predicated region
        $region77: #{tpu_custom_call.1} parent=75 // pred_check
          %p456 = pneg %p45
        $region78: #{tpu_custom_call.1} parent=75 // pred_check_branch
          %458 = sbr.rel (%p456) target = $region80
        $region79: #{tpu_custom_call.1} parent=75 // pred_region
          %p459 = scmp.lt.s32.totalorder %s25, 1
          %s460 = scalar_select %p459, %s25, 1
          %s461 = smul.addr %s460, 4
          %s462 = smul.addr %s461, 8
          %s463 = scalar_lea.vmem %s0, %s462
        $region80: #{tpu_custom_call.1} parent=75 // pred_fallthru
          _
      $region76: #{tpu_custom_call.1} parent=5 // pred_fallthru
        _
      %p464 = scmp.le.s32.totalorder 1, %s25
      %p465 = scmp.lt.s32.totalorder %s25, 3
      %p466 = pnand %p464, %p465
      %p467 = pneg %p466
      // Predicated region
      $region81: #{tpu_custom_call.1} parent=5 // pred_check
        _
      $region82: #{tpu_custom_call.1} parent=5 // pred_check_branch
        %469 = sbr.rel (%p466) target = $region84
      $region83: #{tpu_custom_call.1} parent=5 // pred_region
        %s470 = ssub.s32 %s25, 1
        %p471 = scmp.lt.s32.totalorder %s30, 1
        %s472 = scalar_select %p471, %s30, 1
        %s473 = smul.addr %s472, 4
        %s474 = smul.addr %s473, 8
        %s475 = scalar_lea.vmem %s0, %s474
        %p476 = pneg %p51
        %p477 = pneg %p48
        %p478 = pneg %p72
        %p479 = pneg %p69
        %p480 = pneg %p93
        %p481 = pneg %p90
        %p482 = pneg %p114
        %p483 = pneg %p111
        %p484 = pneg %p135
        %p485 = pneg %p132
        %p486 = pneg %p156
        %p487 = pneg %p153
        %p488 = pneg %p177
        %p489 = pneg %p174
        %p490 = pneg %p198
        %p491 = pneg %p195
        %p492 = pneg %p219
        %p493 = pneg %p216
        %p494 = pneg %p240
        %p495 = pneg %p237
        %p496 = pneg %p261
        %p497 = pneg %p258
        %p498 = pneg %p282
        %p499 = pneg %p279
        %p500 = pneg %p303
        %p501 = pneg %p300
        %p502 = pneg %p324
        %p503 = pneg %p321
        %p504 = pneg %p345
        %p505 = pneg %p342
        %p506 = pneg %p366
        %p507 = pneg %p363
        %p508 = pneg %p392
        %p509 = pneg %p389
        %s510 = sand.u32 %s379, 1
        %s511 = scalar_lea.sflag [#allocation3], %s510
        %s512 = sand.u32 %s379, 1
        %s513 = smul.addr %s512, 32
        %s514 = scalar_lea.vmem [#allocation2], %s513
        %p515 = scmp.lt.s32.totalorder %s30, 1
        %s516 = scalar_select %p515, %s30, 1
        %s517 = smul.addr %s516, 4
        %s518 = smul.addr %s517, 8
        %s519 = scalar_lea.vmem %s0, %s518
        %v521 = vld [vmem:[%s1] sm:$0x1]
        %v522 = vld [vmem:[%s2] sm:$0x3]
        %v523 = vld [vmem:[%s3] sm:$0xf]
        %v524 = vld [vmem:[%s3 + $0x4] sm:$0xf]
        %v525 = vld [vmem:[%s4] sm:$0xf]
        %v526 = vld [vmem:[%s4 + $0x4] sm:$0xf]
        %v527 = vld [vmem:[%s5] sm:$0xf]
        %v528 = vld [vmem:[%s5 + $0x4] sm:$0xf]
        %v529 = vld [vmem:[%s6] sm:$0xf]
        %v530 = vld [vmem:[%s8] sm:$0xf]
        %v531 = vld [vmem:[%s8 + $0x4] sm:$0xf]
        %v532 = vld [vmem:[%s7] sm:$0xff]
        %v533 = vld [vmem:[%s9] sm:$0xff]
        %v534 = vld [vmem:[%s9 + $0x8] sm:$0xff]
        %v535 = vld [vmem:[%s10] sm:$0xf]
        %v536 = vld [vmem:[%s10 + $0x4] sm:$0xf]
        %v537 = vld [vmem:[%s11] sm:$0xf]
        %v538 = vld [vmem:[%s11 + $0x4] sm:$0xf]
        %v539 = vld [vmem:[%s12] sm:$0xf]
        %v540 = vld [vmem:[%s12 + $0x4] sm:$0xf]
        %v541 = vld [vmem:[%s12 + $0x8] sm:$0xf]
        %v542 = vld [vmem:[%s12 + $0xc] sm:$0xf]
        %v543 = vld [vmem:[%s12 + $0x10] sm:$0xf]
        %v544 = vld [vmem:[%s12 + $0x14] sm:$0xf]
        %v545 = vld [vmem:[%s12 + $0x18] sm:$0xf]
        %v546 = vld [vmem:[%s12 + $0x1c] sm:$0xf]
        %v547 = vld [vmem:[%s12 + $0x20] sm:$0xf]
        %v548 = vld [vmem:[%s12 + $0x24] sm:$0xf]
        %v549 = vld [vmem:[%s12 + $0x28] sm:$0xf]
        %v550 = vld [vmem:[%s12 + $0x2c] sm:$0xf]
        %v551 = vld [vmem:[%s12 + $0x30] sm:$0xf]
        %v552 = vld [vmem:[%s12 + $0x34] sm:$0xf]
        %v553 = vld [vmem:[%s12 + $0x38] sm:$0xf]
        %v554 = vld [vmem:[%s12 + $0x3c] sm:$0xf]
        %v555 = vld [vmem:[%s12 + $0x40] sm:$0xf]
        %v556 = vld [vmem:[%s12 + $0x44] sm:$0xf]
        %v557 = vld [vmem:[%s12 + $0x48] sm:$0xf]
        %v558 = vld [vmem:[%s12 + $0x4c] sm:$0xf]
        %v559 = vld [vmem:[%s12 + $0x50] sm:$0xf]
        %v560 = vld [vmem:[%s12 + $0x54] sm:$0xf]
        %v561 = vld [vmem:[%s12 + $0x58] sm:$0xf]
        %v562 = vld [vmem:[%s12 + $0x5c] sm:$0xf]
        %v563 = vld [vmem:[%s12 + $0x60] sm:$0xf]
        %v564 = vld [vmem:[%s12 + $0x64] sm:$0xf]
        %v565 = vld [vmem:[%s12 + $0x68] sm:$0xf]
        %v566 = vld [vmem:[%s12 + $0x6c] sm:$0xf]
        %v567 = vld [vmem:[%s12 + $0x70] sm:$0xf]
        %v568 = vld [vmem:[%s12 + $0x74] sm:$0xf]
        %v569 = vld [vmem:[%s12 + $0x78] sm:$0xf]
        %v570 = vld [vmem:[%s12 + $0x7c] sm:$0xf]
        %v571 = vld [vmem:[%s13] sm:$0xf]
        %v572 = vld [vmem:[%s13 + $0x4] sm:$0xf]
        %v573 = vld [vmem:[%s13 + $0x8] sm:$0xf]
        %v574 = vld [vmem:[%s13 + $0xc] sm:$0xf]
        %v575 = vld [vmem:[%s13 + $0x10] sm:$0xf]
        %v576 = vld [vmem:[%s13 + $0x14] sm:$0xf]
        %v577 = vld [vmem:[%s13 + $0x18] sm:$0xf]
        %v578 = vld [vmem:[%s13 + $0x1c] sm:$0xf]
        %v579 = vld [vmem:[%s13 + $0x20] sm:$0xf]
        %v580 = vld [vmem:[%s13 + $0x24] sm:$0xf]
        %v581 = vld [vmem:[%s13 + $0x28] sm:$0xf]
        %v582 = vld [vmem:[%s13 + $0x2c] sm:$0xf]
        %v583 = vld [vmem:[%s13 + $0x30] sm:$0xf]
        %v584 = vld [vmem:[%s13 + $0x34] sm:$0xf]
        %v585 = vld [vmem:[%s13 + $0x38] sm:$0xf]
        %v586 = vld [vmem:[%s13 + $0x3c] sm:$0xf]
        %v587 = vld [vmem:[%s13 + $0x40] sm:$0xf]
        %v588 = vld [vmem:[%s13 + $0x44] sm:$0xf]
        %v589 = vld [vmem:[%s13 + $0x48] sm:$0xf]
        %v590 = vld [vmem:[%s13 + $0x4c] sm:$0xf]
        %v591 = vld [vmem:[%s13 + $0x50] sm:$0xf]
        %v592 = vld [vmem:[%s13 + $0x54] sm:$0xf]
        %v593 = vld [vmem:[%s13 + $0x58] sm:$0xf]
        %v594 = vld [vmem:[%s13 + $0x5c] sm:$0xf]
        %v595 = vld [vmem:[%s13 + $0x60] sm:$0xf]
        %v596 = vld [vmem:[%s13 + $0x64] sm:$0xf]
        %v597 = vld [vmem:[%s13 + $0x68] sm:$0xf]
        %v598 = vld [vmem:[%s13 + $0x6c] sm:$0xf]
        %v599 = vld [vmem:[%s13 + $0x70] sm:$0xf]
        %v600 = vld [vmem:[%s13 + $0x74] sm:$0xf]
        %v601 = vld [vmem:[%s13 + $0x78] sm:$0xf]
        %v602 = vld [vmem:[%s13 + $0x7c] sm:$0xf]
        %v603 = vld [vmem:[%s14] sm:$0xff]
        %v604 = vld [vmem:[%s14 + $0x8] sm:$0xff]
        %v605 = vld [vmem:[%s15] sm:$0xff]
        %v606 = vld [vmem:[%s15 + $0x8] sm:$0xff]
        %v607 = vld [vmem:[%s519] sm:$0xff]
        %v608 = vld [vmem:[%s519 + $0x8] sm:$0xff]
        %v609 = vld [vmem:[%s519 + $0x10] sm:$0xff]
        %v610 = vld [vmem:[%s519 + $0x18] sm:$0xff]
        %v611 = vpack.c.bf16 %v609, %v607
        %v612 = vpack.c.bf16 %v610, %v608
        %v645 = vunpack.c.l.b16 %v539
        %v646 = vunpack.c.l.b16 %v540
        %v647 = vunpack.c.l.b16 %v541
        %v648 = vunpack.c.l.b16 %v542
        %v649 = vunpack.c.l.b16 %v543
        %v650 = vunpack.c.l.b16 %v544
        %v651 = vunpack.c.l.b16 %v545
        %v652 = vunpack.c.l.b16 %v546
        %v653 = vunpack.c.l.b16 %v547
        %v654 = vunpack.c.l.b16 %v548
        %v655 = vunpack.c.l.b16 %v549
        %v656 = vunpack.c.l.b16 %v550
        %v657 = vunpack.c.l.b16 %v551
        %v658 = vunpack.c.l.b16 %v552
        %v659 = vunpack.c.l.b16 %v553
        %v660 = vunpack.c.l.b16 %v554
        %v661 = vunpack.c.l.b16 %v555
        %v662 = vunpack.c.l.b16 %v556
        %v663 = vunpack.c.l.b16 %v557
        %v664 = vunpack.c.l.b16 %v558
        %v665 = vunpack.c.l.b16 %v559
        %v666 = vunpack.c.l.b16 %v560
        %v667 = vunpack.c.l.b16 %v561
        %v668 = vunpack.c.l.b16 %v562
        %v669 = vunpack.c.l.b16 %v563
        %v670 = vunpack.c.l.b16 %v564
        %v671 = vunpack.c.l.b16 %v565
        %v672 = vunpack.c.l.b16 %v566
        %v673 = vunpack.c.l.b16 %v567
        %v674 = vunpack.c.l.b16 %v568
        %v675 = vunpack.c.l.b16 %v569
        %v676 = vunpack.c.l.b16 %v570
        %v677 = vpack.c.b16 %v646, %v645
        %v678 = vpack.c.b16 %v648, %v647
        %v679 = vpack.c.b16 %v650, %v649
        %v680 = vpack.c.b16 %v652, %v651
        %v681 = vpack.c.b16 %v654, %v653
        %v682 = vpack.c.b16 %v656, %v655
        %v683 = vpack.c.b16 %v658, %v657
        %v684 = vpack.c.b16 %v660, %v659
        %v685 = vpack.c.b16 %v662, %v661
        %v686 = vpack.c.b16 %v664, %v663
        %v687 = vpack.c.b16 %v666, %v665
        %v688 = vpack.c.b16 %v668, %v667
        %v689 = vpack.c.b16 %v670, %v669
        %v690 = vpack.c.b16 %v672, %v671
        %v691 = vpack.c.b16 %v674, %v673
        %v692 = vpack.c.b16 %v676, %v675
        %709 = vmatpush.bf16.msra.mxu0 %v684
        %710 = vmatpush.bf16.msra.mxu0 %v683
        %711 = vmatpush.bf16.msra.mxu0 %v682
        %712 = vmatpush.bf16.msra.mxu0 %v681
        %713 = vmatpush.bf16.msra.mxu0 %v680
        %714 = vmatpush.bf16.msra.mxu0 %v679
        %715 = vmatpush.bf16.msra.mxu0 %v678
        %716 = vmatpush.bf16.msra.mxu0 %v677
        %717 = vmatmul.bf16.gmra.mxu0 %v611
        %v718 = vpop.f32.mrf.mxu0
        %v719 = vadd.f32 0.0, %v718
        %v720 = vpop.f32.mrf.mxu0
        %v721 = vadd.f32 0.0, %v720
        %722 = vdwg.mxu0
        %723 = vmatpush.bf16.msra.mxu0 %v692
        %724 = vmatpush.bf16.msra.mxu0 %v691
        %725 = vmatpush.bf16.msra.mxu0 %v690
        %726 = vmatpush.bf16.msra.mxu0 %v689
        %727 = vmatpush.bf16.msra.mxu0 %v688
        %728 = vmatpush.bf16.msra.mxu0 %v687
        %729 = vmatpush.bf16.msra.mxu0 %v686
        %730 = vmatpush.bf16.msra.mxu0 %v685
        %731 = vmatmul.bf16.gmra.mxu0 %v612
        %v732 = vpop.f32.mrf.mxu0
        %v733 = vadd.f32 %v719, %v732
        %v734 = vpop.f32.mrf.mxu0
        %v735 = vadd.f32 %v721, %v734
        %736 = vdwg.mxu0
        %v769 = vunpack.c.l.b16 %v571
        %v770 = vunpack.c.l.b16 %v572
        %v771 = vunpack.c.l.b16 %v573
        %v772 = vunpack.c.l.b16 %v574
        %v773 = vunpack.c.l.b16 %v575
        %v774 = vunpack.c.l.b16 %v576
        %v775 = vunpack.c.l.b16 %v577
        %v776 = vunpack.c.l.b16 %v578
        %v777 = vunpack.c.l.b16 %v579
        %v778 = vunpack.c.l.b16 %v580
        %v779 = vunpack.c.l.b16 %v581
        %v780 = vunpack.c.l.b16 %v582
        %v781 = vunpack.c.l.b16 %v583
        %v782 = vunpack.c.l.b16 %v584
        %v783 = vunpack.c.l.b16 %v585
        %v784 = vunpack.c.l.b16 %v586
        %v785 = vunpack.c.l.b16 %v587
        %v786 = vunpack.c.l.b16 %v588
        %v787 = vunpack.c.l.b16 %v589
        %v788 = vunpack.c.l.b16 %v590
        %v789 = vunpack.c.l.b16 %v591
        %v790 = vunpack.c.l.b16 %v592
        %v791 = vunpack.c.l.b16 %v593
        %v792 = vunpack.c.l.b16 %v594
        %v793 = vunpack.c.l.b16 %v595
        %v794 = vunpack.c.l.b16 %v596
        %v795 = vunpack.c.l.b16 %v597
        %v796 = vunpack.c.l.b16 %v598
        %v797 = vunpack.c.l.b16 %v599
        %v798 = vunpack.c.l.b16 %v600
        %v799 = vunpack.c.l.b16 %v601
        %v800 = vunpack.c.l.b16 %v602
        %v801 = vpack.c.b16 %v770, %v769
        %v802 = vpack.c.b16 %v772, %v771
        %v803 = vpack.c.b16 %v774, %v773
        %v804 = vpack.c.b16 %v776, %v775
        %v805 = vpack.c.b16 %v778, %v777
        %v806 = vpack.c.b16 %v780, %v779
        %v807 = vpack.c.b16 %v782, %v781
        %v808 = vpack.c.b16 %v784, %v783
        %v809 = vpack.c.b16 %v786, %v785
        %v810 = vpack.c.b16 %v788, %v787
        %v811 = vpack.c.b16 %v790, %v789
        %v812 = vpack.c.b16 %v792, %v791
        %v813 = vpack.c.b16 %v794, %v793
        %v814 = vpack.c.b16 %v796, %v795
        %v815 = vpack.c.b16 %v798, %v797
        %v816 = vpack.c.b16 %v800, %v799
        %833 = vmatpush.bf16.msra.mxu0 %v808
        %834 = vmatpush.bf16.msra.mxu0 %v807
        %835 = vmatpush.bf16.msra.mxu0 %v806
        %836 = vmatpush.bf16.msra.mxu0 %v805
        %837 = vmatpush.bf16.msra.mxu0 %v804
        %838 = vmatpush.bf16.msra.mxu0 %v803
        %839 = vmatpush.bf16.msra.mxu0 %v802
        %840 = vmatpush.bf16.msra.mxu0 %v801
        %841 = vmatmul.bf16.gmra.mxu0 %v611
        %v842 = vpop.f32.mrf.mxu0
        %v843 = vadd.f32 0.0, %v842
        %v844 = vpop.f32.mrf.mxu0
        %v845 = vadd.f32 0.0, %v844
        %846 = vdwg.mxu0
        %847 = vmatpush.bf16.msra.mxu0 %v816
        %848 = vmatpush.bf16.msra.mxu0 %v815
        %849 = vmatpush.bf16.msra.mxu0 %v814
        %850 = vmatpush.bf16.msra.mxu0 %v813
        %851 = vmatpush.bf16.msra.mxu0 %v812
        %852 = vmatpush.bf16.msra.mxu0 %v811
        %853 = vmatpush.bf16.msra.mxu0 %v810
        %854 = vmatpush.bf16.msra.mxu0 %v809
        %855 = vmatmul.bf16.gmra.mxu0 %v612
        %v856 = vpop.f32.mrf.mxu0
        %v857 = vadd.f32 %v843, %v856
        %v858 = vpop.f32.mrf.mxu0
        %v859 = vadd.f32 %v845, %v858
        %860 = vdwg.mxu0
        %v861 = vpack.c.bf16 %v735, %v733
        %vm862 = vcmask 130048
        %v864 = vsel %vm862, %v521, 0
        %866 = vmatpush.bf16.msra.mxu0 0
        %867 = vmatpush.bf16.msra.mxu0 0
        %868 = vmatpush.bf16.msra.mxu0 0
        %869 = vmatpush.bf16.msra.mxu0 0
        %870 = vmatpush.bf16.msra.mxu0 0
        %871 = vmatpush.bf16.msra.mxu0 0
        %872 = vmatpush.bf16.msra.mxu0 0
        %873 = vmatpush.bf16.msra.mxu0 %v861
        %874 = vmatmul.bf16.gmra.mxu0 %v864
        %v875 = vpop.f32.mrf.mxu0
        %v876 = vadd.f32 0.0, %v875
        %v877 = vpop.f32.mrf.mxu0
        %878 = vdwg.mxu0
        %880 = vset.pattern.permute.xlu0 0
        %881 = vperm.xlu0 %880, %v522
        %v882 = vpop.permute.xlu0 %881
        %v884 = vmul.f32 %v876, %v882
        %885 = vset.pattern.permute.xlu0 1
        %886 = vperm.xlu0 %885, %v522
        %v887 = vpop.permute.xlu0 %886
        %v889 = vadd.f32 %v884, %v887
        %v890 = vmax.f32 %v889, 0.0
        %v891 = vpack.c.bf16 %v890, %v890
        %v894 = vunpack.c.l.b16 %v523
        %v895 = vunpack.c.l.b16 %v524
        %v896 = vpack.c.b16 %v895, %v894
        %vm897 = vcmask 15360
        %v899 = vsel %vm897, %v896, 0
        %vm901 = vcmask 1040384
        %v903 = vsel %vm901, %v891, 0
        %905 = vmatpush.bf16.msra.mxu0 0
        %906 = vmatpush.bf16.msra.mxu0 0
        %907 = vmatpush.bf16.msra.mxu0 0
        %908 = vmatpush.bf16.msra.mxu0 0
        %909 = vmatpush.bf16.msra.mxu0 0
        %910 = vmatpush.bf16.msra.mxu0 0
        %911 = vmatpush.bf16.msra.mxu0 0
        %912 = vmatpush.bf16.msra.mxu0 %v903
        %913 = vmatmul.bf16.gmra.mxu0 %v899
        %v914 = vpop.f32.mrf.mxu0
        %v915 = vadd.f32 0.0, %v914
        %v916 = vpop.f32.mrf.mxu0
        %v917 = vadd.f32 0.0, %v916
        %918 = vdwg.mxu0
        %v919 = vxor.u32 %v915, 2147483648
        %v920 = vxor.u32 %v917, 2147483648
        %v921 = vmul.f32 %v919, 1.442695
        %v922 = vpow.pop %v921
        %v923 = vmul.f32 %v920, 1.442695
        %v924 = vpow.pop %v923
        %v925 = vadd.f32 %v922, 1.0
        %v926 = vadd.f32 %v924, 1.0
        %v927 = vrcp.pop %v925
        %v928 = vmul.f32 %v925, %v927
        %v929 = vsub.f32 1.0, %v928
        %v930 = vmul.f32 %v927, %v929
        %v931 = vadd.f32 %v927, %v930
        %vm932 = vweird.f32 %v925
        %vm933 = vweird.f32 %v927
        %vm934 = vmor %vm932, %vm933
        %v935 = vsel %vm934, %v927, %v931
        %v936 = vand.u32 2147483647, %v925
        %vm937 = vcmp.eq.f32.partialorder %v936, 8.507059e+37
        %v938 = vand.u32 %v925, 2147483648
        %v939 = vor.u32 1.1754944e-38, %v938
        %v940 = vsel %vm937, %v939, %v935
        %v941 = vmul.f32 1.0, %v940
        %v942 = vrcp.pop %v926
        %v943 = vmul.f32 %v926, %v942
        %v944 = vsub.f32 1.0, %v943
        %v945 = vmul.f32 %v942, %v944
        %v946 = vadd.f32 %v942, %v945
        %vm947 = vweird.f32 %v926
        %vm948 = vweird.f32 %v942
        %vm949 = vmor %vm947, %vm948
        %v950 = vsel %vm949, %v942, %v946
        %v951 = vand.u32 2147483647, %v926
        %vm952 = vcmp.eq.f32.partialorder %v951, 8.507059e+37
        %v953 = vand.u32 %v926, 2147483648
        %v954 = vor.u32 1.1754944e-38, %v953
        %v955 = vsel %vm952, %v954, %v950
        %v956 = vmul.f32 1.0, %v955
        %v959 = vunpack.c.l.b16 %v525
        %v960 = vunpack.c.l.b16 %v526
        %v961 = vpack.c.b16 %v960, %v959
        %963 = vrot.lane.b32.xlu0 %v891, 112
        %v964 = vpop.permute.xlu0 %963
        %v966 = vsel %vm897, %v961, 0
        %v969 = vsel %vm901, %v964, 0
        %971 = vmatpush.bf16.msra.mxu0 0
        %972 = vmatpush.bf16.msra.mxu0 0
        %973 = vmatpush.bf16.msra.mxu0 0
        %974 = vmatpush.bf16.msra.mxu0 0
        %975 = vmatpush.bf16.msra.mxu0 0
        %976 = vmatpush.bf16.msra.mxu0 0
        %977 = vmatpush.bf16.msra.mxu0 0
        %978 = vmatpush.bf16.msra.mxu0 %v969
        %979 = vmatmul.bf16.gmra.mxu0 %v966
        %v980 = vpop.f32.mrf.mxu0
        %v981 = vadd.f32 0.0, %v980
        %v982 = vpop.f32.mrf.mxu0
        %v983 = vadd.f32 0.0, %v982
        %984 = vdwg.mxu0
        %v985 = vxor.u32 %v981, 2147483648
        %v986 = vxor.u32 %v983, 2147483648
        %v987 = vmul.f32 %v985, 1.442695
        %v988 = vpow.pop %v987
        %v989 = vmul.f32 %v986, 1.442695
        %v990 = vpow.pop %v989
        %v991 = vadd.f32 %v988, 1.0
        %v992 = vadd.f32 %v990, 1.0
        %v993 = vrcp.pop %v991
        %v994 = vmul.f32 %v991, %v993
        %v995 = vsub.f32 1.0, %v994
        %v996 = vmul.f32 %v993, %v995
        %v997 = vadd.f32 %v993, %v996
        %vm998 = vweird.f32 %v991
        %vm999 = vweird.f32 %v993
        %vm1000 = vmor %vm998, %vm999
        %v1001 = vsel %vm1000, %v993, %v997
        %v1002 = vand.u32 2147483647, %v991
        %vm1003 = vcmp.eq.f32.partialorder %v1002, 8.507059e+37
        %v1004 = vand.u32 %v991, 2147483648
        %v1005 = vor.u32 1.1754944e-38, %v1004
        %v1006 = vsel %vm1003, %v1005, %v1001
        %v1007 = vmul.f32 1.0, %v1006
        %v1008 = vrcp.pop %v992
        %v1009 = vmul.f32 %v992, %v1008
        %v1010 = vsub.f32 1.0, %v1009
        %v1011 = vmul.f32 %v1008, %v1010
        %v1012 = vadd.f32 %v1008, %v1011
        %vm1013 = vweird.f32 %v992
        %vm1014 = vweird.f32 %v1008
        %vm1015 = vmor %vm1013, %vm1014
        %v1016 = vsel %vm1015, %v1008, %v1012
        %v1017 = vand.u32 2147483647, %v992
        %vm1018 = vcmp.eq.f32.partialorder %v1017, 8.507059e+37
        %v1019 = vand.u32 %v992, 2147483648
        %v1020 = vor.u32 1.1754944e-38, %v1019
        %v1021 = vsel %vm1018, %v1020, %v1016
        %v1022 = vmul.f32 1.0, %v1021
        %v1023 = vpack.c.bf16 %v859, %v857
        %v1026 = vunpack.c.l.b16 %v527
        %v1027 = vunpack.c.l.b16 %v528
        %v1028 = vpack.c.b16 %v1027, %v1026
        %v1030 = vsel %vm862, %v1028, 0
        %1032 = vmatpush.bf16.msra.mxu0 0
        %1033 = vmatpush.bf16.msra.mxu0 0
        %1034 = vmatpush.bf16.msra.mxu0 0
        %1035 = vmatpush.bf16.msra.mxu0 0
        %1036 = vmatpush.bf16.msra.mxu0 0
        %1037 = vmatpush.bf16.msra.mxu0 0
        %1038 = vmatpush.bf16.msra.mxu0 0
        %1039 = vmatpush.bf16.msra.mxu0 %v1023
        %1040 = vmatmul.bf16.gmra.mxu0 %v1030
        %v1041 = vpop.f32.mrf.mxu0
        %v1042 = vadd.f32 0.0, %v1041
        %v1043 = vpop.f32.mrf.mxu0
        %v1044 = vadd.f32 0.0, %v1043
        %1045 = vdwg.mxu0
        %v1046 = vxor.u32 %v1042, 2147483648
        %v1047 = vxor.u32 %v1044, 2147483648
        %v1048 = vmul.f32 %v1046, 1.442695
        %v1049 = vpow.pop %v1048
        %v1050 = vmul.f32 %v1047, 1.442695
        %v1051 = vpow.pop %v1050
        %v1052 = vadd.f32 %v1049, 1.0
        %v1053 = vadd.f32 %v1051, 1.0
        %v1054 = vrcp.pop %v1052
        %v1055 = vmul.f32 %v1052, %v1054
        %v1056 = vsub.f32 1.0, %v1055
        %v1057 = vmul.f32 %v1054, %v1056
        %v1058 = vadd.f32 %v1054, %v1057
        %vm1059 = vweird.f32 %v1052
        %vm1060 = vweird.f32 %v1054
        %vm1061 = vmor %vm1059, %vm1060
        %v1062 = vsel %vm1061, %v1054, %v1058
        %v1063 = vand.u32 2147483647, %v1052
        %vm1064 = vcmp.eq.f32.partialorder %v1063, 8.507059e+37
        %v1065 = vand.u32 %v1052, 2147483648
        %v1066 = vor.u32 1.1754944e-38, %v1065
        %v1067 = vsel %vm1064, %v1066, %v1062
        %v1068 = vmul.f32 1.0, %v1067
        %v1069 = vrcp.pop %v1053
        %v1070 = vmul.f32 %v1053, %v1069
        %v1071 = vsub.f32 1.0, %v1070
        %v1072 = vmul.f32 %v1069, %v1071
        %v1073 = vadd.f32 %v1069, %v1072
        %vm1074 = vweird.f32 %v1053
        %vm1075 = vweird.f32 %v1069
        %vm1076 = vmor %vm1074, %vm1075
        %v1077 = vsel %vm1076, %v1069, %v1073
        %v1078 = vand.u32 2147483647, %v1053
        %vm1079 = vcmp.eq.f32.partialorder %v1078, 8.507059e+37
        %v1080 = vand.u32 %v1053, 2147483648
        %v1081 = vor.u32 1.1754944e-38, %v1080
        %v1082 = vsel %vm1079, %v1081, %v1077
        %v1083 = vmul.f32 1.0, %v1082
        %v1084 = vpack.c.bf16 %v956, %v941
        %v1087 = vunpack.c.l.b16 %v603
        %v1088 = vunpack.c.h.b16 %v603
        %v1089 = vunpack.c.l.b16 %v604
        %v1090 = vunpack.c.h.b16 %v604
        %v1091 = vpack.c.b16 %v1089, %v1087
        %v1092 = vpack.c.b16 %v1090, %v1088
        %v1096 = vsel %vm862, %v1084, 0
        %1098 = vmatpush.bf16.msra.mxu0 0
        %1099 = vmatpush.bf16.msra.mxu0 0
        %1100 = vmatpush.bf16.msra.mxu0 0
        %1101 = vmatpush.bf16.msra.mxu0 0
        %1102 = vmatpush.bf16.msra.mxu0 0
        %1103 = vmatpush.bf16.msra.mxu0 0
        %1104 = vmatpush.bf16.msra.mxu0 0
        %1105 = vmatpush.bf16.msra.mxu0 %v1091
        %1106 = vmatmul.bf16.gmra.mxu0 %v1096
        %v1107 = vpop.f32.mrf.mxu0
        %v1108 = vadd.f32 0.0, %v1107
        %v1109 = vpop.f32.mrf.mxu0
        %v1110 = vadd.f32 0.0, %v1109
        %1111 = vdwg.mxu0
        %1112 = vmatpush.bf16.msra.mxu0 0
        %1113 = vmatpush.bf16.msra.mxu0 0
        %1114 = vmatpush.bf16.msra.mxu0 0
        %1115 = vmatpush.bf16.msra.mxu0 0
        %1116 = vmatpush.bf16.msra.mxu0 0
        %1117 = vmatpush.bf16.msra.mxu0 0
        %1118 = vmatpush.bf16.msra.mxu0 0
        %1119 = vmatpush.bf16.msra.mxu0 %v1092
        %1120 = vmatmul.bf16.gmra.mxu0 %v1096
        %v1121 = vpop.f32.mrf.mxu0
        %v1122 = vadd.f32 0.0, %v1121
        %v1123 = vpop.f32.mrf.mxu0
        %v1124 = vadd.f32 0.0, %v1123
        %1125 = vdwg.mxu0
        %v1126 = vpack.c.bf16 %v1022, %v1007
        %v1129 = vunpack.c.l.b16 %v605
        %v1130 = vunpack.c.h.b16 %v605
        %v1131 = vunpack.c.l.b16 %v606
        %v1132 = vunpack.c.h.b16 %v606
        %v1133 = vpack.c.b16 %v1131, %v1129
        %v1134 = vpack.c.b16 %v1132, %v1130
        %v1138 = vsel %vm862, %v1126, 0
        %1140 = vmatpush.bf16.msra.mxu0 0
        %1141 = vmatpush.bf16.msra.mxu0 0
        %1142 = vmatpush.bf16.msra.mxu0 0
        %1143 = vmatpush.bf16.msra.mxu0 0
        %1144 = vmatpush.bf16.msra.mxu0 0
        %1145 = vmatpush.bf16.msra.mxu0 0
        %1146 = vmatpush.bf16.msra.mxu0 0
        %1147 = vmatpush.bf16.msra.mxu0 %v1133
        %1148 = vmatmul.bf16.gmra.mxu0 %v1138
        %v1149 = vpop.f32.mrf.mxu0
        %v1150 = vadd.f32 0.0, %v1149
        %v1151 = vpop.f32.mrf.mxu0
        %v1152 = vadd.f32 0.0, %v1151
        %1153 = vdwg.mxu0
        %1154 = vmatpush.bf16.msra.mxu0 0
        %1155 = vmatpush.bf16.msra.mxu0 0
        %1156 = vmatpush.bf16.msra.mxu0 0
        %1157 = vmatpush.bf16.msra.mxu0 0
        %1158 = vmatpush.bf16.msra.mxu0 0
        %1159 = vmatpush.bf16.msra.mxu0 0
        %1160 = vmatpush.bf16.msra.mxu0 0
        %1161 = vmatpush.bf16.msra.mxu0 %v1134
        %1162 = vmatmul.bf16.gmra.mxu0 %v1138
        %v1163 = vpop.f32.mrf.mxu0
        %v1164 = vadd.f32 0.0, %v1163
        %v1165 = vpop.f32.mrf.mxu0
        %v1166 = vadd.f32 0.0, %v1165
        %1167 = vdwg.mxu0
        %v1168 = vmul.f32 %v1108, %v1150
        %v1169 = vmul.f32 %v1122, %v1164
        %v1170 = vmul.f32 %v1110, %v1152
        %v1171 = vmul.f32 %v1124, %v1166
        %1173 = vset.pattern.permute.xlu0 0
        %1174 = vperm.xlu0 %1173, %v1068
        %v1175 = vpop.permute.xlu0 %1174
        %1178 = vset.pattern.permute.xlu0 0
        %1179 = vperm.xlu0 %1178, %v1083
        %v1180 = vpop.permute.xlu0 %1179
        %v1182 = vadd.f32 %v1168, %v1175
        %v1183 = vadd.f32 %v1169, %v1175
        %v1184 = vadd.f32 %v1170, %v1180
        %v1185 = vadd.f32 %v1171, %v1180
        %v1186 = vmul.f32 %v607, %v1182
        %v1187 = vmul.f32 %v608, %v1183
        %v1188 = vmul.f32 %v609, %v1184
        %v1189 = vmul.f32 %v610, %v1185
        %v1190 = vpack.c.bf16 %v1188, %v1186
        %v1191 = vpack.c.bf16 %v1189, %v1187
        %1193 = vset.pattern.permute.xlu0 0
        %1194 = vperm.xlu0 %1193, %v532
        %v1195 = vpop.permute.xlu0 %1194
        %v1198 = vsel %vm862, %v529, 0
        %1200 = vmatpush.bf16.msra.mxu0 0
        %1201 = vmatpush.bf16.msra.mxu0 0
        %1202 = vmatpush.bf16.msra.mxu0 0
        %1203 = vmatpush.bf16.msra.mxu0 0
        %1204 = vmatpush.bf16.msra.mxu0 0
        %1205 = vmatpush.bf16.msra.mxu0 0
        %1206 = vmatpush.bf16.msra.mxu0 0
        %1207 = vmatpush.bf16.msra.mxu0 %v1190
        %1208 = vmatmul.bf16.gmra.mxu0 %v1198
        %v1209 = vpop.f32.mrf.mxu0
        %v1210 = vadd.f32 %v1195, %v1209
        %v1211 = vpop.f32.mrf.mxu0
        %1212 = vdwg.mxu0
        %1213 = vmatpush.bf16.msra.mxu0 0
        %1214 = vmatpush.bf16.msra.mxu0 0
        %1215 = vmatpush.bf16.msra.mxu0 0
        %1216 = vmatpush.bf16.msra.mxu0 0
        %1217 = vmatpush.bf16.msra.mxu0 0
        %1218 = vmatpush.bf16.msra.mxu0 0
        %1219 = vmatpush.bf16.msra.mxu0 0
        %1220 = vmatpush.bf16.msra.mxu0 %v1191
        %1221 = vmatmul.bf16.gmra.mxu0 %v1198
        %v1222 = vpop.f32.mrf.mxu0
        %v1223 = vadd.f32 %v1195, %v1222
        %v1224 = vpop.f32.mrf.mxu0
        %1225 = vdwg.mxu0
        %v1226 = vmax.f32 %v1210, 0.0
        %v1227 = vmax.f32 %v1223, 0.0
        %v1228 = vpack.c.bf16 %v1226, %v1226
        %v1229 = vpack.c.bf16 %v1227, %v1227
        %1231 = vset.pattern.permute.xlu0 0
        %1232 = vperm.xlu0 %1231, %v533
        %v1233 = vpop.permute.xlu0 %1232
        %1236 = vset.pattern.permute.xlu0 0
        %1237 = vperm.xlu0 %1236, %v534
        %v1238 = vpop.permute.xlu0 %1237
        %v1242 = vunpack.c.l.b16 %v530
        %v1243 = vunpack.c.l.b16 %v531
        %v1244 = vpack.c.b16 %v1243, %v1242
        %vm1245 = vcmask 64512
        %v1247 = vsel %vm1245, %v1244, 0
        %vm1249 = vcmask 1043456
        %v1251 = vsel %vm1249, %v1228, 0
        %v1254 = vsel %vm1249, %v1229, 0
        %1256 = vmatpush.bf16.msra.mxu0 0
        %1257 = vmatpush.bf16.msra.mxu0 0
        %1258 = vmatpush.bf16.msra.mxu0 0
        %1259 = vmatpush.bf16.msra.mxu0 0
        %1260 = vmatpush.bf16.msra.mxu0 0
        %1261 = vmatpush.bf16.msra.mxu0 0
        %1262 = vmatpush.bf16.msra.mxu0 0
        %1263 = vmatpush.bf16.msra.mxu0 %v1251
        %1264 = vmatmul.bf16.gmra.mxu0 %v1247
        %v1265 = vpop.f32.mrf.mxu0
        %v1266 = vadd.f32 %v1233, %v1265
        %v1267 = vpop.f32.mrf.mxu0
        %v1268 = vadd.f32 %v1238, %v1267
        %1269 = vdwg.mxu0
        %1270 = vmatpush.bf16.msra.mxu0 0
        %1271 = vmatpush.bf16.msra.mxu0 0
        %1272 = vmatpush.bf16.msra.mxu0 0
        %1273 = vmatpush.bf16.msra.mxu0 0
        %1274 = vmatpush.bf16.msra.mxu0 0
        %1275 = vmatpush.bf16.msra.mxu0 0
        %1276 = vmatpush.bf16.msra.mxu0 0
        %1277 = vmatpush.bf16.msra.mxu0 %v1254
        %1278 = vmatmul.bf16.gmra.mxu0 %v1247
        %v1279 = vpop.f32.mrf.mxu0
        %v1280 = vadd.f32 %v1233, %v1279
        %v1281 = vpop.f32.mrf.mxu0
        %v1282 = vadd.f32 %v1238, %v1281
        %1283 = vdwg.mxu0
        %v1284 = vpack.c.bf16 %v1268, %v1266
        %v1285 = vpack.c.bf16 %v1282, %v1280
        %1286 = vmatpush.bf16.msra.mxu0 %v808
        %1287 = vmatpush.bf16.msra.mxu0 %v807
        %1288 = vmatpush.bf16.msra.mxu0 %v806
        %1289 = vmatpush.bf16.msra.mxu0 %v805
        %1290 = vmatpush.bf16.msra.mxu0 %v804
        %1291 = vmatpush.bf16.msra.mxu0 %v803
        %1292 = vmatpush.bf16.msra.mxu0 %v802
        %1293 = vmatpush.bf16.msra.mxu0 %v801
        %1294 = vmatmul.bf16.gmra.mxu0 %v1284
        %v1295 = vpop.f32.mrf.mxu0
        %v1296 = vadd.f32 0.0, %v1295
        %v1297 = vpop.f32.mrf.mxu0
        %v1298 = vadd.f32 0.0, %v1297
        %1299 = vdwg.mxu0
        %1300 = vmatpush.bf16.msra.mxu0 %v816
        %1301 = vmatpush.bf16.msra.mxu0 %v815
        %1302 = vmatpush.bf16.msra.mxu0 %v814
        %1303 = vmatpush.bf16.msra.mxu0 %v813
        %1304 = vmatpush.bf16.msra.mxu0 %v812
        %1305 = vmatpush.bf16.msra.mxu0 %v811
        %1306 = vmatpush.bf16.msra.mxu0 %v810
        %1307 = vmatpush.bf16.msra.mxu0 %v809
        %1308 = vmatmul.bf16.gmra.mxu0 %v1285
        %v1309 = vpop.f32.mrf.mxu0
        %v1310 = vadd.f32 %v1296, %v1309
        %v1311 = vpop.f32.mrf.mxu0
        %v1312 = vadd.f32 %v1298, %v1311
        %1313 = vdwg.mxu0
        %v1314 = vpack.c.bf16 %v1312, %v1310
        %v1317 = vunpack.c.l.b16 %v535
        %v1318 = vunpack.c.l.b16 %v536
        %v1319 = vpack.c.b16 %v1318, %v1317
        %1320 = vrot.lane.b32.xlu0 %v533, 127
        %v1321 = vpop.permute.xlu0 %1320
        %1322 = vrot.lane.b32.xlu0 %v534, 127
        %v1323 = vpop.permute.xlu0 %1322
        %v1327 = vsel %vm862, %v1319, 0
        %1329 = vmatpush.bf16.msra.mxu0 0
        %1330 = vmatpush.bf16.msra.mxu0 0
        %1331 = vmatpush.bf16.msra.mxu0 0
        %1332 = vmatpush.bf16.msra.mxu0 0
        %1333 = vmatpush.bf16.msra.mxu0 0
        %1334 = vmatpush.bf16.msra.mxu0 0
        %1335 = vmatpush.bf16.msra.mxu0 0
        %1336 = vmatpush.bf16.msra.mxu0 %v1314
        %1337 = vmatmul.bf16.gmra.mxu0 %v1327
        %v1338 = vpop.f32.mrf.mxu0
        %v1339 = vadd.f32 %v1321, %v1338
        %v1340 = vpop.f32.mrf.mxu0
        %v1341 = vadd.f32 %v1323, %v1340
        %1342 = vdwg.mxu0
        %v1343 = vxor.u32 %v1339, 2147483648
        %v1344 = vxor.u32 %v1341, 2147483648
        %v1345 = vmul.f32 %v1343, 1.442695
        %v1346 = vpow.pop %v1345
        %v1347 = vmul.f32 %v1344, 1.442695
        %v1348 = vpow.pop %v1347
        %v1349 = vadd.f32 %v1346, 1.0
        %v1350 = vadd.f32 %v1348, 1.0
        %v1351 = vrcp.pop %v1349
        %v1352 = vmul.f32 %v1349, %v1351
        %v1353 = vsub.f32 1.0, %v1352
        %v1354 = vmul.f32 %v1351, %v1353
        %v1355 = vadd.f32 %v1351, %v1354
        %vm1356 = vweird.f32 %v1349
        %vm1357 = vweird.f32 %v1351
        %vm1358 = vmor %vm1356, %vm1357
        %v1359 = vsel %vm1358, %v1351, %v1355
        %v1360 = vand.u32 2147483647, %v1349
        %vm1361 = vcmp.eq.f32.partialorder %v1360, 8.507059e+37
        %v1362 = vand.u32 %v1349, 2147483648
        %v1363 = vor.u32 1.1754944e-38, %v1362
        %v1364 = vsel %vm1361, %v1363, %v1359
        %v1365 = vmul.f32 1.0, %v1364
        %v1366 = vrcp.pop %v1350
        %v1367 = vmul.f32 %v1350, %v1366
        %v1368 = vsub.f32 1.0, %v1367
        %v1369 = vmul.f32 %v1366, %v1368
        %v1370 = vadd.f32 %v1366, %v1369
        %vm1371 = vweird.f32 %v1350
        %vm1372 = vweird.f32 %v1366
        %vm1373 = vmor %vm1371, %vm1372
        %v1374 = vsel %vm1373, %v1366, %v1370
        %v1375 = vand.u32 2147483647, %v1350
        %vm1376 = vcmp.eq.f32.partialorder %v1375, 8.507059e+37
        %v1377 = vand.u32 %v1350, 2147483648
        %v1378 = vor.u32 1.1754944e-38, %v1377
        %v1379 = vsel %vm1376, %v1378, %v1374
        %v1380 = vmul.f32 1.0, %v1379
        %v1381 = vmul.f32 %v1365, %v1310
        %v1382 = vmul.f32 %v1380, %v1312
        %v1383 = vpack.c.bf16 %v1382, %v1381
        %v1386 = vunpack.c.l.b16 %v537
        %v1387 = vunpack.c.l.b16 %v538
        %v1388 = vpack.c.b16 %v1387, %v1386
        %1389 = vrot.lane.b32.xlu0 %v533, 126
        %v1390 = vpop.permute.xlu0 %1389
        %1391 = vrot.lane.b32.xlu0 %v534, 126
        %v1392 = vpop.permute.xlu0 %1391
        %v1396 = vsel %vm862, %v1388, 0
        %1398 = vmatpush.bf16.msra.mxu0 0
        %1399 = vmatpush.bf16.msra.mxu0 0
        %1400 = vmatpush.bf16.msra.mxu0 0
        %1401 = vmatpush.bf16.msra.mxu0 0
        %1402 = vmatpush.bf16.msra.mxu0 0
        %1403 = vmatpush.bf16.msra.mxu0 0
        %1404 = vmatpush.bf16.msra.mxu0 0
        %1405 = vmatpush.bf16.msra.mxu0 %v1383
        %1406 = vmatmul.bf16.gmra.mxu0 %v1396
        %v1407 = vpop.f32.mrf.mxu0
        %v1408 = vadd.f32 %v1390, %v1407
        %v1409 = vpop.f32.mrf.mxu0
        %v1410 = vadd.f32 %v1392, %v1409
        %1411 = vdwg.mxu0
        %v1412 = vxor.u32 %v1408, 2147483648
        %v1413 = vxor.u32 %v1410, 2147483648
        %v1414 = vmul.f32 %v1412, 1.442695
        %v1415 = vpow.pop %v1414
        %v1416 = vmul.f32 %v1413, 1.442695
        %v1417 = vpow.pop %v1416
        %v1418 = vadd.f32 %v1415, 1.0
        %v1419 = vadd.f32 %v1417, 1.0
        %v1420 = vrcp.pop %v1418
        %v1421 = vmul.f32 %v1418, %v1420
        %v1422 = vsub.f32 1.0, %v1421
        %v1423 = vmul.f32 %v1420, %v1422
        %v1424 = vadd.f32 %v1420, %v1423
        %vm1425 = vweird.f32 %v1418
        %vm1426 = vweird.f32 %v1420
        %vm1427 = vmor %vm1425, %vm1426
        %v1428 = vsel %vm1427, %v1420, %v1424
        %v1429 = vand.u32 2147483647, %v1418
        %vm1430 = vcmp.eq.f32.partialorder %v1429, 8.507059e+37
        %v1431 = vand.u32 %v1418, 2147483648
        %v1432 = vor.u32 1.1754944e-38, %v1431
        %v1433 = vsel %vm1430, %v1432, %v1428
        %v1434 = vmul.f32 1.0, %v1433
        %v1435 = vrcp.pop %v1419
        %v1436 = vmul.f32 %v1419, %v1435
        %v1437 = vsub.f32 1.0, %v1436
        %v1438 = vmul.f32 %v1435, %v1437
        %v1439 = vadd.f32 %v1435, %v1438
        %vm1440 = vweird.f32 %v1419
        %vm1441 = vweird.f32 %v1435
        %vm1442 = vmor %vm1440, %vm1441
        %v1443 = vsel %vm1442, %v1435, %v1439
        %v1444 = vand.u32 2147483647, %v1419
        %vm1445 = vcmp.eq.f32.partialorder %v1444, 8.507059e+37
        %v1446 = vand.u32 %v1419, 2147483648
        %v1447 = vor.u32 1.1754944e-38, %v1446
        %v1448 = vsel %vm1445, %v1447, %v1443
        %v1449 = vmul.f32 1.0, %v1448
        %v1450 = vmul.f32 %v1365, %v1434
        %v1451 = vmul.f32 %v1380, %v1449
        %1453 = vset.pattern.permute.xlu0 0
        %1454 = vperm.xlu0 %1453, %v1450
        %v1455 = vpop.permute.xlu0 %1454
        %1458 = vset.pattern.permute.xlu0 0
        %1459 = vperm.xlu0 %1458, %v1451
        %v1460 = vpop.permute.xlu0 %1459
        %v1462 = vmul.f32 %v1266, %v1455
        %v1463 = vmul.f32 %v1280, %v1455
        %v1464 = vmul.f32 %v1268, %v1460
        %v1465 = vmul.f32 %v1282, %v1460
        %1466 = vst [vmem:[%s514] sm:$0xff] %v1462
        %1467 = vst [vmem:[%s514 + $0x8] sm:$0xff] %v1463
        %1468 = vst [vmem:[%s514 + $0x10] sm:$0xff] %v1464
        %1469 = vst [vmem:[%s514 + $0x18] sm:$0xff] %v1465
        %s1470 = sand.u32 %s379, 1
        %s1471 = scalar_lea.sflag [#allocation3], %s1470
        %s1472 = sand.u32 %s379, 1
        %s1473 = smul.addr %s1472, 32
        %s1474 = scalar_lea.vmem [#allocation2], %s1473
        // Predicated region
        $region85: #{tpu_custom_call.1} parent=83 // pred_check
          %p1475 = pneg %p389
        $region86: #{tpu_custom_call.1} parent=83 // pred_check_branch
          %1477 = sbr.rel (%p1475) target = $region88
        $region87: #{tpu_custom_call.1} parent=83 // pred_region
          %1479 = vsyncadd %s1471, 0
          %s1480 = smul.addr %s30, 4
          %s1481 = smul.addr %s1480, 8
          %s1482 = scalar_lea.hbm %s16, %s1481
          %s1483 = sshll.u32 %s1474, 4
          %s1484 = int_to_ptr.vmem [resolvable:$true] %s1483
          %s1485 = sshll.u32 %s1482, 4
          %s1486 = int_to_ptr.hbm [resolvable:$true] %s1485
          %1491 = dma.vmem_to_hbm [thread:$0]  %s1484, 512, %s1486, %s1471, 256, 256, 16
        $region88: #{tpu_custom_call.1} parent=83 // pred_fallthru
          _
      $region84: #{tpu_custom_call.1} parent=5 // pred_fallthru
        _
      %p1492 = scmp.le.s32.totalorder 2, %s25
      // Predicated region
      $region89: #{tpu_custom_call.1} parent=5 // pred_check
        %p1493 = pneg %p1492
      $region90: #{tpu_custom_call.1} parent=5 // pred_check_branch
        %1495 = sbr.rel (%p1493) target = $region92
      $region91: #{tpu_custom_call.1} parent=5 // pred_region
        %s1496 = ssub.s32 %s25, 2
        // Predicated region
        $region93: #{tpu_custom_call.1} parent=91 // pred_check
          %p1497 = pneg %p395
        $region94: #{tpu_custom_call.1} parent=91 // pred_check_branch
          %1499 = sbr.rel (%p1497) target = $region96
        $region95: #{tpu_custom_call.1} parent=91 // pred_region
          %s1500 = sand.u32 %s380, 1
          %s1501 = scalar_lea.sflag [#allocation3], %s1500
          %s1502 = sand.u32 %s380, 1
          %s1503 = smul.addr %s1502, 32
          %s1504 = scalar_lea.vmem [#allocation2], %s1503
          %1506 = dma.done %s1501, 512
        $region96: #{tpu_custom_call.1} parent=91 // pred_fallthru
          _
      $region92: #{tpu_custom_call.1} parent=5 // pred_fallthru
        _
    $region6: #{tpu_custom_call.1} parent=1 // loop_footer
      %s29 = sadd.s32 1, %s25
    $region7: #{tpu_custom_call.1} parent=1 // loop_footer_branch
      %24 = sbr.rel target = $region3
    $region8: #{tpu_custom_call.1} parent=1 // loop_exit
      _
    %1507 = vsyncpa [#allocation3], 1
    %s1508 = scalar_lea.sflag [#allocation3], 1
    %1509 = vsyncpa %s1508, 1

// kernel: tpu_custom_call.1
$region0: #{tpu_custom_call.1}
  #allocation0 [shape = 'u32[]', space=smem, size = 0x4, offset = 0x4, fixed_abs, tag = 'smem constant byte address 0x4 - core index']
  #allocation1 [shape = 'u32[72,128]{1,0:T(1,128)}', space=vmem, size = 0x9000, scoped, tag = 'internal scratch']
  %s0 = inlined_call_operand.vmem [shape: f32[2,16,256], index: 0, kind: input, shape index: {}]
  %s1 = inlined_call_operand.vmem [shape: bf16[2,16], index: 1, kind: input, shape index: {}]
  %s2 = inlined_call_operand.vmem [shape: f32[2,2], index: 2, kind: input, shape index: {}]
  %s3 = inlined_call_operand.vmem [shape: bf16[16,2], index: 3, kind: input, shape index: {}]
  %s4 = inlined_call_operand.vmem [shape: bf16[16,2], index: 4, kind: input, shape index: {}]
  %s5 = inlined_call_operand.vmem [shape: bf16[16,16], index: 5, kind: input, shape index: {}]
  %s6 = inlined_call_operand.vmem [shape: bf16[8,16], index: 6, kind: input, shape index: {}]
  %s7 = inlined_call_operand.vmem [shape: f32[8,1], index: 7, kind: input, shape index: {}]
  %s8 = inlined_call_operand.vmem [shape: bf16[16,8], index: 8, kind: input, shape index: {}]
  %s9 = inlined_call_operand.vmem [shape: f32[16,3], index: 9, kind: input, shape index: {}]
  %s10 = inlined_call_operand.vmem [shape: bf16[16,16], index: 10, kind: input, shape index: {}]
  %s11 = inlined_call_operand.vmem [shape: bf16[16,16], index: 11, kind: input, shape index: {}]
  %s12 = inlined_call_operand.vmem [shape: bf16[256,32], index: 12, kind: input, shape index: {}]
  %s13 = inlined_call_operand.vmem [shape: bf16[256,1], index: 13, kind: input, shape index: {}]
  %s14 = inlined_call_operand.vmem [shape: bf16[16,256], index: 14, kind: input, shape index: {}]
  %s15 = inlined_call_operand.vmem [shape: bf16[16,256], index: 15, kind: input, shape index: {}]
  %s16 = inlined_call_operand.hbm [shape: f32[2,16,256], index: 16, kind: output, shape index: {}]
  %s17 = sld [smem:[#allocation0]]
  $region97: #{tpu_custom_call.1} parent=0
    _
  %s19 = ssub.s32 1, %s17
  %s20 = scalar_select 0, %s19, %s17
  $region1: #{tpu_custom_call.1} parent=0
    #allocation2 [shape = 'u8[32768]{0}', space=vmem, size = 0x8000, scoped, tag = 'output window, operand 0']
    #allocation3 [shape = 's32[2]{0}', space=sflag, size = 0x8, scoped, tag = 'scoped memory for tpu_custom_call.1']
    %21 = vsyncpa [#allocation3], 0
    %s22 = scalar_lea.sflag [#allocation3], 1
    %23 = vsyncpa %s22, 0
    loop: start=0, step=1, limit=4
    $region2: #{tpu_custom_call.1} parent=1 // loop_pre_header
      _
    $region3: #{tpu_custom_call.1} parent=1 // loop_header
      %s25 = sphi 0, %s29
      %p26 = scmp.ge.s32.totalorder %s25, 4
      %s35 = sphi 0, %s37
      %s38 = sphi 0, %s35
      %s39 = sphi 0, %s38
      %s55 = sphi 0, %s39
      %s59 = sphi 0, %s59
      %s61 = sphi 0, %s59
      %s62 = sphi 0, %s61
      %s76 = sphi 0, %s62
      %s80 = sphi 0, %s80
      %s82 = sphi 0, %s80
      %s83 = sphi 0, %s82
      %s97 = sphi 0, %s83
      %s101 = sphi 0, %s101
      %s103 = sphi 0, %s101
      %s104 = sphi 0, %s103
      %s118 = sphi 0, %s104
      %s122 = sphi 0, %s122
      %s124 = sphi 0, %s122
      %s125 = sphi 0, %s124
      %s139 = sphi 0, %s125
      %s143 = sphi 0, %s143
      %s145 = sphi 0, %s143
      %s146 = sphi 0, %s145
      %s160 = sphi 0, %s146
      %s164 = sphi 0, %s164
      %s166 = sphi 0, %s164
      %s167 = sphi 0, %s166
      %s181 = sphi 0, %s167
      %s185 = sphi 0, %s185
      %s187 = sphi 0, %s185
      %s188 = sphi 0, %s187
      %s202 = sphi 0, %s188
      %s206 = sphi 0, %s206
      %s208 = sphi 0, %s206
      %s209 = sphi 0, %s208
      %s223 = sphi 0, %s209
      %s227 = sphi 0, %s227
      %s229 = sphi 0, %s227
      %s230 = sphi 0, %s229
      %s244 = sphi 0, %s230
      %s248 = sphi 0, %s248
      %s250 = sphi 0, %s248
      %s251 = sphi 0, %s250
      %s265 = sphi 0, %s251
      %s269 = sphi 0, %s269
      %s271 = sphi 0, %s269
      %s272 = sphi 0, %s271
      %s286 = sphi 0, %s272
      %s290 = sphi 0, %s290
      %s292 = sphi 0, %s290
      %s293 = sphi 0, %s292
      %s307 = sphi 0, %s293
      %s311 = sphi 0, %s311
      %s313 = sphi 0, %s311
      %s314 = sphi 0, %s313
      %s328 = sphi 0, %s314
      %s332 = sphi 0, %s332
      %s334 = sphi 0, %s332
      %s335 = sphi 0, %s334
      %s349 = sphi 0, %s335
      %s353 = sphi 0, %s353
      %s355 = sphi 0, %s353
      %s356 = sphi 0, %s355
      %s370 = sphi 0, %s356
      %s376 = sphi 0, %s378
      %s379 = sphi 0, %s376
      %s380 = sphi 0, %s379
      %s396 = sphi 0, %s380
    $region4: #{tpu_custom_call.1} parent=1 // loop_header_branch
      %28 = sbr.rel (%p26) target = $region8
    $region5: #{tpu_custom_call.1} parent=1 // loop_body
      %s30 = ssub.s32 %s25, 1
      %s31 = ssub.s32 %s25, 2
      %s32 = sadd.s32 %s25, 1
      %s33 = ssub.s32 %s25, %s32
      %p34 = scmp.eq.s32.totalorder %s33, 0
      %s36 = sadd.s32 %s35, 1
      %s37 = scalar_select %p34, %s35, %s36
      %p40 = pneg %p34
      %p41 = scmp.eq.s32.totalorder %s25, 1
      %p42 = por %p40, %p41
      %p43 = scmp.ne.s32.totalorder %s35, %s38
      %p44 = scmp.eq.s32.totalorder %s25, 0
      %p45 = por %p43, %p44
      %p46 = scmp.ne.s32.totalorder %s35, %s38
      %p47 = scmp.eq.s32.totalorder %s30, 1
      %p48 = por %p46, %p47
      %p49 = scmp.ne.s32.totalorder %s38, %s39
      %p50 = scmp.eq.s32.totalorder %s30, 0
      %p51 = por %p49, %p50
      %p52 = scmp.ne.s32.totalorder %s38, %s39
      %p53 = scmp.eq.s32.totalorder %s31, 1
      %p54 = por %p52, %p53
      %p56 = scmp.ne.s32.totalorder %s39, %s55
      %p57 = scmp.eq.s32.totalorder %s31, 0
      %p58 = por %p56, %p57
      %s60 = sadd.s32 %s59, 1
      %p63 = scmp.eq.s32.totalorder %s25, 1
      %p64 = scmp.ne.s32.totalorder %s59, %s61
      %p65 = scmp.eq.s32.totalorder %s25, 0
      %p66 = por %p64, %p65
      %p67 = scmp.ne.s32.totalorder %s59, %s61
      %p68 = scmp.eq.s32.totalorder %s30, 1
      %p69 = por %p67, %p68
      %p70 = scmp.ne.s32.totalorder %s61, %s62
      %p71 = scmp.eq.s32.totalorder %s30, 0
      %p72 = por %p70, %p71
      %p73 = scmp.ne.s32.totalorder %s61, %s62
      %p74 = scmp.eq.s32.totalorder %s31, 1
      %p75 = por %p73, %p74
      %p77 = scmp.ne.s32.totalorder %s62, %s76
      %p78 = scmp.eq.s32.totalorder %s31, 0
      %p79 = por %p77, %p78
      %s81 = sadd.s32 %s80, 1
      %p84 = scmp.eq.s32.totalorder %s25, 1
      %p85 = scmp.ne.s32.totalorder %s80, %s82
      %p86 = scmp.eq.s32.totalorder %s25, 0
      %p87 = por %p85, %p86
      %p88 = scmp.ne.s32.totalorder %s80, %s82
      %p89 = scmp.eq.s32.totalorder %s30, 1
      %p90 = por %p88, %p89
      %p91 = scmp.ne.s32.totalorder %s82, %s83
      %p92 = scmp.eq.s32.totalorder %s30, 0
      %p93 = por %p91, %p92
      %p94 = scmp.ne.s32.totalorder %s82, %s83
      %p95 = scmp.eq.s32.totalorder %s31, 1
      %p96 = por %p94, %p95
      %p98 = scmp.ne.s32.totalorder %s83, %s97
      %p99 = scmp.eq.s32.totalorder %s31, 0
      %p100 = por %p98, %p99
      %s102 = sadd.s32 %s101, 1
      %p105 = scmp.eq.s32.totalorder %s25, 1
      %p106 = scmp.ne.s32.totalorder %s101, %s103
      %p107 = scmp.eq.s32.totalorder %s25, 0
      %p108 = por %p106, %p107
      %p109 = scmp.ne.s32.totalorder %s101, %s103
      %p110 = scmp.eq.s32.totalorder %s30, 1
      %p111 = por %p109, %p110
      %p112 = scmp.ne.s32.totalorder %s103, %s104
      %p113 = scmp.eq.s32.totalorder %s30, 0
      %p114 = por %p112, %p113
      %p115 = scmp.ne.s32.totalorder %s103, %s104
      %p116 = scmp.eq.s32.totalorder %s31, 1
      %p117 = por %p115, %p116
      %p119 = scmp.ne.s32.totalorder %s104, %s118
      %p120 = scmp.eq.s32.totalorder %s31, 0
      %p121 = por %p119, %p120
      %s123 = sadd.s32 %s122, 1
      %p126 = scmp.eq.s32.totalorder %s25, 1
      %p127 = scmp.ne.s32.totalorder %s122, %s124
      %p128 = scmp.eq.s32.totalorder %s25, 0
      %p129 = por %p127, %p128
      %p130 = scmp.ne.s32.totalorder %s122, %s124
      %p131 = scmp.eq.s32.totalorder %s30, 1
      %p132 = por %p130, %p131
      %p133 = scmp.ne.s32.totalorder %s124, %s125
      %p134 = scmp.eq.s32.totalorder %s30, 0
      %p135 = por %p133, %p134
      %p136 = scmp.ne.s32.totalorder %s124, %s125
      %p137 = scmp.eq.s32.totalorder %s31, 1
      %p138 = por %p136, %p137
      %p140 = scmp.ne.s32.totalorder %s125, %s139
      %p141 = scmp.eq.s32.totalorder %s31, 0
      %p142 = por %p140, %p141
      %s144 = sadd.s32 %s143, 1
      %p147 = scmp.eq.s32.totalorder %s25, 1
      %p148 = scmp.ne.s32.totalorder %s143, %s145
      %p149 = scmp.eq.s32.totalorder %s25, 0
      %p150 = por %p148, %p149
      %p151 = scmp.ne.s32.totalorder %s143, %s145
      %p152 = scmp.eq.s32.totalorder %s30, 1
      %p153 = por %p151, %p152
      %p154 = scmp.ne.s32.totalorder %s145, %s146
      %p155 = scmp.eq.s32.totalorder %s30, 0
      %p156 = por %p154, %p155
      %p157 = scmp.ne.s32.totalorder %s145, %s146
      %p158 = scmp.eq.s32.totalorder %s31, 1
      %p159 = por %p157, %p158
      %p161 = scmp.ne.s32.totalorder %s146, %s160
      %p162 = scmp.eq.s32.totalorder %s31, 0
      %p163 = por %p161, %p162
      %s165 = sadd.s32 %s164, 1
      %p168 = scmp.eq.s32.totalorder %s25, 1
      %p169 = scmp.ne.s32.totalorder %s164, %s166
      %p170 = scmp.eq.s32.totalorder %s25, 0
      %p171 = por %p169, %p170
      %p172 = scmp.ne.s32.totalorder %s164, %s166
      %p173 = scmp.eq.s32.totalorder %s30, 1
      %p174 = por %p172, %p173
      %p175 = scmp.ne.s32.totalorder %s166, %s167
      %p176 = scmp.eq.s32.totalorder %s30, 0
      %p177 = por %p175, %p176
      %p178 = scmp.ne.s32.totalorder %s166, %s167
      %p179 = scmp.eq.s32.totalorder %s31, 1
      %p180 = por %p178, %p179
      %p182 = scmp.ne.s32.totalorder %s167, %s181
      %p183 = scmp.eq.s32.totalorder %s31, 0
      %p184 = por %p182, %p183
      %s186 = sadd.s32 %s185, 1
      %p189 = scmp.eq.s32.totalorder %s25, 1
      %p190 = scmp.ne.s32.totalorder %s185, %s187
      %p191 = scmp.eq.s32.totalorder %s25, 0
      %p192 = por %p190, %p191
      %p193 = scmp.ne.s32.totalorder %s185, %s187
      %p194 = scmp.eq.s32.totalorder %s30, 1
      %p195 = por %p193, %p194
      %p196 = scmp.ne.s32.totalorder %s187, %s188
      %p197 = scmp.eq.s32.totalorder %s30, 0
      %p198 = por %p196, %p197
      %p199 = scmp.ne.s32.totalorder %s187, %s188
      %p200 = scmp.eq.s32.totalorder %s31, 1
      %p201 = por %p199, %p200
      %p203 = scmp.ne.s32.totalorder %s188, %s202
      %p204 = scmp.eq.s32.totalorder %s31, 0
      %p205 = por %p203, %p204
      %s207 = sadd.s32 %s206, 1
      %p210 = scmp.eq.s32.totalorder %s25, 1
      %p211 = scmp.ne.s32.totalorder %s206, %s208
      %p212 = scmp.eq.s32.totalorder %s25, 0
      %p213 = por %p211, %p212
      %p214 = scmp.ne.s32.totalorder %s206, %s208
      %p215 = scmp.eq.s32.totalorder %s30, 1
      %p216 = por %p214, %p215
      %p217 = scmp.ne.s32.totalorder %s208, %s209
      %p218 = scmp.eq.s32.totalorder %s30, 0
      %p219 = por %p217, %p218
      %p220 = scmp.ne.s32.totalorder %s208, %s209
      %p221 = scmp.eq.s32.totalorder %s31, 1
      %p222 = por %p220, %p221
      %p224 = scmp.ne.s32.totalorder %s209, %s223
      %p225 = scmp.eq.s32.totalorder %s31, 0
      %p226 = por %p224, %p225
      %s228 = sadd.s32 %s227, 1
      %p231 = scmp.eq.s32.totalorder %s25, 1
      %p232 = scmp.ne.s32.totalorder %s227, %s229
      %p233 = scmp.eq.s32.totalorder %s25, 0
      %p234 = por %p232, %p233
      %p235 = scmp.ne.s32.totalorder %s227, %s229
      %p236 = scmp.eq.s32.totalorder %s30, 1
      %p237 = por %p235, %p236
      %p238 = scmp.ne.s32.totalorder %s229, %s230
      %p239 = scmp.eq.s32.totalorder %s30, 0
      %p240 = por %p238, %p239
      %p241 = scmp.ne.s32.totalorder %s229, %s230
      %p242 = scmp.eq.s32.totalorder %s31, 1
      %p243 = por %p241, %p242
      %p245 = scmp.ne.s32.totalorder %s230, %s244
      %p246 = scmp.eq.s32.totalorder %s31, 0
      %p247 = por %p245, %p246
      %s249 = sadd.s32 %s248, 1
      %p252 = scmp.eq.s32.totalorder %s25, 1
      %p253 = scmp.ne.s32.totalorder %s248, %s250
      %p254 = scmp.eq.s32.totalorder %s25, 0
      %p255 = por %p253, %p254
      %p256 = scmp.ne.s32.totalorder %s248, %s250
      %p257 = scmp.eq.s32.totalorder %s30, 1
      %p258 = por %p256, %p257
      %p259 = scmp.ne.s32.totalorder %s250, %s251
      %p260 = scmp.eq.s32.totalorder %s30, 0
      %p261 = por %p259, %p260
      %p262 = scmp.ne.s32.totalorder %s250, %s251
      %p263 = scmp.eq.s32.totalorder %s31, 1
      %p264 = por %p262, %p263
      %p266 = scmp.ne.s32.totalorder %s251, %s265
      %p267 = scmp.eq.s32.totalorder %s31, 0
      %p268 = por %p266, %p267
      %s270 = sadd.s32 %s269, 1
      %p273 = scmp.eq.s32.totalorder %s25, 1
      %p274 = scmp.ne.s32.totalorder %s269, %s271
      %p275 = scmp.eq.s32.totalorder %s25, 0
      %p276 = por %p274, %p275
      %p277 = scmp.ne.s32.totalorder %s269, %s271
      %p278 = scmp.eq.s32.totalorder %s30, 1
      %p279 = por %p277, %p278
      %p280 = scmp.ne.s32.totalorder %s271, %s272
      %p281 = scmp.eq.s32.totalorder %s30, 0
      %p282 = por %p280, %p281
      %p283 = scmp.ne.s32.totalorder %s271, %s272
      %p284 = scmp.eq.s32.totalorder %s31, 1
      %p285 = por %p283, %p284
      %p287 = scmp.ne.s32.totalorder %s272, %s286
      %p288 = scmp.eq.s32.totalorder %s31, 0
      %p289 = por %p287, %p288
      %s291 = sadd.s32 %s290, 1
      %p294 = scmp.eq.s32.totalorder %s25, 1
      %p295 = scmp.ne.s32.totalorder %s290, %s292
      %p296 = scmp.eq.s32.totalorder %s25, 0
      %p297 = por %p295, %p296
      %p298 = scmp.ne.s32.totalorder %s290, %s292
      %p299 = scmp.eq.s32.totalorder %s30, 1
      %p300 = por %p298, %p299
      %p301 = scmp.ne.s32.totalorder %s292, %s293
      %p302 = scmp.eq.s32.totalorder %s30, 0
      %p303 = por %p301, %p302
      %p304 = scmp.ne.s32.totalorder %s292, %s293
      %p305 = scmp.eq.s32.totalorder %s31, 1
      %p306 = por %p304, %p305
      %p308 = scmp.ne.s32.totalorder %s293, %s307
      %p309 = scmp.eq.s32.totalorder %s31, 0
      %p310 = por %p308, %p309
      %s312 = sadd.s32 %s311, 1
      %p315 = scmp.eq.s32.totalorder %s25, 1
      %p316 = scmp.ne.s32.totalorder %s311, %s313
      %p317 = scmp.eq.s32.totalorder %s25, 0
      %p318 = por %p316, %p317
      %p319 = scmp.ne.s32.totalorder %s311, %s313
      %p320 = scmp.eq.s32.totalorder %s30, 1
      %p321 = por %p319, %p320
      %p322 = scmp.ne.s32.totalorder %s313, %s314
      %p323 = scmp.eq.s32.totalorder %s30, 0
      %p324 = por %p322, %p323
      %p325 = scmp.ne.s32.totalorder %s313, %s314
      %p326 = scmp.eq.s32.totalorder %s31, 1
      %p327 = por %p325, %p326
      %p329 = scmp.ne.s32.totalorder %s314, %s328
      %p330 = scmp.eq.s32.totalorder %s31, 0
      %p331 = por %p329, %p330
      %s333 = sadd.s32 %s332, 1
      %p336 = scmp.eq.s32.totalorder %s25, 1
      %p337 = scmp.ne.s32.totalorder %s332, %s334
      %p338 = scmp.eq.s32.totalorder %s25, 0
      %p339 = por %p337, %p338
      %p340 = scmp.ne.s32.totalorder %s332, %s334
      %p341 = scmp.eq.s32.totalorder %s30, 1
      %p342 = por %p340, %p341
      %p343 = scmp.ne.s32.totalorder %s334, %s335
      %p344 = scmp.eq.s32.totalorder %s30, 0
      %p345 = por %p343, %p344
      %p346 = scmp.ne.s32.totalorder %s334, %s335
      %p347 = scmp.eq.s32.totalorder %s31, 1
      %p348 = por %p346, %p347
      %p350 = scmp.ne.s32.totalorder %s335, %s349
      %p351 = scmp.eq.s32.totalorder %s31, 0
      %p352 = por %p350, %p351
      %s354 = sadd.s32 %s353, 1
      %p357 = scmp.eq.s32.totalorder %s25, 1
      %p358 = scmp.ne.s32.totalorder %s353, %s355
      %p359 = scmp.eq.s32.totalorder %s25, 0
      %p360 = por %p358, %p359
      %p361 = scmp.ne.s32.totalorder %s353, %s355
      %p362 = scmp.eq.s32.totalorder %s30, 1
      %p363 = por %p361, %p362
      %p364 = scmp.ne.s32.totalorder %s355, %s356
      %p365 = scmp.eq.s32.totalorder %s30, 0
      %p366 = por %p364, %p365
      %p367 = scmp.ne.s32.totalorder %s355, %s356
      %p368 = scmp.eq.s32.totalorder %s31, 1
      %p369 = por %p367, %p368
      %p371 = scmp.ne.s32.totalorder %s356, %s370
      %p372 = scmp.eq.s32.totalorder %s31, 0
      %p373 = por %p371, %p372
      %s374 = ssub.s32 %s25, %s32
      %p375 = scmp.eq.s32.totalorder %s374, 0
      %s377 = sadd.s32 %s376, 1
      %s378 = scalar_select %p375, %s376, %s377
      %p381 = pneg %p375
      %p382 = scmp.eq.s32.totalorder %s25, 1
      %p383 = por %p381, %p382
      %p384 = scmp.ne.s32.totalorder %s376, %s379
      %p385 = scmp.eq.s32.totalorder %s25, 0
      %p386 = por %p384, %p385
      %p387 = scmp.ne.s32.totalorder %s376, %s379
      %p388 = scmp.eq.s32.totalorder %s30, 1
      %p389 = por %p387, %p388
      %p390 = scmp.ne.s32.totalorder %s379, %s380
      %p391 = scmp.eq.s32.totalorder %s30, 0
      %p392 = por %p390, %p391
      %p393 = scmp.ne.s32.totalorder %s379, %s380
      %p394 = scmp.eq.s32.totalorder %s31, 1
      %p395 = por %p393, %p394
      %p397 = scmp.ne.s32.totalorder %s380, %s396
      %p398 = scmp.eq.s32.totalorder %s31, 0
      %p399 = por %p397, %p398
      %p400 = scmp.le.s32.totalorder 1, %s25
      %p401 = scmp.lt.s32.totalorder %s25, 3
      %p402 = pnand %p400, %p401
      %p403 = pneg %p402
      // Predicated region
      $region9: #{tpu_custom_call.1} parent=5 // pred_check
        _
      $region10: #{tpu_custom_call.1} parent=5 // pred_check_branch
        %405 = sbr.rel (%p402) target = $region12
      $region11: #{tpu_custom_call.1} parent=5 // pred_region
        %s406 = ssub.s32 %s25, 1
        // Predicated region
        $region13: #{tpu_custom_call.1} parent=11 // pred_check
          %p407 = pneg %p72
        $region14: #{tpu_custom_call.1} parent=11 // pred_check_branch
          %409 = sbr.rel (%p407) target = $region16
        $region15: #{tpu_custom_call.1} parent=11 // pred_region
          _
        $region16: #{tpu_custom_call.1} parent=11 // pred_fallthru
          _
        // Predicated region
        $region17: #{tpu_custom_call.1} parent=11 // pred_check
          %p410 = pneg %p93
        $region18: #{tpu_custom_call.1} parent=11 // pred_check_branch
          %412 = sbr.rel (%p410) target = $region20
        $region19: #{tpu_custom_call.1} parent=11 // pred_region
          _
        $region20: #{tpu_custom_call.1} parent=11 // pred_fallthru
          _
        // Predicated region
        $region21: #{tpu_custom_call.1} parent=11 // pred_check
          %p413 = pneg %p114
        $region22: #{tpu_custom_call.1} parent=11 // pred_check_branch
          %415 = sbr.rel (%p413) target = $region24
        $region23: #{tpu_custom_call.1} parent=11 // pred_region
          _
        $region24: #{tpu_custom_call.1} parent=11 // pred_fallthru
          _
        // Predicated region
        $region25: #{tpu_custom_call.1} parent=11 // pred_check
          %p416 = pneg %p135
        $region26: #{tpu_custom_call.1} parent=11 // pred_check_branch
          %418 = sbr.rel (%p416) target = $region28
        $region27: #{tpu_custom_call.1} parent=11 // pred_region
          _
        $region28: #{tpu_custom_call.1} parent=11 // pred_fallthru
          _
        // Predicated region
        $region29: #{tpu_custom_call.1} parent=11 // pred_check
          %p419 = pneg %p156
        $region30: #{tpu_custom_call.1} parent=11 // pred_check_branch
          %421 = sbr.rel (%p419) target = $region32
        $region31: #{tpu_custom_call.1} parent=11 // pred_region
          _
        $region32: #{tpu_custom_call.1} parent=11 // pred_fallthru
          _
        // Predicated region
        $region33: #{tpu_custom_call.1} parent=11 // pred_check
          %p422 = pneg %p177
        $region34: #{tpu_custom_call.1} parent=11 // pred_check_branch
          %424 = sbr.rel (%p422) target = $region36
        $region35: #{tpu_custom_call.1} parent=11 // pred_region
          _
        $region36: #{tpu_custom_call.1} parent=11 // pred_fallthru
          _
        // Predicated region
        $region37: #{tpu_custom_call.1} parent=11 // pred_check
          %p425 = pneg %p198
        $region38: #{tpu_custom_call.1} parent=11 // pred_check_branch
          %427 = sbr.rel (%p425) target = $region40
        $region39: #{tpu_custom_call.1} parent=11 // pred_region
          _
        $region40: #{tpu_custom_call.1} parent=11 // pred_fallthru
          _
        // Predicated region
        $region41: #{tpu_custom_call.1} parent=11 // pred_check
          %p428 = pneg %p219
        $region42: #{tpu_custom_call.1} parent=11 // pred_check_branch
          %430 = sbr.rel (%p428) target = $region44
        $region43: #{tpu_custom_call.1} parent=11 // pred_region
          _
        $region44: #{tpu_custom_call.1} parent=11 // pred_fallthru
          _
        // Predicated region
        $region45: #{tpu_custom_call.1} parent=11 // pred_check
          %p431 = pneg %p240
        $region46: #{tpu_custom_call.1} parent=11 // pred_check_branch
          %433 = sbr.rel (%p431) target = $region48
        $region47: #{tpu_custom_call.1} parent=11 // pred_region
          _
        $region48: #{tpu_custom_call.1} parent=11 // pred_fallthru
          _
        // Predicated region
        $region49: #{tpu_custom_call.1} parent=11 // pred_check
          %p434 = pneg %p261
        $region50: #{tpu_custom_call.1} parent=11 // pred_check_branch
          %436 = sbr.rel (%p434) target = $region52
        $region51: #{tpu_custom_call.1} parent=11 // pred_region
          _
        $region52: #{tpu_custom_call.1} parent=11 // pred_fallthru
          _
        // Predicated region
        $region53: #{tpu_custom_call.1} parent=11 // pred_check
          %p437 = pneg %p282
        $region54: #{tpu_custom_call.1} parent=11 // pred_check_branch
          %439 = sbr.rel (%p437) target = $region56
        $region55: #{tpu_custom_call.1} parent=11 // pred_region
          _
        $region56: #{tpu_custom_call.1} parent=11 // pred_fallthru
          _
        // Predicated region
        $region57: #{tpu_custom_call.1} parent=11 // pred_check
          %p440 = pneg %p303
        $region58: #{tpu_custom_call.1} parent=11 // pred_check_branch
          %442 = sbr.rel (%p440) target = $region60
        $region59: #{tpu_custom_call.1} parent=11 // pred_region
          _
        $region60: #{tpu_custom_call.1} parent=11 // pred_fallthru
          _
        // Predicated region
        $region61: #{tpu_custom_call.1} parent=11 // pred_check
          %p443 = pneg %p324
        $region62: #{tpu_custom_call.1} parent=11 // pred_check_branch
          %445 = sbr.rel (%p443) target = $region64
        $region63: #{tpu_custom_call.1} parent=11 // pred_region
          _
        $region64: #{tpu_custom_call.1} parent=11 // pred_fallthru
          _
        // Predicated region
        $region65: #{tpu_custom_call.1} parent=11 // pred_check
          %p446 = pneg %p345
        $region66: #{tpu_custom_call.1} parent=11 // pred_check_branch
          %448 = sbr.rel (%p446) target = $region68
        $region67: #{tpu_custom_call.1} parent=11 // pred_region
          _
        $region68: #{tpu_custom_call.1} parent=11 // pred_fallthru
          _
        // Predicated region
        $region69: #{tpu_custom_call.1} parent=11 // pred_check
          %p449 = pneg %p366
        $region70: #{tpu_custom_call.1} parent=11 // pred_check_branch
          %451 = sbr.rel (%p449) target = $region72
        $region71: #{tpu_custom_call.1} parent=11 // pred_region
          _
        $region72: #{tpu_custom_call.1} parent=11 // pred_fallthru
          _
      $region12: #{tpu_custom_call.1} parent=5 // pred_fallthru
        _
      %p452 = scmp.lt.s32.totalorder %s25, 2
      // Predicated region
      $region73: #{tpu_custom_call.1} parent=5 // pred_check
        %p453 = pneg %p452
      $region74: #{tpu_custom_call.1} parent=5 // pred_check_branch
        %455 = sbr.rel (%p453) target = $region76
      $region75: #{tpu_custom_call.1} parent=5 // pred_region
        // Predicated region
        $region77: #{tpu_custom_call.1} parent=75 // pred_check
          %p456 = pneg %p45
        $region78: #{tpu_custom_call.1} parent=75 // pred_check_branch
          %458 = sbr.rel (%p456) target = $region80
        $region79: #{tpu_custom_call.1} parent=75 // pred_region
          %p459 = scmp.lt.s32.totalorder %s25, 1
          %s460 = scalar_select %p459, %s25, 1
          %s461 = smul.addr %s460, 4
          %s462 = smul.addr %s461, 8
          %s463 = scalar_lea.vmem %s0, %s462
        $region80: #{tpu_custom_call.1} parent=75 // pred_fallthru
          _
      $region76: #{tpu_custom_call.1} parent=5 // pred_fallthru
        _
      %p464 = scmp.le.s32.totalorder 1, %s25
      %p465 = scmp.lt.s32.totalorder %s25, 3
      %p466 = pnand %p464, %p465
      %p467 = pneg %p466
      // Predicated region
      $region81: #{tpu_custom_call.1} parent=5 // pred_check
        _
      $region82: #{tpu_custom_call.1} parent=5 // pred_check_branch
        %469 = sbr.rel (%p466) target = $region84
      $region83: #{tpu_custom_call.1} parent=5 // pred_region
        %s470 = ssub.s32 %s25, 1
        %p471 = scmp.lt.s32.totalorder %s30, 1
        %s472 = scalar_select %p471, %s30, 1
        %s473 = smul.addr %s472, 4
        %s474 = smul.addr %s473, 8
        %s475 = scalar_lea.vmem %s0, %s474
        %p476 = pneg %p51
        %p477 = pneg %p48
        %p478 = pneg %p72
        %p479 = pneg %p69
        %p480 = pneg %p93
        %p481 = pneg %p90
        %p482 = pneg %p114
        %p483 = pneg %p111
        %p484 = pneg %p135
        %p485 = pneg %p132
        %p486 = pneg %p156
        %p487 = pneg %p153
        %p488 = pneg %p177
        %p489 = pneg %p174
        %p490 = pneg %p198
        %p491 = pneg %p195
        %p492 = pneg %p219
        %p493 = pneg %p216
        %p494 = pneg %p240
        %p495 = pneg %p237
        %p496 = pneg %p261
        %p497 = pneg %p258
        %p498 = pneg %p282
        %p499 = pneg %p279
        %p500 = pneg %p303
        %p501 = pneg %p300
        %p502 = pneg %p324
        %p503 = pneg %p321
        %p504 = pneg %p345
        %p505 = pneg %p342
        %p506 = pneg %p366
        %p507 = pneg %p363
        %p508 = pneg %p392
        %p509 = pneg %p389
        %s510 = sand.u32 %s379, 1
        %s511 = scalar_lea.sflag [#allocation3], %s510
        %s512 = sand.u32 %s379, 1
        %s513 = smul.addr %s512, 32
        %s514 = scalar_lea.vmem [#allocation2], %s513
        %p515 = scmp.lt.s32.totalorder %s30, 1
        %s516 = scalar_select %p515, %s30, 1
        %s517 = smul.addr %s516, 4
        %s518 = smul.addr %s517, 8
        %s519 = scalar_lea.vmem %s0, %s518
        %v521 = vld [vmem:[%s1] sm:$0x1]
        %v522 = vld [vmem:[%s2] sm:$0x3]
        %v523 = vld [vmem:[%s3] sm:$0xf]
        %v524 = vld [vmem:[%s3 + $0x4] sm:$0xf]
        %v525 = vld [vmem:[%s4] sm:$0xf]
        %v526 = vld [vmem:[%s4 + $0x4] sm:$0xf]
        %v527 = vld [vmem:[%s5] sm:$0xf]
        %v528 = vld [vmem:[%s5 + $0x4] sm:$0xf]
        %v529 = vld [vmem:[%s6] sm:$0xf]
        %v530 = vld [vmem:[%s8] sm:$0xf]
        %v531 = vld [vmem:[%s8 + $0x4] sm:$0xf]
        %v532 = vld [vmem:[%s7] sm:$0xff]
        %v533 = vld [vmem:[%s9] sm:$0xff]
        %v534 = vld [vmem:[%s9 + $0x8] sm:$0xff]
        %v535 = vld [vmem:[%s10] sm:$0xf]
        %v536 = vld [vmem:[%s10 + $0x4] sm:$0xf]
        %v537 = vld [vmem:[%s11] sm:$0xf]
        %v538 = vld [vmem:[%s11 + $0x4] sm:$0xf]
        %v539 = vld [vmem:[%s12] sm:$0xf]
        %v540 = vld [vmem:[%s12 + $0x4] sm:$0xf]
        %v541 = vld [vmem:[%s12 + $0x8] sm:$0xf]
        %v542 = vld [vmem:[%s12 + $0xc] sm:$0xf]
        %v543 = vld [vmem:[%s12 + $0x10] sm:$0xf]
        %v544 = vld [vmem:[%s12 + $0x14] sm:$0xf]
        %v545 = vld [vmem:[%s12 + $0x18] sm:$0xf]
        %v546 = vld [vmem:[%s12 + $0x1c] sm:$0xf]
        %v547 = vld [vmem:[%s12 + $0x20] sm:$0xf]
        %v548 = vld [vmem:[%s12 + $0x24] sm:$0xf]
        %v549 = vld [vmem:[%s12 + $0x28] sm:$0xf]
        %v550 = vld [vmem:[%s12 + $0x2c] sm:$0xf]
        %v551 = vld [vmem:[%s12 + $0x30] sm:$0xf]
        %v552 = vld [vmem:[%s12 + $0x34] sm:$0xf]
        %v553 = vld [vmem:[%s12 + $0x38] sm:$0xf]
        %v554 = vld [vmem:[%s12 + $0x3c] sm:$0xf]
        %v555 = vld [vmem:[%s12 + $0x40] sm:$0xf]
        %v556 = vld [vmem:[%s12 + $0x44] sm:$0xf]
        %v557 = vld [vmem:[%s12 + $0x48] sm:$0xf]
        %v558 = vld [vmem:[%s12 + $0x4c] sm:$0xf]
        %v559 = vld [vmem:[%s12 + $0x50] sm:$0xf]
        %v560 = vld [vmem:[%s12 + $0x54] sm:$0xf]
        %v561 = vld [vmem:[%s12 + $0x58] sm:$0xf]
        %v562 = vld [vmem:[%s12 + $0x5c] sm:$0xf]
        %v563 = vld [vmem:[%s12 + $0x60] sm:$0xf]
        %v564 = vld [vmem:[%s12 + $0x64] sm:$0xf]
        %v565 = vld [vmem:[%s12 + $0x68] sm:$0xf]
        %v566 = vld [vmem:[%s12 + $0x6c] sm:$0xf]
        %v567 = vld [vmem:[%s12 + $0x70] sm:$0xf]
        %v568 = vld [vmem:[%s12 + $0x74] sm:$0xf]
        %v569 = vld [vmem:[%s12 + $0x78] sm:$0xf]
        %v570 = vld [vmem:[%s12 + $0x7c] sm:$0xf]
        %v571 = vld [vmem:[%s13] sm:$0xf]
        %v572 = vld [vmem:[%s13 + $0x4] sm:$0xf]
        %v573 = vld [vmem:[%s13 + $0x8] sm:$0xf]
        %v574 = vld [vmem:[%s13 + $0xc] sm:$0xf]
        %v575 = vld [vmem:[%s13 + $0x10] sm:$0xf]
        %v576 = vld [vmem:[%s13 + $0x14] sm:$0xf]
        %v577 = vld [vmem:[%s13 + $0x18] sm:$0xf]
        %v578 = vld [vmem:[%s13 + $0x1c] sm:$0xf]
        %v579 = vld [vmem:[%s13 + $0x20] sm:$0xf]
        %v580 = vld [vmem:[%s13 + $0x24] sm:$0xf]
        %v581 = vld [vmem:[%s13 + $0x28] sm:$0xf]
        %v582 = vld [vmem:[%s13 + $0x2c] sm:$0xf]
        %v583 = vld [vmem:[%s13 + $0x30] sm:$0xf]
        %v584 = vld [vmem:[%s13 + $0x34] sm:$0xf]
        %v585 = vld [vmem:[%s13 + $0x38] sm:$0xf]
        %v586 = vld [vmem:[%s13 + $0x3c] sm:$0xf]
        %v587 = vld [vmem:[%s13 + $0x40] sm:$0xf]
        %v588 = vld [vmem:[%s13 + $0x44] sm:$0xf]
        %v589 = vld [vmem:[%s13 + $0x48] sm:$0xf]
        %v590 = vld [vmem:[%s13 + $0x4c] sm:$0xf]
        %v591 = vld [vmem:[%s13 + $0x50] sm:$0xf]
        %v592 = vld [vmem:[%s13 + $0x54] sm:$0xf]
        %v593 = vld [vmem:[%s13 + $0x58] sm:$0xf]
        %v594 = vld [vmem:[%s13 + $0x5c] sm:$0xf]
        %v595 = vld [vmem:[%s13 + $0x60] sm:$0xf]
        %v596 = vld [vmem:[%s13 + $0x64] sm:$0xf]
        %v597 = vld [vmem:[%s13 + $0x68] sm:$0xf]
        %v598 = vld [vmem:[%s13 + $0x6c] sm:$0xf]
        %v599 = vld [vmem:[%s13 + $0x70] sm:$0xf]
        %v600 = vld [vmem:[%s13 + $0x74] sm:$0xf]
        %v601 = vld [vmem:[%s13 + $0x78] sm:$0xf]
        %v602 = vld [vmem:[%s13 + $0x7c] sm:$0xf]
        %v603 = vld [vmem:[%s14] sm:$0xff]
        %v604 = vld [vmem:[%s14 + $0x8] sm:$0xff]
        %v605 = vld [vmem:[%s15] sm:$0xff]
        %v606 = vld [vmem:[%s15 + $0x8] sm:$0xff]
        %v607 = vld [vmem:[%s519] sm:$0xff]
        %v608 = vld [vmem:[%s519 + $0x8] sm:$0xff]
        %v609 = vld [vmem:[%s519 + $0x10] sm:$0xff]
        %v610 = vld [vmem:[%s519 + $0x18] sm:$0xff]
        %v611 = vpack.c.bf16 %v609, %v607
        %v612 = vpack.c.bf16 %v610, %v608
        %v645 = vunpack.c.l.b16 %v539
        %v646 = vunpack.c.l.b16 %v540
        %v647 = vunpack.c.l.b16 %v541
        %v648 = vunpack.c.l.b16 %v542
        %v649 = vunpack.c.l.b16 %v543
        %v650 = vunpack.c.l.b16 %v544
        %v651 = vunpack.c.l.b16 %v545
        %v652 = vunpack.c.l.b16 %v546
        %v653 = vunpack.c.l.b16 %v547
        %v654 = vunpack.c.l.b16 %v548
        %v655 = vunpack.c.l.b16 %v549
        %v656 = vunpack.c.l.b16 %v550
        %v657 = vunpack.c.l.b16 %v551
        %v658 = vunpack.c.l.b16 %v552
        %v659 = vunpack.c.l.b16 %v553
        %v660 = vunpack.c.l.b16 %v554
        %v661 = vunpack.c.l.b16 %v555
        %v662 = vunpack.c.l.b16 %v556
        %v663 = vunpack.c.l.b16 %v557
        %v664 = vunpack.c.l.b16 %v558
        %v665 = vunpack.c.l.b16 %v559
        %v666 = vunpack.c.l.b16 %v560
        %v667 = vunpack.c.l.b16 %v561
        %v668 = vunpack.c.l.b16 %v562
        %v669 = vunpack.c.l.b16 %v563
        %v670 = vunpack.c.l.b16 %v564
        %v671 = vunpack.c.l.b16 %v565
        %v672 = vunpack.c.l.b16 %v566
        %v673 = vunpack.c.l.b16 %v567
        %v674 = vunpack.c.l.b16 %v568
        %v675 = vunpack.c.l.b16 %v569
        %v676 = vunpack.c.l.b16 %v570
        %v677 = vpack.c.b16 %v646, %v645
        %v678 = vpack.c.b16 %v648, %v647
        %v679 = vpack.c.b16 %v650, %v649
        %v680 = vpack.c.b16 %v652, %v651
        %v681 = vpack.c.b16 %v654, %v653
        %v682 = vpack.c.b16 %v656, %v655
        %v683 = vpack.c.b16 %v658, %v657
        %v684 = vpack.c.b16 %v660, %v659
        %v685 = vpack.c.b16 %v662, %v661
        %v686 = vpack.c.b16 %v664, %v663
        %v687 = vpack.c.b16 %v666, %v665
        %v688 = vpack.c.b16 %v668, %v667
        %v689 = vpack.c.b16 %v670, %v669
        %v690 = vpack.c.b16 %v672, %v671
        %v691 = vpack.c.b16 %v674, %v673
        %v692 = vpack.c.b16 %v676, %v675
        %709 = vmatpush.bf16.msra.mxu0 %v684
        %710 = vmatpush.bf16.msra.mxu0 %v683
        %711 = vmatpush.bf16.msra.mxu0 %v682
        %712 = vmatpush.bf16.msra.mxu0 %v681
        %713 = vmatpush.bf16.msra.mxu0 %v680
        %714 = vmatpush.bf16.msra.mxu0 %v679
        %715 = vmatpush.bf16.msra.mxu0 %v678
        %716 = vmatpush.bf16.msra.mxu0 %v677
        %717 = vmatmul.bf16.gmra.mxu0 %v611
        %v718 = vpop.f32.mrf.mxu0
        %v719 = vadd.f32 0.0, %v718
        %v720 = vpop.f32.mrf.mxu0
        %v721 = vadd.f32 0.0, %v720
        %722 = vdwg.mxu0
        %723 = vmatpush.bf16.msra.mxu0 %v692
        %724 = vmatpush.bf16.msra.mxu0 %v691
        %725 = vmatpush.bf16.msra.mxu0 %v690
        %726 = vmatpush.bf16.msra.mxu0 %v689
        %727 = vmatpush.bf16.msra.mxu0 %v688
        %728 = vmatpush.bf16.msra.mxu0 %v687
        %729 = vmatpush.bf16.msra.mxu0 %v686
        %730 = vmatpush.bf16.msra.mxu0 %v685
        %731 = vmatmul.bf16.gmra.mxu0 %v612
        %v732 = vpop.f32.mrf.mxu0
        %v733 = vadd.f32 %v719, %v732
        %v734 = vpop.f32.mrf.mxu0
        %v735 = vadd.f32 %v721, %v734
        %736 = vdwg.mxu0
        %v769 = vunpack.c.l.b16 %v571
        %v770 = vunpack.c.l.b16 %v572
        %v771 = vunpack.c.l.b16 %v573
        %v772 = vunpack.c.l.b16 %v574
        %v773 = vunpack.c.l.b16 %v575
        %v774 = vunpack.c.l.b16 %v576
        %v775 = vunpack.c.l.b16 %v577
        %v776 = vunpack.c.l.b16 %v578
        %v777 = vunpack.c.l.b16 %v579
        %v778 = vunpack.c.l.b16 %v580
        %v779 = vunpack.c.l.b16 %v581
        %v780 = vunpack.c.l.b16 %v582
        %v781 = vunpack.c.l.b16 %v583
        %v782 = vunpack.c.l.b16 %v584
        %v783 = vunpack.c.l.b16 %v585
        %v784 = vunpack.c.l.b16 %v586
        %v785 = vunpack.c.l.b16 %v587
        %v786 = vunpack.c.l.b16 %v588
        %v787 = vunpack.c.l.b16 %v589
        %v788 = vunpack.c.l.b16 %v590
        %v789 = vunpack.c.l.b16 %v591
        %v790 = vunpack.c.l.b16 %v592
        %v791 = vunpack.c.l.b16 %v593
        %v792 = vunpack.c.l.b16 %v594
        %v793 = vunpack.c.l.b16 %v595
        %v794 = vunpack.c.l.b16 %v596
        %v795 = vunpack.c.l.b16 %v597
        %v796 = vunpack.c.l.b16 %v598
        %v797 = vunpack.c.l.b16 %v599
        %v798 = vunpack.c.l.b16 %v600
        %v799 = vunpack.c.l.b16 %v601
        %v800 = vunpack.c.l.b16 %v602
        %v801 = vpack.c.b16 %v770, %v769
        %v802 = vpack.c.b16 %v772, %v771
        %v803 = vpack.c.b16 %v774, %v773
        %v804 = vpack.c.b16 %v776, %v775
        %v805 = vpack.c.b16 %v778, %v777
        %v806 = vpack.c.b16 %v780, %v779
        %v807 = vpack.c.b16 %v782, %v781
        %v808 = vpack.c.b16 %v784, %v783
        %v809 = vpack.c.b16 %v786, %v785
        %v810 = vpack.c.b16 %v788, %v787
        %v811 = vpack.c.b16 %v790, %v789
        %v812 = vpack.c.b16 %v792, %v791
        %v813 = vpack.c.b16 %v794, %v793
        %v814 = vpack.c.b16 %v796, %v795
        %v815 = vpack.c.b16 %v798, %v797
        %v816 = vpack.c.b16 %v800, %v799
        %833 = vmatpush.bf16.msra.mxu0 %v808
        %834 = vmatpush.bf16.msra.mxu0 %v807
        %835 = vmatpush.bf16.msra.mxu0 %v806
        %836 = vmatpush.bf16.msra.mxu0 %v805
        %837 = vmatpush.bf16.msra.mxu0 %v804
        %838 = vmatpush.bf16.msra.mxu0 %v803
        %839 = vmatpush.bf16.msra.mxu0 %v802
        %840 = vmatpush.bf16.msra.mxu0 %v801
        %841 = vmatmul.bf16.gmra.mxu0 %v611
        %v842 = vpop.f32.mrf.mxu0
        %v843 = vadd.f32 0.0, %v842
        %v844 = vpop.f32.mrf.mxu0
        %v845 = vadd.f32 0.0, %v844
        %846 = vdwg.mxu0
        %847 = vmatpush.bf16.msra.mxu0 %v816
        %848 = vmatpush.bf16.msra.mxu0 %v815
        %849 = vmatpush.bf16.msra.mxu0 %v814
        %850 = vmatpush.bf16.msra.mxu0 %v813
        %851 = vmatpush.bf16.msra.mxu0 %v812
        %852 = vmatpush.bf16.msra.mxu0 %v811
        %853 = vmatpush.bf16.msra.mxu0 %v810
        %854 = vmatpush.bf16.msra.mxu0 %v809
        %855 = vmatmul.bf16.gmra.mxu0 %v612
        %v856 = vpop.f32.mrf.mxu0
        %v857 = vadd.f32 %v843, %v856
        %v858 = vpop.f32.mrf.mxu0
        %v859 = vadd.f32 %v845, %v858
        %860 = vdwg.mxu0
        %v861 = vpack.c.bf16 %v735, %v733
        %vm862 = vcmask 130048
        %v864 = vsel %vm862, %v521, 0
        %866 = vmatpush.bf16.msra.mxu0 0
        %867 = vmatpush.bf16.msra.mxu0 0
        %868 = vmatpush.bf16.msra.mxu0 0
        %869 = vmatpush.bf16.msra.mxu0 0
        %870 = vmatpush.bf16.msra.mxu0 0
        %871 = vmatpush.bf16.msra.mxu0 0
        %872 = vmatpush.bf16.msra.mxu0 0
        %873 = vmatpush.bf16.msra.mxu0 %v861
        %874 = vmatmul.bf16.gmra.mxu0 %v864
        %v875 = vpop.f32.mrf.mxu0
        %v876 = vadd.f32 0.0, %v875
        %v877 = vpop.f32.mrf.mxu0
        %878 = vdwg.mxu0
        %880 = vset.pattern.permute.xlu0 0
        %881 = vperm.xlu0 %880, %v522
        %v882 = vpop.permute.xlu0 %881
        %v884 = vmul.f32 %v876, %v882
        %885 = vset.pattern.permute.xlu0 1
        %886 = vperm.xlu0 %885, %v522
        %v887 = vpop.permute.xlu0 %886
        %v889 = vadd.f32 %v884, %v887
        %v890 = vmax.f32 %v889, 0.0
        %v891 = vpack.c.bf16 %v890, %v890
        %v894 = vunpack.c.l.b16 %v523
        %v895 = vunpack.c.l.b16 %v524
        %v896 = vpack.c.b16 %v895, %v894
        %vm897 = vcmask 15360
        %v899 = vsel %vm897, %v896, 0
        %vm901 = vcmask 1040384
        %v903 = vsel %vm901, %v891, 0
        %905 = vmatpush.bf16.msra.mxu0 0
        %906 = vmatpush.bf16.msra.mxu0 0
        %907 = vmatpush.bf16.msra.mxu0 0
        %908 = vmatpush.bf16.msra.mxu0 0
        %909 = vmatpush.bf16.msra.mxu0 0
        %910 = vmatpush.bf16.msra.mxu0 0
        %911 = vmatpush.bf16.msra.mxu0 0
        %912 = vmatpush.bf16.msra.mxu0 %v903
        %913 = vmatmul.bf16.gmra.mxu0 %v899
        %v914 = vpop.f32.mrf.mxu0
        %v915 = vadd.f32 0.0, %v914
        %v916 = vpop.f32.mrf.mxu0
        %v917 = vadd.f32 0.0, %v916
        %918 = vdwg.mxu0
        %v919 = vxor.u32 %v915, 2147483648
        %v920 = vxor.u32 %v917, 2147483648
        %v921 = vmul.f32 %v919, 1.442695
        %v922 = vpow.pop %v921
        %v923 = vmul.f32 %v920, 1.442695
        %v924 = vpow.pop %v923
        %v925 = vadd.f32 %v922, 1.0
        %v926 = vadd.f32 %v924, 1.0
        %v927 = vrcp.pop %v925
        %v928 = vmul.f32 %v925, %v927
        %v929 = vsub.f32 1.0, %v928
        %v930 = vmul.f32 %v927, %v929
        %v931 = vadd.f32 %v927, %v930
        %vm932 = vweird.f32 %v925
        %vm933 = vweird.f32 %v927
        %vm934 = vmor %vm932, %vm933
        %v935 = vsel %vm934, %v927, %v931
        %v936 = vand.u32 2147483647, %v925
        %vm937 = vcmp.eq.f32.partialorder %v936, 8.507059e+37
        %v938 = vand.u32 %v925, 2147483648
        %v939 = vor.u32 1.1754944e-38, %v938
        %v940 = vsel %vm937, %v939, %v935
        %v941 = vmul.f32 1.0, %v940
        %v942 = vrcp.pop %v926
        %v943 = vmul.f32 %v926, %v942
        %v944 = vsub.f32 1.0, %v943
        %v945 = vmul.f32 %v942, %v944
        %v946 = vadd.f32 %v942, %v945
        %vm947 = vweird.f32 %v926
        %vm948 = vweird.f32 %v942
        %vm949 = vmor %vm947, %vm948
        %v950 = vsel %vm949, %v942, %v946
        %v951 = vand.u32 2147483647, %v926
        %vm952 = vcmp.eq.f32.partialorder %v951, 8.507059e+37
        %v953 = vand.u32 %v926, 2147483648
        %v954 = vor.u32 1.1754944e-38, %v953
        %v955 = vsel %vm952, %v954, %v950
        %v956 = vmul.f32 1.0, %v955
        %v959 = vunpack.c.l.b16 %v525
        %v960 = vunpack.c.l.b16 %v526
        %v961 = vpack.c.b16 %v960, %v959
        %963 = vrot.lane.b32.xlu0 %v891, 112
        %v964 = vpop.permute.xlu0 %963
        %v966 = vsel %vm897, %v961, 0
        %v969 = vsel %vm901, %v964, 0
        %971 = vmatpush.bf16.msra.mxu0 0
        %972 = vmatpush.bf16.msra.mxu0 0
        %973 = vmatpush.bf16.msra.mxu0 0
        %974 = vmatpush.bf16.msra.mxu0 0
        %975 = vmatpush.bf16.msra.mxu0 0
        %976 = vmatpush.bf16.msra.mxu0 0
        %977 = vmatpush.bf16.msra.mxu0 0
        %978 = vmatpush.bf16.msra.mxu0 %v969
        %979 = vmatmul.bf16.gmra.mxu0 %v966
        %v980 = vpop.f32.mrf.mxu0
        %v981 = vadd.f32 0.0, %v980
        %v982 = vpop.f32.mrf.mxu0
        %v983 = vadd.f32 0.0, %v982
        %984 = vdwg.mxu0
        %v985 = vxor.u32 %v981, 2147483648
        %v986 = vxor.u32 %v983, 2147483648
        %v987 = vmul.f32 %v985, 1.442695
        %v988 = vpow.pop %v987
        %v989 = vmul.f32 %v986, 1.442695
        %v990 = vpow.pop %v989
        %v991 = vadd.f32 %v988, 1.0
        %v992 = vadd.f32 %v990, 1.0
        %v993 = vrcp.pop %v991
        %v994 = vmul.f32 %v991, %v993
        %v995 = vsub.f32 1.0, %v994
        %v996 = vmul.f32 %v993, %v995
        %v997 = vadd.f32 %v993, %v996
        %vm998 = vweird.f32 %v991
        %vm999 = vweird.f32 %v993
        %vm1000 = vmor %vm998, %vm999
        %v1001 = vsel %vm1000, %v993, %v997
        %v1002 = vand.u32 2147483647, %v991
        %vm1003 = vcmp.eq.f32.partialorder %v1002, 8.507059e+37
        %v1004 = vand.u32 %v991, 2147483648
        %v1005 = vor.u32 1.1754944e-38, %v1004
        %v1006 = vsel %vm1003, %v1005, %v1001
        %v1007 = vmul.f32 1.0, %v1006
        %v1008 = vrcp.pop %v992
        %v1009 = vmul.f32 %v992, %v1008
        %v1010 = vsub.f32 1.0, %v1009
        %v1011 = vmul.f32 %v1008, %v1010
        %v1012 = vadd.f32 %v1008, %v1011
        %vm1013 = vweird.f32 %v992
        %vm1014 = vweird.f32 %v1008
        %vm1015 = vmor %vm1013, %vm1014
        %v1016 = vsel %vm1015, %v1008, %v1012
        %v1017 = vand.u32 2147483647, %v992
        %vm1018 = vcmp.eq.f32.partialorder %v1017, 8.507059e+37
        %v1019 = vand.u32 %v992, 2147483648
        %v1020 = vor.u32 1.1754944e-38, %v1019
        %v1021 = vsel %vm1018, %v1020, %v1016
        %v1022 = vmul.f32 1.0, %v1021
        %v1023 = vpack.c.bf16 %v859, %v857
        %v1026 = vunpack.c.l.b16 %v527
        %v1027 = vunpack.c.l.b16 %v528
        %v1028 = vpack.c.b16 %v1027, %v1026
        %v1030 = vsel %vm862, %v1028, 0
        %1032 = vmatpush.bf16.msra.mxu0 0
        %1033 = vmatpush.bf16.msra.mxu0 0
        %1034 = vmatpush.bf16.msra.mxu0 0
        %1035 = vmatpush.bf16.msra.mxu0 0
        %1036 = vmatpush.bf16.msra.mxu0 0
        %1037 = vmatpush.bf16.msra.mxu0 0
        %1038 = vmatpush.bf16.msra.mxu0 0
        %1039 = vmatpush.bf16.msra.mxu0 %v1023
        %1040 = vmatmul.bf16.gmra.mxu0 %v1030
        %v1041 = vpop.f32.mrf.mxu0
        %v1042 = vadd.f32 0.0, %v1041
        %v1043 = vpop.f32.mrf.mxu0
        %v1044 = vadd.f32 0.0, %v1043
        %1045 = vdwg.mxu0
        %v1046 = vxor.u32 %v1042, 2147483648
        %v1047 = vxor.u32 %v1044, 2147483648
        %v1048 = vmul.f32 %v1046, 1.442695
        %v1049 = vpow.pop %v1048
        %v1050 = vmul.f32 %v1047, 1.442695
        %v1051 = vpow.pop %v1050
        %v1052 = vadd.f32 %v1049, 1.0
        %v1053 = vadd.f32 %v1051, 1.0
        %v1054 = vrcp.pop %v1052
        %v1055 = vmul.f32 %v1052, %v1054
        %v1056 = vsub.f32 1.0, %v1055
        %v1057 = vmul.f32 %v1054, %v1056
        %v1058 = vadd.f32 %v1054, %v1057
        %vm1059 = vweird.f32 %v1052
        %vm1060 = vweird.f32 %v1054
        %vm1061 = vmor %vm1059, %vm1060
        %v1062 = vsel %vm1061, %v1054, %v1058
        %v1063 = vand.u32 2147483647, %v1052
        %vm1064 = vcmp.eq.f32.partialorder %v1063, 8.507059e+37
        %v1065 = vand.u32 %v1052, 2147483648
        %v1066 = vor.u32 1.1754944e-38, %v1065
        %v1067 = vsel %vm1064, %v1066, %v1062
        %v1068 = vmul.f32 1.0, %v1067
        %v1069 = vrcp.pop %v1053
        %v1070 = vmul.f32 %v1053, %v1069
        %v1071 = vsub.f32 1.0, %v1070
        %v1072 = vmul.f32 %v1069, %v1071
        %v1073 = vadd.f32 %v1069, %v1072
        %vm1074 = vweird.f32 %v1053
        %vm1075 = vweird.f32 %v1069
        %vm1076 = vmor %vm1074, %vm1075
        %v1077 = vsel %vm1076, %v1069, %v1073
        %v1078 = vand.u32 2147483647, %v1053
        %vm1079 = vcmp.eq.f32.partialorder %v1078, 8.507059e+37
        %v1080 = vand.u32 %v1053, 2147483648
        %v1081 = vor.u32 1.1754944e-38, %v1080
        %v1082 = vsel %vm1079, %v1081, %v1077
        %v1083 = vmul.f32 1.0, %v1082
        %v1084 = vpack.c.bf16 %v956, %v941
        %v1087 = vunpack.c.l.b16 %v603
        %v1088 = vunpack.c.h.b16 %v603
        %v1089 = vunpack.c.l.b16 %v604
        %v1090 = vunpack.c.h.b16 %v604
        %v1091 = vpack.c.b16 %v1089, %v1087
        %v1092 = vpack.c.b16 %v1090, %v1088
        %v1096 = vsel %vm862, %v1084, 0
        %1098 = vmatpush.bf16.msra.mxu0 0
        %1099 = vmatpush.bf16.msra.mxu0 0
        %1100 = vmatpush.bf16.msra.mxu0 0
        %1101 = vmatpush.bf16.msra.mxu0 0
        %1102 = vmatpush.bf16.msra.mxu0 0
        %1103 = vmatpush.bf16.msra.mxu0 0
        %1104 = vmatpush.bf16.msra.mxu0 0
        %1105 = vmatpush.bf16.msra.mxu0 %v1091
        %1106 = vmatmul.bf16.gmra.mxu0 %v1096
        %v1107 = vpop.f32.mrf.mxu0
        %v1108 = vadd.f32 0.0, %v1107
        %v1109 = vpop.f32.mrf.mxu0
        %v1110 = vadd.f32 0.0, %v1109
        %1111 = vdwg.mxu0
        %1112 = vmatpush.bf16.msra.mxu0 0
        %1113 = vmatpush.bf16.msra.mxu0 0
        %1114 = vmatpush.bf16.msra.mxu0 0
        %1115 = vmatpush.bf16.msra.mxu0 0
        %1116 = vmatpush.bf16.msra.mxu0 0
        %1117 = vmatpush.bf16.msra.mxu0 0
        %1118 = vmatpush.bf16.msra.mxu0 0
        %1119 = vmatpush.bf16.msra.mxu0 %v1092
        %1120 = vmatmul.bf16.gmra.mxu0 %v1096
        %v1121 = vpop.f32.mrf.mxu0
        %v1122 = vadd.f32 0.0, %v1121
        %v1123 = vpop.f32.mrf.mxu0
        %v1124 = vadd.f32 0.0, %v1123
        %1125 = vdwg.mxu0
        %v1126 = vpack.c.bf16 %v1022, %v1007
        %v1129 = vunpack.c.l.b16 %v605
        %v1130 = vunpack.c.h.b16 %v605
        %v1131 = vunpack.c.l.b16 %v606
        %v1132 = vunpack.c.h.b16 %v606
        %v1133 = vpack.c.b16 %v1131, %v1129
        %v1134 = vpack.c.b16 %v1132, %v1130
        %v1138 = vsel %vm862, %v1126, 0
        %1140 = vmatpush.bf16.msra.mxu0 0
        %1141 = vmatpush.bf16.msra.mxu0 0
        %1142 = vmatpush.bf16.msra.mxu0 0
        %1143 = vmatpush.bf16.msra.mxu0 0
        %1144 = vmatpush.bf16.msra.mxu0 0
        %1145 = vmatpush.bf16.msra.mxu0 0
        %1146 = vmatpush.bf16.msra.mxu0 0
        %1147 = vmatpush.bf16.msra.mxu0 %v1133
        %1148 = vmatmul.bf16.gmra.mxu0 %v1138
        %v1149 = vpop.f32.mrf.mxu0
        %v1150 = vadd.f32 0.0, %v1149
        %v1151 = vpop.f32.mrf.mxu0
        %v1152 = vadd.f32 0.0, %v1151
        %1153 = vdwg.mxu0
        %1154 = vmatpush.bf16.msra.mxu0 0
        %1155 = vmatpush.bf16.msra.mxu0 0
        %1156 = vmatpush.bf16.msra.mxu0 0
        %1157 = vmatpush.bf16.msra.mxu0 0
        %1158 = vmatpush.bf16.msra.mxu0 0
        %1159 = vmatpush.bf16.msra.mxu0 0
        %1160 = vmatpush.bf16.msra.mxu0 0
        %1161 = vmatpush.bf16.msra.mxu0 %v1134
        %1162 = vmatmul.bf16.gmra.mxu0 %v1138
        %v1163 = vpop.f32.mrf.mxu0
        %v1164 = vadd.f32 0.0, %v1163
        %v1165 = vpop.f32.mrf.mxu0
        %v1166 = vadd.f32 0.0, %v1165
        %1167 = vdwg.mxu0
        %v1168 = vmul.f32 %v1108, %v1150
        %v1169 = vmul.f32 %v1122, %v1164
        %v1170 = vmul.f32 %v1110, %v1152
        %v1171 = vmul.f32 %v1124, %v1166
        %1173 = vset.pattern.permute.xlu0 0
        %1174 = vperm.xlu0 %1173, %v1068
        %v1175 = vpop.permute.xlu0 %1174
        %1178 = vset.pattern.permute.xlu0 0
        %1179 = vperm.xlu0 %1178, %v1083
        %v1180 = vpop.permute.xlu0 %1179
        %v1182 = vadd.f32 %v1168, %v1175
        %v1183 = vadd.f32 %v1169, %v1175
        %v1184 = vadd.f32 %v1170, %v1180
        %v1185 = vadd.f32 %v1171, %v1180
        %v1186 = vmul.f32 %v607, %v1182
        %v1187 = vmul.f32 %v608, %v1183
        %v1188 = vmul.f32 %v609, %v1184
        %v1189 = vmul.f32 %v610, %v1185
        %v1190 = vpack.c.bf16 %v1188, %v1186
        %v1191 = vpack.c.bf16 %v1189, %v1187
        %1193 = vset.pattern.permute.xlu0 0
        %1194 = vperm.xlu0 %1193, %v532
        %v1195 = vpop.permute.xlu0 %1194
        %v1198 = vsel %vm862, %v529, 0
        %1200 = vmatpush.bf16.msra.mxu0 0
        %1201 = vmatpush.bf16.msra.mxu0 0
        %1202 = vmatpush.bf16.msra.mxu0 0
        %1203 = vmatpush.bf16.msra.mxu0 0
        %1204 = vmatpush.bf16.msra.mxu0 0
        %1205 = vmatpush.bf16.msra.mxu0 0
        %1206 = vmatpush.bf16.msra.mxu0 0
        %1207 = vmatpush.bf16.msra.mxu0 %v1190
        %1208 = vmatmul.bf16.gmra.mxu0 %v1198
        %v1209 = vpop.f32.mrf.mxu0
        %v1210 = vadd.f32 %v1195, %v1209
        %v1211 = vpop.f32.mrf.mxu0
        %1212 = vdwg.mxu0
        %1213 = vmatpush.bf16.msra.mxu0 0
        %1214 = vmatpush.bf16.msra.mxu0 0
        %1215 = vmatpush.bf16.msra.mxu0 0
        %1216 = vmatpush.bf16.msra.mxu0 0
        %1217 = vmatpush.bf16.msra.mxu0 0
        %1218 = vmatpush.bf16.msra.mxu0 0
        %1219 = vmatpush.bf16.msra.mxu0 0
        %1220 = vmatpush.bf16.msra.mxu0 %v1191
        %1221 = vmatmul.bf16.gmra.mxu0 %v1198
        %v1222 = vpop.f32.mrf.mxu0
        %v1223 = vadd.f32 %v1195, %v1222
        %v1224 = vpop.f32.mrf.mxu0
        %1225 = vdwg.mxu0
        %v1226 = vmax.f32 %v1210, 0.0
        %v1227 = vmax.f32 %v1223, 0.0
        %v1228 = vpack.c.bf16 %v1226, %v1226
        %v1229 = vpack.c.bf16 %v1227, %v1227
        %1231 = vset.pattern.permute.xlu0 0
        %1232 = vperm.xlu0 %1231, %v533
        %v1233 = vpop.permute.xlu0 %1232
        %1236 = vset.pattern.permute.xlu0 0
        %1237 = vperm.xlu0 %1236, %v534
        %v1238 = vpop.permute.xlu0 %1237
        %v1242 = vunpack.c.l.b16 %v530
        %v1243 = vunpack.c.l.b16 %v531
        %v1244 = vpack.c.b16 %v1243, %v1242
        %vm1245 = vcmask 64512
        %v1247 = vsel %vm1245, %v1244, 0
        %vm1249 = vcmask 1043456
        %v1251 = vsel %vm1249, %v1228, 0
        %v1254 = vsel %vm1249, %v1229, 0
        %1256 = vmatpush.bf16.msra.mxu0 0
        %1257 = vmatpush.bf16.msra.mxu0 0
        %1258 = vmatpush.bf16.msra.mxu0 0
        %1259 = vmatpush.bf16.msra.mxu0 0
        %1260 = vmatpush.bf16.msra.mxu0 0
        %1261 = vmatpush.bf16.msra.mxu0 0
        %1262 = vmatpush.bf16.msra.mxu0 0
        %1263 = vmatpush.bf16.msra.mxu0 %v1251
        %1264 = vmatmul.bf16.gmra.mxu0 %v1247
        %v1265 = vpop.f32.mrf.mxu0
        %v1266 = vadd.f32 %v1233, %v1265
        %v1267 = vpop.f32.mrf.mxu0
        %v1268 = vadd.f32 %v1238, %v1267
        %1269 = vdwg.mxu0
        %1270 = vmatpush.bf16.msra.mxu0 0
        %1271 = vmatpush.bf16.msra.mxu0 0
        %1272 = vmatpush.bf16.msra.mxu0 0
        %1273 = vmatpush.bf16.msra.mxu0 0
        %1274 = vmatpush.bf16.msra.mxu0 0
        %1275 = vmatpush.bf16.msra.mxu0 0
        %1276 = vmatpush.bf16.msra.mxu0 0
        %1277 = vmatpush.bf16.msra.mxu0 %v1254
        %1278 = vmatmul.bf16.gmra.mxu0 %v1247
        %v1279 = vpop.f32.mrf.mxu0
        %v1280 = vadd.f32 %v1233, %v1279
        %v1281 = vpop.f32.mrf.mxu0
        %v1282 = vadd.f32 %v1238, %v1281
        %1283 = vdwg.mxu0
        %v1284 = vpack.c.bf16 %v1268, %v1266
        %v1285 = vpack.c.bf16 %v1282, %v1280
        %1286 = vmatpush.bf16.msra.mxu0 %v808
        %1287 = vmatpush.bf16.msra.mxu0 %v807
        %1288 = vmatpush.bf16.msra.mxu0 %v806
        %1289 = vmatpush.bf16.msra.mxu0 %v805
        %1290 = vmatpush.bf16.msra.mxu0 %v804
        %1291 = vmatpush.bf16.msra.mxu0 %v803
        %1292 = vmatpush.bf16.msra.mxu0 %v802
        %1293 = vmatpush.bf16.msra.mxu0 %v801
        %1294 = vmatmul.bf16.gmra.mxu0 %v1284
        %v1295 = vpop.f32.mrf.mxu0
        %v1296 = vadd.f32 0.0, %v1295
        %v1297 = vpop.f32.mrf.mxu0
        %v1298 = vadd.f32 0.0, %v1297
        %1299 = vdwg.mxu0
        %1300 = vmatpush.bf16.msra.mxu0 %v816
        %1301 = vmatpush.bf16.msra.mxu0 %v815
        %1302 = vmatpush.bf16.msra.mxu0 %v814
        %1303 = vmatpush.bf16.msra.mxu0 %v813
        %1304 = vmatpush.bf16.msra.mxu0 %v812
        %1305 = vmatpush.bf16.msra.mxu0 %v811
        %1306 = vmatpush.bf16.msra.mxu0 %v810
        %1307 = vmatpush.bf16.msra.mxu0 %v809
        %1308 = vmatmul.bf16.gmra.mxu0 %v1285
        %v1309 = vpop.f32.mrf.mxu0
        %v1310 = vadd.f32 %v1296, %v1309
        %v1311 = vpop.f32.mrf.mxu0
        %v1312 = vadd.f32 %v1298, %v1311
        %1313 = vdwg.mxu0
        %v1314 = vpack.c.bf16 %v1312, %v1310
        %v1317 = vunpack.c.l.b16 %v535
        %v1318 = vunpack.c.l.b16 %v536
        %v1319 = vpack.c.b16 %v1318, %v1317
        %1320 = vrot.lane.b32.xlu0 %v533, 127
        %v1321 = vpop.permute.xlu0 %1320
        %1322 = vrot.lane.b32.xlu0 %v534, 127
        %v1323 = vpop.permute.xlu0 %1322
        %v1327 = vsel %vm862, %v1319, 0
        %1329 = vmatpush.bf16.msra.mxu0 0
        %1330 = vmatpush.bf16.msra.mxu0 0
        %1331 = vmatpush.bf16.msra.mxu0 0
        %1332 = vmatpush.bf16.msra.mxu0 0
        %1333 = vmatpush.bf16.msra.mxu0 0
        %1334 = vmatpush.bf16.msra.mxu0 0
        %1335 = vmatpush.bf16.msra.mxu0 0
        %1336 = vmatpush.bf16.msra.mxu0 %v1314
        %1337 = vmatmul.bf16.gmra.mxu0 %v1327
        %v1338 = vpop.f32.mrf.mxu0
        %v1339 = vadd.f32 %v1321, %v1338
        %v1340 = vpop.f32.mrf.mxu0
        %v1341 = vadd.f32 %v1323, %v1340
        %1342 = vdwg.mxu0
        %v1343 = vxor.u32 %v1339, 2147483648
        %v1344 = vxor.u32 %v1341, 2147483648
        %v1345 = vmul.f32 %v1343, 1.442695
        %v1346 = vpow.pop %v1345
        %v1347 = vmul.f32 %v1344, 1.442695
        %v1348 = vpow.pop %v1347
        %v1349 = vadd.f32 %v1346, 1.0
        %v1350 = vadd.f32 %v1348, 1.0
        %v1351 = vrcp.pop %v1349
        %v1352 = vmul.f32 %v1349, %v1351
        %v1353 = vsub.f32 1.0, %v1352
        %v1354 = vmul.f32 %v1351, %v1353
        %v1355 = vadd.f32 %v1351, %v1354
        %vm1356 = vweird.f32 %v1349
        %vm1357 = vweird.f32 %v1351
        %vm1358 = vmor %vm1356, %vm1357
        %v1359 = vsel %vm1358, %v1351, %v1355
        %v1360 = vand.u32 2147483647, %v1349
        %vm1361 = vcmp.eq.f32.partialorder %v1360, 8.507059e+37
        %v1362 = vand.u32 %v1349, 2147483648
        %v1363 = vor.u32 1.1754944e-38, %v1362
        %v1364 = vsel %vm1361, %v1363, %v1359
        %v1365 = vmul.f32 1.0, %v1364
        %v1366 = vrcp.pop %v1350
        %v1367 = vmul.f32 %v1350, %v1366
        %v1368 = vsub.f32 1.0, %v1367
        %v1369 = vmul.f32 %v1366, %v1368
        %v1370 = vadd.f32 %v1366, %v1369
        %vm1371 = vweird.f32 %v1350
        %vm1372 = vweird.f32 %v1366
        %vm1373 = vmor %vm1371, %vm1372
        %v1374 = vsel %vm1373, %v1366, %v1370
        %v1375 = vand.u32 2147483647, %v1350
        %vm1376 = vcmp.eq.f32.partialorder %v1375, 8.507059e+37
        %v1377 = vand.u32 %v1350, 2147483648
        %v1378 = vor.u32 1.1754944e-38, %v1377
        %v1379 = vsel %vm1376, %v1378, %v1374
        %v1380 = vmul.f32 1.0, %v1379
        %v1381 = vmul.f32 %v1365, %v1310
        %v1382 = vmul.f32 %v1380, %v1312
        %v1383 = vpack.c.bf16 %v1382, %v1381
        %v1386 = vunpack.c.l.b16 %v537
        %v1387 = vunpack.c.l.b16 %v538
        %v1388 = vpack.c.b16 %v1387, %v1386
        %1389 = vrot.lane.b32.xlu0 %v533, 126
        %v1390 = vpop.permute.xlu0 %1389
        %1391 = vrot.lane.b32.xlu0 %v534, 126
        %v1392 = vpop.permute.xlu0 %1391
        %v1396 = vsel %vm862, %v1388, 0
        %1398 = vmatpush.bf16.msra.mxu0 0
        %1399 = vmatpush.bf16.msra.mxu0 0
        %1400 = vmatpush.bf16.msra.mxu0 0
        %1401 = vmatpush.bf16.msra.mxu0 0
        %1402 = vmatpush.bf16.msra.mxu0 0
        %1403 = vmatpush.bf16.msra.mxu0 0
        %1404 = vmatpush.bf16.msra.mxu0 0
        %1405 = vmatpush.bf16.msra.mxu0 %v1383
        %1406 = vmatmul.bf16.gmra.mxu0 %v1396
        %v1407 = vpop.f32.mrf.mxu0
        %v1408 = vadd.f32 %v1390, %v1407
        %v1409 = vpop.f32.mrf.mxu0
        %v1410 = vadd.f32 %v1392, %v1409
        %1411 = vdwg.mxu0
        %v1412 = vxor.u32 %v1408, 2147483648
        %v1413 = vxor.u32 %v1410, 2147483648
        %v1414 = vmul.f32 %v1412, 1.442695
        %v1415 = vpow.pop %v1414
        %v1416 = vmul.f32 %v1413, 1.442695
        %v1417 = vpow.pop %v1416
        %v1418 = vadd.f32 %v1415, 1.0
        %v1419 = vadd.f32 %v1417, 1.0
        %v1420 = vrcp.pop %v1418
        %v1421 = vmul.f32 %v1418, %v1420
        %v1422 = vsub.f32 1.0, %v1421
        %v1423 = vmul.f32 %v1420, %v1422
        %v1424 = vadd.f32 %v1420, %v1423
        %vm1425 = vweird.f32 %v1418
        %vm1426 = vweird.f32 %v1420
        %vm1427 = vmor %vm1425, %vm1426
        %v1428 = vsel %vm1427, %v1420, %v1424
        %v1429 = vand.u32 2147483647, %v1418
        %vm1430 = vcmp.eq.f32.partialorder %v1429, 8.507059e+37
        %v1431 = vand.u32 %v1418, 2147483648
        %v1432 = vor.u32 1.1754944e-38, %v1431
        %v1433 = vsel %vm1430, %v1432, %v1428
        %v1434 = vmul.f32 1.0, %v1433
        %v1435 = vrcp.pop %v1419
        %v1436 = vmul.f32 %v1419, %v1435
        %v1437 = vsub.f32 1.0, %v1436
        %v1438 = vmul.f32 %v1435, %v1437
        %v1439 = vadd.f32 %v1435, %v1438
        %vm1440 = vweird.f32 %v1419
        %vm1441 = vweird.f32 %v1435
        %vm1442 = vmor %vm1440, %vm1441
        %v1443 = vsel %vm1442, %v1435, %v1439
        %v1444 = vand.u32 2147483647, %v1419
        %vm1445 = vcmp.eq.f32.partialorder %v1444, 8.507059e+37
        %v1446 = vand.u32 %v1419, 2147483648
        %v1447 = vor.u32 1.1754944e-38, %v1446
        %v1448 = vsel %vm1445, %v1447, %v1443
        %v1449 = vmul.f32 1.0, %v1448
        %v1450 = vmul.f32 %v1365, %v1434
        %v1451 = vmul.f32 %v1380, %v1449
        %1453 = vset.pattern.permute.xlu0 0
        %1454 = vperm.xlu0 %1453, %v1450
        %v1455 = vpop.permute.xlu0 %1454
        %1458 = vset.pattern.permute.xlu0 0
        %1459 = vperm.xlu0 %1458, %v1451
        %v1460 = vpop.permute.xlu0 %1459
        %v1462 = vmul.f32 %v1266, %v1455
        %v1463 = vmul.f32 %v1280, %v1455
        %v1464 = vmul.f32 %v1268, %v1460
        %v1465 = vmul.f32 %v1282, %v1460
        %1466 = vst [vmem:[%s514] sm:$0xff] %v1462
        %1467 = vst [vmem:[%s514 + $0x8] sm:$0xff] %v1463
        %1468 = vst [vmem:[%s514 + $0x10] sm:$0xff] %v1464
        %1469 = vst [vmem:[%s514 + $0x18] sm:$0xff] %v1465
        %s1470 = sand.u32 %s379, 1
        %s1471 = scalar_lea.sflag [#allocation3], %s1470
        %s1472 = sand.u32 %s379, 1
        %s1473 = smul.addr %s1472, 32
        %s1474 = scalar_lea.vmem [#allocation2], %s1473
        // Predicated region
        $region85: #{tpu_custom_call.1} parent=83 // pred_check
          %p1475 = pneg %p389
        $region86: #{tpu_custom_call.1} parent=83 // pred_check_branch
          %1477 = sbr.rel (%p1475) target = $region88
        $region87: #{tpu_custom_call.1} parent=83 // pred_region
          %1479 = vsyncadd %s1471, 0
          %s1480 = smul.addr %s30, 4
          %s1481 = smul.addr %s1480, 8
          %s1482 = scalar_lea.hbm %s16, %s1481
          %s1483 = sshll.u32 %s1474, 4
          %s1484 = int_to_ptr.vmem [resolvable:$true] %s1483
          %s1485 = sshll.u32 %s1482, 4
          %s1486 = int_to_ptr.hbm [resolvable:$true] %s1485
          %1491 = dma.vmem_to_hbm [thread:$0]  %s1484, 512, %s1486, %s1471, 256, 256, 16
        $region88: #{tpu_custom_call.1} parent=83 // pred_fallthru
          _
      $region84: #{tpu_custom_call.1} parent=5 // pred_fallthru
        _
      %p1492 = scmp.le.s32.totalorder 2, %s25
      // Predicated region
      $region89: #{tpu_custom_call.1} parent=5 // pred_check
        %p1493 = pneg %p1492
      $region90: #{tpu_custom_call.1} parent=5 // pred_check_branch
        %1495 = sbr.rel (%p1493) target = $region92
      $region91: #{tpu_custom_call.1} parent=5 // pred_region
        %s1496 = ssub.s32 %s25, 2
        // Predicated region
        $region93: #{tpu_custom_call.1} parent=91 // pred_check
          %p1497 = pneg %p395
        $region94: #{tpu_custom_call.1} parent=91 // pred_check_branch
          %1499 = sbr.rel (%p1497) target = $region96
        $region95: #{tpu_custom_call.1} parent=91 // pred_region
          %s1500 = sand.u32 %s380, 1
          %s1501 = scalar_lea.sflag [#allocation3], %s1500
          %s1502 = sand.u32 %s380, 1
          %s1503 = smul.addr %s1502, 32
          %s1504 = scalar_lea.vmem [#allocation2], %s1503
          %1506 = dma.done %s1501, 512
        $region96: #{tpu_custom_call.1} parent=91 // pred_fallthru
          _
      $region92: #{tpu_custom_call.1} parent=5 // pred_fallthru
        _
    $region6: #{tpu_custom_call.1} parent=1 // loop_footer
      %s29 = sadd.s32 1, %s25
    $region7: #{tpu_custom_call.1} parent=1 // loop_footer_branch
      %24 = sbr.rel target = $region3
    $region8: #{tpu_custom_call.1} parent=1 // loop_exit
      _
    %1507 = vsyncpa [#allocation3], 1
    %s1508 = scalar_lea.sflag [#allocation3], 1
    %1509 = vsyncpa %s1508, 1

</llo_original>
